<compile_context>
chip_gen: v5e
topology: v5e:2x2
jax: 0.10.0
libtpu: 0.0.40
codegen_flags: <defaults>
</compile_context>

<pallas_src>
import jax
import jax.numpy as jnp
from jax.experimental import pallas as pl
from jax.experimental.pallas import tpu as pltpu


def _make_rgsl_kernel(num_nodes, cheb_k, embed_dim, hidden, dim_in):
    N, K, De, H, Di = num_nodes, cheb_k, embed_dim, hidden, dim_in
    CoG = 2 * H                     # gate AVWGCN output channels
    f32 = jnp.float32

    def dot(a, b):
        return jnp.dot(a, b, preferred_element_type=f32)

    def leaky_relu(v):
        # PyTorch F.leaky_relu default negative_slope = 0.01.
        return jnp.where(v >= 0, v, 0.01 * v)

    def dsum(slab, co):
        # Reduce the De lane-chunks of an (N, De*co) slab -> (N, co).
        acc = slab[:, 0:co]
        for d in range(1, De):
            acc = acc + slab[:, d * co:(d + 1) * co]
        return acc

    def att_scale(act, w1, w2):
        # AttLayer per-batch scalar gate: sigmoid(W2 relu(W1 mean_nodes(act))).
        # Kept entirely off the MXU: broadcast-mul + lane/sublane reduces.
        y = jnp.mean(act, axis=0, keepdims=True)                         # (1, Co)
        h1 = jnp.maximum(jnp.sum(y * w1, axis=1, keepdims=True), 0.0)    # (r, 1)
        return jax.nn.sigmoid(jnp.sum(h1 * w2, axis=0, keepdims=True))   # (1, 1)

    def kernel(x_ref, state_ref, s_stack_ref, c_stack_ref,
               erep_g_ref, erep_u_ref, ebias_g_ref, ebias_u_ref,
               wx_cat_ref, igx_cat_ref, igb_cat_ref,
               g_ws_ref, g_igs_ref, g_gcw_ref, g_gcb_ref,
               g_a1w1_ref, g_a1w2_ref, g_a2w1_ref, g_a2w2_ref,
               u_ws_ref, u_igs_ref, u_gcw_ref, u_gcb_ref,
               u_a1w1_ref, u_a1w2_ref, u_a2w1_ref, u_a2w2_ref,
               h_ref):
        # One batch element per grid step (batch dim squeezed by BlockSpec).
        x = x_ref[...]                    # (N, Di)
        s = state_ref[...]                # (N, H)
        S = s_stack_ref[...]              # (K*N, N) stacked learned supports
        C = c_stack_ref[...]              # (K*N, N) stacked fixed Chebyshev
        erep_g = erep_g_ref[...]          # (N, De*2H) lane-replicated E
        erep_u = erep_u_ref[...]          # (N, De*H)

        # ---- x-side work shared by the gate and update AVWGCNs -------------
        x_all = dot(S, x)                                        # (K*N, Di)
        mx = dot(x_all[0:N, :], wx_cat_ref[0])                   # (N, De*3H)
        for k in range(1, K):
            mx = mx + dot(x_all[k * N:(k + 1) * N, :], wx_cat_ref[k])
        # slab layout: [gate d-chunks (2H wide) x De | update d-chunks (H) x De]
        adapt_x_g = dsum(mx[:, :De * CoG] * erep_g, CoG)         # (N, 2H)
        adapt_x_u = dsum(mx[:, De * CoG:] * erep_u, H)           # (N, H)
        xe_cat = dot(x, igx_cat_ref[...]) + igb_cat_ref[...]     # (N, 3H)

        def avwgcn(s_in, adapt_x, xe_x, erep, ebias, ws_ref, igs_ref,
                   gcw_ref, gcb_ref, a1w1, a1w2, a2w1, a2w2, co):
            # Adaptive node-specific-weight branch (De folded into lanes):
            #   g0 = E@bias_pool + sum_k,d E[:,d] * ((S_k@[x|s]) @ Wp[d,k])
            s_all = dot(S, s_in)                                 # (K*N, H)
            ms = dot(s_all[0:N, :], ws_ref[0])                   # (N, De*co)
            for k in range(1, K):
                ms = ms + dot(s_all[k * N:(k + 1) * N, :], ws_ref[k])
            g0 = ebias + adapt_x + dsum(ms * erep, co)           # (N, co)
            # Fixed-Chebyshev branch: gconv(concat_k(cheb_k @ init_gconv(v))),
            # with the concat folded into per-k weight blocks.
            x2 = xe_x + dot(s_in, igs_ref[...])                  # (N, co)
            z_all = dot(C, x2)                                   # (K*N, co)
            g1 = gcb_ref[...] + dot(z_all[0:N, :], gcw_ref[0])   # (N, co)
            for k in range(1, K):
                g1 = g1 + dot(z_all[k * N:(k + 1) * N, :], gcw_ref[k])
            a0 = leaky_relu(g0)
            a1 = leaky_relu(g1)
            return (a0 * att_scale(a0, a1w1[...], a1w2[...])
                    + a1 * att_scale(a1, a2w1[...], a2w2[...]))

        zr = jax.nn.sigmoid(
            avwgcn(s, adapt_x_g, xe_cat[:, :CoG], erep_g, ebias_g_ref[...],
                   g_ws_ref, g_igs_ref, g_gcw_ref, g_gcb_ref,
                   g_a1w1_ref, g_a1w2_ref, g_a2w1_ref, g_a2w2_ref, CoG))
        z = zr[:, :H]
        r = zr[:, H:]
        hc = jnp.tanh(
            avwgcn(z * s, adapt_x_u, xe_cat[:, CoG:], erep_u, ebias_u_ref[...],
                   u_ws_ref, u_igs_ref, u_gcw_ref, u_gcb_ref,
                   u_a1w1_ref, u_a1w2_ref, u_a2w1_ref, u_a2w2_ref, H))
        h_ref[...] = r * s + (1.0 - r) * hc

    return kernel


def _k_major(wp, row_slice):
    """weights_pool (De,K,Ci,Co), row subset -> (K, rows, De*Co), d-major lanes."""
    De, K, _, Co = wp.shape
    w = wp[:, :, row_slice, :]                 # (De, K, R, Co)
    w = jnp.transpose(w, (1, 2, 0, 3))         # (K, R, De, Co)
    return w.reshape(K, w.shape[1], De * Co)


def rgsl_cell_forward(x, state, node_embeddings, learned_tilde,
                      cheb_polynomials, L_tilde, gate_params, update_params):
    """Pallas TPU implementation of RGSLCell.forward.

    x: (B, N, dim_in)   state: (B, N, hidden)
    node_embeddings: (N, embed_dim)   learned_tilde: (N, N)
    cheb_polynomials: (K, N, N) array or list of K (N, N) arrays.
    L_tilde: accepted for signature parity; unused, as in the PyTorch module.
    """
    del L_tilde  # not used by RGSLCell.forward (matches the PyTorch module)
    f32 = jnp.float32
    hp = jax.lax.Precision.HIGHEST
    if isinstance(cheb_polynomials, (list, tuple)):
        cheb = jnp.stack([jnp.asarray(c, f32) for c in cheb_polynomials], 0)
    else:
        cheb = jnp.asarray(cheb_polynomials, f32)
    x = jnp.asarray(x, f32)
    state = jnp.asarray(state, f32)
    E = jnp.asarray(node_embeddings, f32)
    L = jnp.asarray(learned_tilde, f32)

    B, N, Di = x.shape
    H = state.shape[-1]
    De = E.shape[-1]
    K = cheb.shape[0]
    CoG, CoU = 2 * H, H

    # ---- batch-invariant precomputation (layout plumbing + graph supports) --
    supports = [jnp.eye(N, dtype=f32), L]
    for _ in range(2, K):
        supports.append(2.0 * jnp.dot(L, supports[-1], precision=hp)
                        - supports[-2])
    s_stack = jnp.concatenate(supports, axis=0)                 # (K*N, N)
    c_stack = cheb.reshape(K * N, N)                            # (K*N, N)

    erep_g = jnp.repeat(E, CoG, axis=1)                         # (N, De*2H)
    erep_u = jnp.repeat(E, CoU, axis=1)                         # (N, De*H)
    ebias_g = jnp.dot(E, gate_params["bias_pool"], precision=hp)    # (N, 2H)
    ebias_u = jnp.dot(E, update_params["bias_pool"], precision=hp)  # (N, H)

    # adaptive pool weights: x rows shared (gate|update concat), state rows per AVWGCN
    wx_cat = jnp.concatenate(
        [_k_major(gate_params["weights_pool"], slice(0, Di)),
         _k_major(update_params["weights_pool"], slice(0, Di))], axis=-1)
    ws_g = _k_major(gate_params["weights_pool"], slice(Di, None))    # (K,H,De*2H)
    ws_u = _k_major(update_params["weights_pool"], slice(Di, None))  # (K,H,De*H)

    # init_gconv: x rows shared (concat along output lanes), state rows per AVWGCN
    igw_g = gate_params["init_gconv_w"].T                       # (Di+H, 2H)
    igw_u = update_params["init_gconv_w"].T                     # (Di+H, H)
    igx_cat = jnp.concatenate([igw_g[:Di], igw_u[:Di]], axis=-1)      # (Di, 3H)
    igb_cat = jnp.concatenate([gate_params["init_gconv_b"],
                               update_params["init_gconv_b"]]).reshape(1, 3 * H)
    igs_g, igs_u = igw_g[Di:], igw_u[Di:]

    # gconv: fold the k-concat into per-k weight blocks (k-major chunks)
    gcw_g = gate_params["gconv_w"].T.reshape(K, CoG, CoG)
    gcb_g = gate_params["gconv_b"].reshape(1, CoG)
    gcw_u = update_params["gconv_w"].T.reshape(K, CoU, CoU)
    gcb_u = update_params["gconv_b"].reshape(1, CoU)

    inputs = [
        x, state, s_stack, c_stack, erep_g, erep_u, ebias_g, ebias_u,
        wx_cat, igx_cat, igb_cat,
        ws_g, igs_g, gcw_g, gcb_g,
        gate_params["att1_fc1_w"], gate_params["att1_fc2_w"].T,
        gate_params["att2_fc1_w"], gate_params["att2_fc2_w"].T,
        ws_u, igs_u, gcw_u, gcb_u,
        update_params["att1_fc1_w"], update_params["att1_fc2_w"].T,
        update_params["att2_fc1_w"], update_params["att2_fc2_w"].T,
    ]
    inputs = [jnp.asarray(a, f32) for a in inputs]

    def _const_spec(a):
        # Full array, constant block index -> stays VMEM-resident across the
        # batch grid (Pallas skips the copy when the block index is unchanged).
        nd = a.ndim
        return pl.BlockSpec(a.shape, lambda b, _n=nd: (0,) * _n)

    in_specs = ([pl.BlockSpec((None, N, Di), lambda b: (b, 0, 0)),
                 pl.BlockSpec((None, N, H), lambda b: (b, 0, 0))]
                + [_const_spec(a) for a in inputs[2:]])
    out_spec = pl.BlockSpec((None, N, H), lambda b: (b, 0, 0))

    # Advisory cost estimate for XLA scheduling around the custom call.
    def _branch_macs(co):
        return (K * N * N * H + K * N * H * De * co + N * H * co
                + K * N * N * co + K * N * co * co)
    macs = (K * N * N * Di + N * Di * 3 * H + K * N * Di * De * 3 * H
            + _branch_macs(CoG) + _branch_macs(CoU))
    flops = 2 * B * macs
    transcendentals = B * (N * 3 * H + 8)
    bytes_accessed = 4 * (sum(int(a.size) for a in inputs) + B * N * H)

    kernel = _make_rgsl_kernel(N, K, De, H, Di)
    return pl.pallas_call(
        kernel,
        out_shape=jax.ShapeDtypeStruct((B, N, H), f32),
        grid=(B,),
        in_specs=in_specs,
        out_specs=out_spec,
        compiler_params=pltpu.CompilerParams(
            dimension_semantics=("parallel",)),
        cost_estimate=pl.CostEstimate(flops=flops,
                                      transcendentals=transcendentals,
                                      bytes_accessed=bytes_accessed),
    )(*inputs)


# ----------------------- pure-JAX reference (PyTorch mirror) -----------------

def _avwgcn_ref(v, E, L_learned, cheb, p, cheb_k):
    b, n, _ = v.shape
    support_set = [jnp.eye(n, dtype=v.dtype), L_learned]
    for _ in range(2, cheb_k):
        support_set.append(2.0 * L_learned @ support_set[-1] - support_set[-2])
    supports = jnp.stack(support_set, axis=0)
    weights = jnp.einsum('nd,dkio->nkio', E, p["weights_pool"])
    bias = E @ p["bias_pool"]
    x_g = jnp.einsum('knm,bmc->bknc', supports, v)
    x_g = jnp.transpose(x_g, (0, 2, 1, 3))
    x_gconv0 = jnp.einsum('bnki,nkio->bno', x_g, weights) + bias
    v2 = v @ p["init_gconv_w"].T + p["init_gconv_b"]
    x_g1 = jnp.einsum('knm,bmc->bknc', cheb, v2)
    x_g1 = jnp.transpose(x_g1, (0, 2, 1, 3)).reshape(b, n, -1)
    x_gconv1 = x_g1 @ p["gconv_w"].T + p["gconv_b"]

    def att(v_bcn, w1, w2):
        y = jnp.mean(v_bcn, axis=2)                  # AdaptiveAvgPool1d(1)
        y = jnp.maximum(y @ w1.T, 0.0)
        y = jax.nn.sigmoid(y @ w2.T)                 # (b, 1)
        return v_bcn * y[:, :, None]

    lrelu = lambda t: jnp.where(t >= 0, t, 0.01 * t)
    g = (att(jnp.swapaxes(lrelu(x_gconv0), 1, 2), p["att1_fc1_w"], p["att1_fc2_w"])
         + att(jnp.swapaxes(lrelu(x_gconv1), 1, 2), p["att2_fc1_w"], p["att2_fc2_w"]))
    return jnp.swapaxes(g, 1, 2)


def _rgsl_cell_ref(x, state, E, learned_tilde, cheb, gate_p, update_p,
                   cheb_k, hidden):
    xs = jnp.concatenate([x, state], axis=-1)
    z_r = jax.nn.sigmoid(_avwgcn_ref(xs, E, learned_tilde, cheb, gate_p, cheb_k))
    z, r = z_r[..., :hidden], z_r[..., hidden:]
    cand = jnp.concatenate([x, z * state], axis=-1)
    hc = jnp.tanh(_avwgcn_ref(cand, E, learned_tilde, cheb, update_p, cheb_k))
    return r * state + (1.0 - r) * hc


def _init_avwgcn_params(key, dim_in, dim_out, cheb_k, embed_dim, reduction=16):
    """Random parameters with the same shapes as the PyTorch AVWGCN submodule."""
    r = dim_out // reduction
    assert r >= 1, "dim_out must be >= reduction (matches the PyTorch module)"
    ks = jax.random.split(key, 10)
    n = jax.random.normal
    return {
        "weights_pool": 0.08 * n(ks[0], (embed_dim, cheb_k, dim_in, dim_out), jnp.float32),
        "bias_pool":    0.10 * n(ks[1], (embed_dim, dim_out), jnp.float32),
        "init_gconv_w": n(ks[2], (dim_out, dim_in), jnp.float32) / float(dim_in) ** 0.5,
        "init_gconv_b": 0.10 * n(ks[3], (dim_out,), jnp.float32),
        "gconv_w":      n(ks[4], (dim_out, dim_out * cheb_k), jnp.float32)
                        / float(dim_out * cheb_k) ** 0.5,
        "gconv_b":      0.10 * n(ks[5], (dim_out,), jnp.float32),
        "att1_fc1_w":   n(ks[6], (r, dim_out), jnp.float32) / float(dim_out) ** 0.5,
        "att1_fc2_w":   n(ks[7], (1, r), jnp.float32) / float(r) ** 0.5,
        "att2_fc1_w":   n(ks[8], (r, dim_out), jnp.float32) / float(dim_out) ** 0.5,
        "att2_fc2_w":   n(ks[9], (1, r), jnp.float32) / float(r) ** 0.5,
    }


if __name__ == "__main__":
    # RGSLCell(dim_in=4, dim_out=32, cheb_k=3, embed_dim=8) on a 16-node graph.
    B, N = 2, 16
    dim_in, hidden = 4, 32
    cheb_k, embed_dim = 3, 8

    key = jax.random.PRNGKey(0)
    kx, ks, ke, kl, kt, kg, ku = jax.random.split(key, 7)

    x = jax.random.normal(kx, (B, N, dim_in), jnp.float32)
    state = jax.random.normal(ks, (B, N, hidden), jnp.float32)
    node_embeddings = 0.5 * jax.random.normal(ke, (N, embed_dim), jnp.float32)
    learned_tilde = 0.2 * jax.random.normal(kl, (N, N), jnp.float32)

    # Fixed Chebyshev polynomials of a symmetric scaled Laplacian, as the
    # surrounding RGSL model would precompute them.
    a = 0.2 * jax.random.normal(kt, (N, N), jnp.float32)
    L_tilde = 0.5 * (a + a.T)
    cheb_list = [jnp.eye(N, dtype=jnp.float32), L_tilde]
    for _ in range(2, cheb_k):
        cheb_list.append(2.0 * L_tilde @ cheb_list[-1] - cheb_list[-2])
    cheb = jnp.stack(cheb_list, axis=0)

    gate_params = _init_avwgcn_params(kg, dim_in + hidden, 2 * hidden,
                                      cheb_k, embed_dim)
    update_params = _init_avwgcn_params(ku, dim_in + hidden, hidden,
                                        cheb_k, embed_dim)

    h = rgsl_cell_forward(x, state, node_embeddings, learned_tilde, cheb,
                          L_tilde, gate_params, update_params)
    h = jax.block_until_ready(h)
    assert h.shape == (B, N, hidden)

    with jax.default_matmul_precision("highest"):
        h_ref = jax.block_until_ready(
            _rgsl_cell_ref(x, state, node_embeddings, learned_tilde, cheb,
                           gate_params, update_params, cheb_k, hidden))

    # Tolerance covers MXU f32 accumulation-order / pass differences between
    # the fused kernel and the XLA reference einsums.
    err = float(jnp.max(jnp.abs(h - h_ref)))
    assert jnp.allclose(h, h_ref, atol=5e-3, rtol=5e-3), f"mismatch vs reference: {err}"

    print("KERNEL_OK")
</pallas_src>

<mosaic_0001>
module attributes {stable_mosaic.version = 11 : i64} {
  func.func @kernel(%arg0: i32, %arg1: memref<1x16x4xf32, #tpu.memory_space<vmem>>, %arg2: memref<1x16x32xf32, #tpu.memory_space<vmem>>, %arg3: memref<48x16xf32, #tpu.memory_space<vmem>>, %arg4: memref<48x16xf32, #tpu.memory_space<vmem>>, %arg5: memref<16x512xf32, #tpu.memory_space<vmem>>, %arg6: memref<16x256xf32, #tpu.memory_space<vmem>>, %arg7: memref<16x64xf32, #tpu.memory_space<vmem>>, %arg8: memref<16x32xf32, #tpu.memory_space<vmem>>, %arg9: memref<3x4x768xf32, #tpu.memory_space<vmem>>, %arg10: memref<4x96xf32, #tpu.memory_space<vmem>>, %arg11: memref<1x96xf32, #tpu.memory_space<vmem>>, %arg12: memref<3x32x512xf32, #tpu.memory_space<vmem>>, %arg13: memref<32x64xf32, #tpu.memory_space<vmem>>, %arg14: memref<3x64x64xf32, #tpu.memory_space<vmem>>, %arg15: memref<1x64xf32, #tpu.memory_space<vmem>>, %arg16: memref<4x64xf32, #tpu.memory_space<vmem>>, %arg17: memref<4x1xf32, #tpu.memory_space<vmem>>, %arg18: memref<4x64xf32, #tpu.memory_space<vmem>>, %arg19: memref<4x1xf32, #tpu.memory_space<vmem>>, %arg20: memref<3x32x256xf32, #tpu.memory_space<vmem>>, %arg21: memref<32x32xf32, #tpu.memory_space<vmem>>, %arg22: memref<3x32x32xf32, #tpu.memory_space<vmem>>, %arg23: memref<1x32xf32, #tpu.memory_space<vmem>>, %arg24: memref<2x32xf32, #tpu.memory_space<vmem>>, %arg25: memref<2x1xf32, #tpu.memory_space<vmem>>, %arg26: memref<2x32xf32, #tpu.memory_space<vmem>>, %arg27: memref<2x1xf32, #tpu.memory_space<vmem>>, %arg28: memref<1x16x32xf32, #tpu.memory_space<vmem>>) attributes {dimension_semantics = [#tpu.dimension_semantics<parallel>], iteration_bounds = array<i64: 2>, scalar_prefetch = 0 : i64, scratch_operands = 0 : i64, tpu.core_type = #tpu.core_type<tc>, window_params = [{transform_indices = @transform_0, window_bounds = array<i64: 1, 16, 4>}, {transform_indices = @transform_1, window_bounds = array<i64: 1, 16, 32>}, {pipeline_mode = #tpu.pipeline_mode<synchronous>, transform_indices = @transform_2, window_bounds = array<i64: 48, 16>}, {pipeline_mode = #tpu.pipeline_mode<synchronous>, transform_indices = @transform_3, window_bounds = array<i64: 48, 16>}, {pipeline_mode = #tpu.pipeline_mode<synchronous>, transform_indices = @transform_4, window_bounds = array<i64: 16, 512>}, {pipeline_mode = #tpu.pipeline_mode<synchronous>, transform_indices = @transform_5, window_bounds = array<i64: 16, 256>}, {pipeline_mode = #tpu.pipeline_mode<synchronous>, transform_indices = @transform_6, window_bounds = array<i64: 16, 64>}, {pipeline_mode = #tpu.pipeline_mode<synchronous>, transform_indices = @transform_7, window_bounds = array<i64: 16, 32>}, {pipeline_mode = #tpu.pipeline_mode<synchronous>, transform_indices = @transform_8, window_bounds = array<i64: 3, 4, 768>}, {pipeline_mode = #tpu.pipeline_mode<synchronous>, transform_indices = @transform_9, window_bounds = array<i64: 4, 96>}, {pipeline_mode = #tpu.pipeline_mode<synchronous>, transform_indices = @transform_10, window_bounds = array<i64: 1, 96>}, {pipeline_mode = #tpu.pipeline_mode<synchronous>, transform_indices = @transform_11, window_bounds = array<i64: 3, 32, 512>}, {pipeline_mode = #tpu.pipeline_mode<synchronous>, transform_indices = @transform_12, window_bounds = array<i64: 32, 64>}, {pipeline_mode = #tpu.pipeline_mode<synchronous>, transform_indices = @transform_13, window_bounds = array<i64: 3, 64, 64>}, {pipeline_mode = #tpu.pipeline_mode<synchronous>, transform_indices = @transform_14, window_bounds = array<i64: 1, 64>}, {pipeline_mode = #tpu.pipeline_mode<synchronous>, transform_indices = @transform_15, window_bounds = array<i64: 4, 64>}, {pipeline_mode = #tpu.pipeline_mode<synchronous>, transform_indices = @transform_16, window_bounds = array<i64: 4, 1>}, {pipeline_mode = #tpu.pipeline_mode<synchronous>, transform_indices = @transform_17, window_bounds = array<i64: 4, 64>}, {pipeline_mode = #tpu.pipeline_mode<synchronous>, transform_indices = @transform_18, window_bounds = array<i64: 4, 1>}, {pipeline_mode = #tpu.pipeline_mode<synchronous>, transform_indices = @transform_19, window_bounds = array<i64: 3, 32, 256>}, {pipeline_mode = #tpu.pipeline_mode<synchronous>, transform_indices = @transform_20, window_bounds = array<i64: 32, 32>}, {pipeline_mode = #tpu.pipeline_mode<synchronous>, transform_indices = @transform_21, window_bounds = array<i64: 3, 32, 32>}, {pipeline_mode = #tpu.pipeline_mode<synchronous>, transform_indices = @transform_22, window_bounds = array<i64: 1, 32>}, {pipeline_mode = #tpu.pipeline_mode<synchronous>, transform_indices = @transform_23, window_bounds = array<i64: 2, 32>}, {pipeline_mode = #tpu.pipeline_mode<synchronous>, transform_indices = @transform_24, window_bounds = array<i64: 2, 1>}, {pipeline_mode = #tpu.pipeline_mode<synchronous>, transform_indices = @transform_25, window_bounds = array<i64: 2, 32>}, {pipeline_mode = #tpu.pipeline_mode<synchronous>, transform_indices = @transform_26, window_bounds = array<i64: 2, 1>}, {transform_indices = @transform_27, window_bounds = array<i64: 1, 16, 32>}]} {
    %c0 = arith.constant 0 : index
    %c0_0 = arith.constant 0 : index
    %c0_1 = arith.constant 0 : index
    %0 = vector.load %arg1[%c0, %c0_0, %c0_1] : memref<1x16x4xf32, #tpu.memory_space<vmem>>, vector<1x16x4xf32>
    %1 = vector.shape_cast %0 : vector<1x16x4xf32> to vector<16x4xf32>
    %c0_2 = arith.constant 0 : index
    %c0_3 = arith.constant 0 : index
    %c0_4 = arith.constant 0 : index
    %2 = vector.load %arg2[%c0_2, %c0_3, %c0_4] : memref<1x16x32xf32, #tpu.memory_space<vmem>>, vector<1x16x32xf32>
    %3 = vector.shape_cast %2 : vector<1x16x32xf32> to vector<16x32xf32>
    %c0_5 = arith.constant 0 : index
    %c0_6 = arith.constant 0 : index
    %4 = vector.load %arg3[%c0_5, %c0_6] : memref<48x16xf32, #tpu.memory_space<vmem>>, vector<48x16xf32>
    %c0_7 = arith.constant 0 : index
    %c0_8 = arith.constant 0 : index
    %5 = vector.load %arg4[%c0_7, %c0_8] : memref<48x16xf32, #tpu.memory_space<vmem>>, vector<48x16xf32>
    %c0_9 = arith.constant 0 : index
    %c0_10 = arith.constant 0 : index
    %6 = vector.load %arg5[%c0_9, %c0_10] : memref<16x512xf32, #tpu.memory_space<vmem>>, vector<16x512xf32>
    %c0_11 = arith.constant 0 : index
    %c0_12 = arith.constant 0 : index
    %7 = vector.load %arg6[%c0_11, %c0_12] : memref<16x256xf32, #tpu.memory_space<vmem>>, vector<16x256xf32>
    %cst = arith.constant dense<0.000000e+00> : vector<48x4xf32>
    %8 = tpu.matmul %4, %1, %cst {dimension_numbers = #tpu.dot_dimension_numbers<[1], [0], [0], [1], [0, 0, 1, 1], [], []>} : vector<48x16xf32>, vector<16x4xf32>, vector<48x4xf32> -> vector<48x4xf32>
    %9 = vector.extract_strided_slice %8 {offsets = [0, 0], sizes = [16, 4], strides = [1, 1]} : vector<48x4xf32> to vector<16x4xf32>
    %c0_13 = arith.constant 0 : index
    %c0_14 = arith.constant 0 : index
    %c0_15 = arith.constant 0 : index
    %10 = vector.load %arg9[%c0_13, %c0_14, %c0_15] : memref<3x4x768xf32, #tpu.memory_space<vmem>>, vector<1x4x768xf32>
    %11 = vector.shape_cast %10 : vector<1x4x768xf32> to vector<4x768xf32>
    %cst_16 = arith.constant dense<0.000000e+00> : vector<16x768xf32>
    %12 = tpu.matmul %9, %11, %cst_16 {dimension_numbers = #tpu.dot_dimension_numbers<[1], [0], [0], [1], [0, 0, 1, 1], [], []>} : vector<16x4xf32>, vector<4x768xf32>, vector<16x768xf32> -> vector<16x768xf32>
    %13 = vector.extract_strided_slice %8 {offsets = [16, 0], sizes = [16, 4], strides = [1, 1]} : vector<48x4xf32> to vector<16x4xf32>
    %c1 = arith.constant 1 : index
    %c0_17 = arith.constant 0 : index
    %c0_18 = arith.constant 0 : index
    %14 = vector.load %arg9[%c1, %c0_17, %c0_18] : memref<3x4x768xf32, #tpu.memory_space<vmem>>, vector<1x4x768xf32>
    %15 = vector.shape_cast %14 : vector<1x4x768xf32> to vector<4x768xf32>
    %cst_19 = arith.constant dense<0.000000e+00> : vector<16x768xf32>
    %16 = tpu.matmul %13, %15, %cst_19 {dimension_numbers = #tpu.dot_dimension_numbers<[1], [0], [0], [1], [0, 0, 1, 1], [], []>} : vector<16x4xf32>, vector<4x768xf32>, vector<16x768xf32> -> vector<16x768xf32>
    %17 = arith.addf %12, %16 : vector<16x768xf32>
    %18 = vector.extract_strided_slice %8 {offsets = [32, 0], sizes = [16, 4], strides = [1, 1]} : vector<48x4xf32> to vector<16x4xf32>
    %c2 = arith.constant 2 : index
    %c0_20 = arith.constant 0 : index
    %c0_21 = arith.constant 0 : index
    %19 = vector.load %arg9[%c2, %c0_20, %c0_21] : memref<3x4x768xf32, #tpu.memory_space<vmem>>, vector<1x4x768xf32>
    %20 = vector.shape_cast %19 : vector<1x4x768xf32> to vector<4x768xf32>
    %cst_22 = arith.constant dense<0.000000e+00> : vector<16x768xf32>
    %21 = tpu.matmul %18, %20, %cst_22 {dimension_numbers = #tpu.dot_dimension_numbers<[1], [0], [0], [1], [0, 0, 1, 1], [], []>} : vector<16x4xf32>, vector<4x768xf32>, vector<16x768xf32> -> vector<16x768xf32>
    %22 = arith.addf %17, %21 : vector<16x768xf32>
    %23 = vector.extract_strided_slice %22 {offsets = [0, 0], sizes = [16, 512], strides = [1, 1]} : vector<16x768xf32> to vector<16x512xf32>
    %24 = arith.mulf %23, %6 : vector<16x512xf32>
    %25 = vector.extract_strided_slice %24 {offsets = [0, 0], sizes = [16, 64], strides = [1, 1]} : vector<16x512xf32> to vector<16x64xf32>
    %26 = vector.extract_strided_slice %24 {offsets = [0, 64], sizes = [16, 64], strides = [1, 1]} : vector<16x512xf32> to vector<16x64xf32>
    %27 = arith.addf %25, %26 : vector<16x64xf32>
    %28 = vector.extract_strided_slice %24 {offsets = [0, 128], sizes = [16, 64], strides = [1, 1]} : vector<16x512xf32> to vector<16x64xf32>
    %29 = arith.addf %27, %28 : vector<16x64xf32>
    %30 = vector.extract_strided_slice %24 {offsets = [0, 192], sizes = [16, 64], strides = [1, 1]} : vector<16x512xf32> to vector<16x64xf32>
    %31 = arith.addf %29, %30 : vector<16x64xf32>
    %32 = vector.extract_strided_slice %24 {offsets = [0, 256], sizes = [16, 64], strides = [1, 1]} : vector<16x512xf32> to vector<16x64xf32>
    %33 = arith.addf %31, %32 : vector<16x64xf32>
    %34 = vector.extract_strided_slice %24 {offsets = [0, 320], sizes = [16, 64], strides = [1, 1]} : vector<16x512xf32> to vector<16x64xf32>
    %35 = arith.addf %33, %34 : vector<16x64xf32>
    %36 = vector.extract_strided_slice %24 {offsets = [0, 384], sizes = [16, 64], strides = [1, 1]} : vector<16x512xf32> to vector<16x64xf32>
    %37 = arith.addf %35, %36 : vector<16x64xf32>
    %38 = vector.extract_strided_slice %24 {offsets = [0, 448], sizes = [16, 64], strides = [1, 1]} : vector<16x512xf32> to vector<16x64xf32>
    %39 = arith.addf %37, %38 : vector<16x64xf32>
    %40 = vector.extract_strided_slice %22 {offsets = [0, 512], sizes = [16, 256], strides = [1, 1]} : vector<16x768xf32> to vector<16x256xf32>
    %41 = arith.mulf %40, %7 : vector<16x256xf32>
    %42 = vector.extract_strided_slice %41 {offsets = [0, 0], sizes = [16, 32], strides = [1, 1]} : vector<16x256xf32> to vector<16x32xf32>
    %43 = vector.extract_strided_slice %41 {offsets = [0, 32], sizes = [16, 32], strides = [1, 1]} : vector<16x256xf32> to vector<16x32xf32>
    %44 = arith.addf %42, %43 : vector<16x32xf32>
    %45 = vector.extract_strided_slice %41 {offsets = [0, 64], sizes = [16, 32], strides = [1, 1]} : vector<16x256xf32> to vector<16x32xf32>
    %46 = arith.addf %44, %45 : vector<16x32xf32>
    %47 = vector.extract_strided_slice %41 {offsets = [0, 96], sizes = [16, 32], strides = [1, 1]} : vector<16x256xf32> to vector<16x32xf32>
    %48 = arith.addf %46, %47 : vector<16x32xf32>
    %49 = vector.extract_strided_slice %41 {offsets = [0, 128], sizes = [16, 32], strides = [1, 1]} : vector<16x256xf32> to vector<16x32xf32>
    %50 = arith.addf %48, %49 : vector<16x32xf32>
    %51 = vector.extract_strided_slice %41 {offsets = [0, 160], sizes = [16, 32], strides = [1, 1]} : vector<16x256xf32> to vector<16x32xf32>
    %52 = arith.addf %50, %51 : vector<16x32xf32>
    %53 = vector.extract_strided_slice %41 {offsets = [0, 192], sizes = [16, 32], strides = [1, 1]} : vector<16x256xf32> to vector<16x32xf32>
    %54 = arith.addf %52, %53 : vector<16x32xf32>
    %55 = vector.extract_strided_slice %41 {offsets = [0, 224], sizes = [16, 32], strides = [1, 1]} : vector<16x256xf32> to vector<16x32xf32>
    %56 = arith.addf %54, %55 : vector<16x32xf32>
    %c0_23 = arith.constant 0 : index
    %c0_24 = arith.constant 0 : index
    %57 = vector.load %arg10[%c0_23, %c0_24] : memref<4x96xf32, #tpu.memory_space<vmem>>, vector<4x96xf32>
    %cst_25 = arith.constant dense<0.000000e+00> : vector<16x96xf32>
    %58 = tpu.matmul %1, %57, %cst_25 {dimension_numbers = #tpu.dot_dimension_numbers<[1], [0], [0], [1], [0, 0, 1, 1], [], []>} : vector<16x4xf32>, vector<4x96xf32>, vector<16x96xf32> -> vector<16x96xf32>
    %c0_26 = arith.constant 0 : index
    %c0_27 = arith.constant 0 : index
    %59 = vector.load %arg11[%c0_26, %c0_27] : memref<1x96xf32, #tpu.memory_space<vmem>>, vector<1x96xf32>
    %60 = vector.broadcast %59 : vector<1x96xf32> to vector<16x96xf32>
    %61 = arith.addf %58, %60 : vector<16x96xf32>
    %62 = vector.extract_strided_slice %61 {offsets = [0, 0], sizes = [16, 64], strides = [1, 1]} : vector<16x96xf32> to vector<16x64xf32>
    %c0_28 = arith.constant 0 : index
    %c0_29 = arith.constant 0 : index
    %63 = vector.load %arg7[%c0_28, %c0_29] : memref<16x64xf32, #tpu.memory_space<vmem>>, vector<16x64xf32>
    %cst_30 = arith.constant dense<0.000000e+00> : vector<48x32xf32>
    %64 = tpu.matmul %4, %3, %cst_30 {dimension_numbers = #tpu.dot_dimension_numbers<[1], [0], [0], [1], [0, 0, 1, 1], [], []>} : vector<48x16xf32>, vector<16x32xf32>, vector<48x32xf32> -> vector<48x32xf32>
    %65 = vector.extract_strided_slice %64 {offsets = [0, 0], sizes = [16, 32], strides = [1, 1]} : vector<48x32xf32> to vector<16x32xf32>
    %c0_31 = arith.constant 0 : index
    %c0_32 = arith.constant 0 : index
    %c0_33 = arith.constant 0 : index
    %66 = vector.load %arg12[%c0_31, %c0_32, %c0_33] : memref<3x32x512xf32, #tpu.memory_space<vmem>>, vector<1x32x512xf32>
    %67 = vector.shape_cast %66 : vector<1x32x512xf32> to vector<32x512xf32>
    %cst_34 = arith.constant dense<0.000000e+00> : vector<16x512xf32>
    %68 = tpu.matmul %65, %67, %cst_34 {dimension_numbers = #tpu.dot_dimension_numbers<[1], [0], [0], [1], [0, 0, 1, 1], [], []>} : vector<16x32xf32>, vector<32x512xf32>, vector<16x512xf32> -> vector<16x512xf32>
    %69 = vector.extract_strided_slice %64 {offsets = [16, 0], sizes = [16, 32], strides = [1, 1]} : vector<48x32xf32> to vector<16x32xf32>
    %c1_35 = arith.constant 1 : index
    %c0_36 = arith.constant 0 : index
    %c0_37 = arith.constant 0 : index
    %70 = vector.load %arg12[%c1_35, %c0_36, %c0_37] : memref<3x32x512xf32, #tpu.memory_space<vmem>>, vector<1x32x512xf32>
    %71 = vector.shape_cast %70 : vector<1x32x512xf32> to vector<32x512xf32>
    %cst_38 = arith.constant dense<0.000000e+00> : vector<16x512xf32>
    %72 = tpu.matmul %69, %71, %cst_38 {dimension_numbers = #tpu.dot_dimension_numbers<[1], [0], [0], [1], [0, 0, 1, 1], [], []>} : vector<16x32xf32>, vector<32x512xf32>, vector<16x512xf32> -> vector<16x512xf32>
    %73 = arith.addf %68, %72 : vector<16x512xf32>
    %74 = vector.extract_strided_slice %64 {offsets = [32, 0], sizes = [16, 32], strides = [1, 1]} : vector<48x32xf32> to vector<16x32xf32>
    %c2_39 = arith.constant 2 : index
    %c0_40 = arith.constant 0 : index
    %c0_41 = arith.constant 0 : index
    %75 = vector.load %arg12[%c2_39, %c0_40, %c0_41] : memref<3x32x512xf32, #tpu.memory_space<vmem>>, vector<1x32x512xf32>
    %76 = vector.shape_cast %75 : vector<1x32x512xf32> to vector<32x512xf32>
    %cst_42 = arith.constant dense<0.000000e+00> : vector<16x512xf32>
    %77 = tpu.matmul %74, %76, %cst_42 {dimension_numbers = #tpu.dot_dimension_numbers<[1], [0], [0], [1], [0, 0, 1, 1], [], []>} : vector<16x32xf32>, vector<32x512xf32>, vector<16x512xf32> -> vector<16x512xf32>
    %78 = arith.addf %73, %77 : vector<16x512xf32>
    %79 = arith.addf %63, %39 : vector<16x64xf32>
    %80 = arith.mulf %78, %6 : vector<16x512xf32>
    %81 = vector.extract_strided_slice %80 {offsets = [0, 0], sizes = [16, 64], strides = [1, 1]} : vector<16x512xf32> to vector<16x64xf32>
    %82 = vector.extract_strided_slice %80 {offsets = [0, 64], sizes = [16, 64], strides = [1, 1]} : vector<16x512xf32> to vector<16x64xf32>
    %83 = arith.addf %81, %82 : vector<16x64xf32>
    %84 = vector.extract_strided_slice %80 {offsets = [0, 128], sizes = [16, 64], strides = [1, 1]} : vector<16x512xf32> to vector<16x64xf32>
    %85 = arith.addf %83, %84 : vector<16x64xf32>
    %86 = vector.extract_strided_slice %80 {offsets = [0, 192], sizes = [16, 64], strides = [1, 1]} : vector<16x512xf32> to vector<16x64xf32>
    %87 = arith.addf %85, %86 : vector<16x64xf32>
    %88 = vector.extract_strided_slice %80 {offsets = [0, 256], sizes = [16, 64], strides = [1, 1]} : vector<16x512xf32> to vector<16x64xf32>
    %89 = arith.addf %87, %88 : vector<16x64xf32>
    %90 = vector.extract_strided_slice %80 {offsets = [0, 320], sizes = [16, 64], strides = [1, 1]} : vector<16x512xf32> to vector<16x64xf32>
    %91 = arith.addf %89, %90 : vector<16x64xf32>
    %92 = vector.extract_strided_slice %80 {offsets = [0, 384], sizes = [16, 64], strides = [1, 1]} : vector<16x512xf32> to vector<16x64xf32>
    %93 = arith.addf %91, %92 : vector<16x64xf32>
    %94 = vector.extract_strided_slice %80 {offsets = [0, 448], sizes = [16, 64], strides = [1, 1]} : vector<16x512xf32> to vector<16x64xf32>
    %95 = arith.addf %93, %94 : vector<16x64xf32>
    %96 = arith.addf %79, %95 : vector<16x64xf32>
    %c0_43 = arith.constant 0 : index
    %c0_44 = arith.constant 0 : index
    %97 = vector.load %arg13[%c0_43, %c0_44] : memref<32x64xf32, #tpu.memory_space<vmem>>, vector<32x64xf32>
    %cst_45 = arith.constant dense<0.000000e+00> : vector<16x64xf32>
    %98 = tpu.matmul %3, %97, %cst_45 {dimension_numbers = #tpu.dot_dimension_numbers<[1], [0], [0], [1], [0, 0, 1, 1], [], []>} : vector<16x32xf32>, vector<32x64xf32>, vector<16x64xf32> -> vector<16x64xf32>
    %99 = arith.addf %62, %98 : vector<16x64xf32>
    %cst_46 = arith.constant dense<0.000000e+00> : vector<48x64xf32>
    %100 = tpu.matmul %5, %99, %cst_46 {dimension_numbers = #tpu.dot_dimension_numbers<[1], [0], [0], [1], [0, 0, 1, 1], [], []>} : vector<48x16xf32>, vector<16x64xf32>, vector<48x64xf32> -> vector<48x64xf32>
    %c0_47 = arith.constant 0 : index
    %c0_48 = arith.constant 0 : index
    %101 = vector.load %arg15[%c0_47, %c0_48] : memref<1x64xf32, #tpu.memory_space<vmem>>, vector<1x64xf32>
    %102 = vector.extract_strided_slice %100 {offsets = [0, 0], sizes = [16, 64], strides = [1, 1]} : vector<48x64xf32> to vector<16x64xf32>
    %c0_49 = arith.constant 0 : index
    %c0_50 = arith.constant 0 : index
    %c0_51 = arith.constant 0 : index
    %103 = vector.load %arg14[%c0_49, %c0_50, %c0_51] : memref<3x64x64xf32, #tpu.memory_space<vmem>>, vector<1x64x64xf32>
    %104 = vector.shape_cast %103 : vector<1x64x64xf32> to vector<64x64xf32>
    %cst_52 = arith.constant dense<0.000000e+00> : vector<16x64xf32>
    %105 = tpu.matmul %102, %104, %cst_52 {dimension_numbers = #tpu.dot_dimension_numbers<[1], [0], [0], [1], [0, 0, 1, 1], [], []>} : vector<16x64xf32>, vector<64x64xf32>, vector<16x64xf32> -> vector<16x64xf32>
    %106 = vector.broadcast %101 : vector<1x64xf32> to vector<16x64xf32>
    %107 = arith.addf %106, %105 : vector<16x64xf32>
    %108 = vector.extract_strided_slice %100 {offsets = [16, 0], sizes = [16, 64], strides = [1, 1]} : vector<48x64xf32> to vector<16x64xf32>
    %c1_53 = arith.constant 1 : index
    %c0_54 = arith.constant 0 : index
    %c0_55 = arith.constant 0 : index
    %109 = vector.load %arg14[%c1_53, %c0_54, %c0_55] : memref<3x64x64xf32, #tpu.memory_space<vmem>>, vector<1x64x64xf32>
    %110 = vector.shape_cast %109 : vector<1x64x64xf32> to vector<64x64xf32>
    %cst_56 = arith.constant dense<0.000000e+00> : vector<16x64xf32>
    %111 = tpu.matmul %108, %110, %cst_56 {dimension_numbers = #tpu.dot_dimension_numbers<[1], [0], [0], [1], [0, 0, 1, 1], [], []>} : vector<16x64xf32>, vector<64x64xf32>, vector<16x64xf32> -> vector<16x64xf32>
    %112 = arith.addf %107, %111 : vector<16x64xf32>
    %113 = vector.extract_strided_slice %100 {offsets = [32, 0], sizes = [16, 64], strides = [1, 1]} : vector<48x64xf32> to vector<16x64xf32>
    %c2_57 = arith.constant 2 : index
    %c0_58 = arith.constant 0 : index
    %c0_59 = arith.constant 0 : index
    %114 = vector.load %arg14[%c2_57, %c0_58, %c0_59] : memref<3x64x64xf32, #tpu.memory_space<vmem>>, vector<1x64x64xf32>
    %115 = vector.shape_cast %114 : vector<1x64x64xf32> to vector<64x64xf32>
    %cst_60 = arith.constant dense<0.000000e+00> : vector<16x64xf32>
    %116 = tpu.matmul %113, %115, %cst_60 {dimension_numbers = #tpu.dot_dimension_numbers<[1], [0], [0], [1], [0, 0, 1, 1], [], []>} : vector<16x64xf32>, vector<64x64xf32>, vector<16x64xf32> -> vector<16x64xf32>
    %117 = arith.addf %112, %116 : vector<16x64xf32>
    %cst_61 = arith.constant 0.000000e+00 : f32
    %118 = vector.broadcast %cst_61 : f32 to vector<16x64xf32>
    %119 = arith.cmpf oge, %96, %118 : vector<16x64xf32>
    %cst_62 = arith.constant 0.00999999977 : f32
    %120 = vector.broadcast %cst_62 : f32 to vector<16x64xf32>
    %121 = arith.mulf %120, %96 : vector<16x64xf32>
    %122 = arith.select %119, %96, %121 : vector<16x64xi1>, vector<16x64xf32>
    %cst_63 = arith.constant 0.000000e+00 : f32
    %123 = vector.broadcast %cst_63 : f32 to vector<16x64xf32>
    %124 = arith.cmpf oge, %117, %123 : vector<16x64xf32>
    %cst_64 = arith.constant 0.00999999977 : f32
    %125 = vector.broadcast %cst_64 : f32 to vector<16x64xf32>
    %126 = arith.mulf %125, %117 : vector<16x64xf32>
    %127 = arith.select %124, %117, %126 : vector<16x64xi1>, vector<16x64xf32>
    %c0_65 = arith.constant 0 : index
    %c0_66 = arith.constant 0 : index
    %128 = vector.load %arg16[%c0_65, %c0_66] : memref<4x64xf32, #tpu.memory_space<vmem>>, vector<4x64xf32>
    %c0_67 = arith.constant 0 : index
    %c0_68 = arith.constant 0 : index
    %129 = vector.load %arg17[%c0_67, %c0_68] : memref<4x1xf32, #tpu.memory_space<vmem>>, vector<4x1xf32>
    %cst_69 = arith.constant dense<0.000000e+00> : vector<64xf32>
    %130 = vector.multi_reduction <add>, %122, %cst_69 [0] : vector<16x64xf32> to vector<64xf32>
    %131 = vector.shape_cast %130 : vector<64xf32> to vector<1x64xf32>
    %cst_70 = arith.constant 1.600000e+01 : f32
    %132 = vector.broadcast %cst_70 : f32 to vector<1x64xf32>
    %133 = arith.divf %131, %132 : vector<1x64xf32>
    %134 = vector.broadcast %133 : vector<1x64xf32> to vector<4x64xf32>
    %135 = arith.mulf %134, %128 : vector<4x64xf32>
    %cst_71 = arith.constant dense<0.000000e+00> : vector<4xf32>
    %136 = vector.multi_reduction <add>, %135, %cst_71 [1] : vector<4x64xf32> to vector<4xf32>
    %137 = vector.shape_cast %136 : vector<4xf32> to vector<4x1xf32>
    %cst_72 = arith.constant 0.000000e+00 : f32
    %138 = vector.broadcast %cst_72 : f32 to vector<4x1xf32>
    %139 = arith.maximumf %137, %138 : vector<4x1xf32>
    %140 = arith.mulf %139, %129 : vector<4x1xf32>
    %cst_73 = arith.constant dense<0.000000e+00> : vector<1xf32>
    %141 = vector.multi_reduction <add>, %140, %cst_73 [0] : vector<4x1xf32> to vector<1xf32>
    %142 = vector.shape_cast %141 : vector<1xf32> to vector<1x1xf32>
    %143 = arith.negf %142 : vector<1x1xf32>
    %144 = math.exp %143 : vector<1x1xf32>
    %cst_74 = arith.constant 1.000000e+00 : f32
    %145 = vector.broadcast %cst_74 : f32 to vector<1x1xf32>
    %146 = arith.addf %145, %144 : vector<1x1xf32>
    %147 = arith.divf %145, %146 : vector<1x1xf32>
    %148 = vector.broadcast %147 : vector<1x1xf32> to vector<16x64xf32>
    %149 = arith.mulf %122, %148 : vector<16x64xf32>
    %c0_75 = arith.constant 0 : index
    %c0_76 = arith.constant 0 : index
    %150 = vector.load %arg18[%c0_75, %c0_76] : memref<4x64xf32, #tpu.memory_space<vmem>>, vector<4x64xf32>
    %c0_77 = arith.constant 0 : index
    %c0_78 = arith.constant 0 : index
    %151 = vector.load %arg19[%c0_77, %c0_78] : memref<4x1xf32, #tpu.memory_space<vmem>>, vector<4x1xf32>
    %cst_79 = arith.constant dense<0.000000e+00> : vector<64xf32>
    %152 = vector.multi_reduction <add>, %127, %cst_79 [0] : vector<16x64xf32> to vector<64xf32>
    %153 = vector.shape_cast %152 : vector<64xf32> to vector<1x64xf32>
    %cst_80 = arith.constant 1.600000e+01 : f32
    %154 = vector.broadcast %cst_80 : f32 to vector<1x64xf32>
    %155 = arith.divf %153, %154 : vector<1x64xf32>
    %156 = vector.broadcast %155 : vector<1x64xf32> to vector<4x64xf32>
    %157 = arith.mulf %156, %150 : vector<4x64xf32>
    %cst_81 = arith.constant dense<0.000000e+00> : vector<4xf32>
    %158 = vector.multi_reduction <add>, %157, %cst_81 [1] : vector<4x64xf32> to vector<4xf32>
    %159 = vector.shape_cast %158 : vector<4xf32> to vector<4x1xf32>
    %cst_82 = arith.constant 0.000000e+00 : f32
    %160 = vector.broadcast %cst_82 : f32 to vector<4x1xf32>
    %161 = arith.maximumf %159, %160 : vector<4x1xf32>
    %162 = arith.mulf %161, %151 : vector<4x1xf32>
    %cst_83 = arith.constant dense<0.000000e+00> : vector<1xf32>
    %163 = vector.multi_reduction <add>, %162, %cst_83 [0] : vector<4x1xf32> to vector<1xf32>
    %164 = vector.shape_cast %163 : vector<1xf32> to vector<1x1xf32>
    %165 = arith.negf %164 : vector<1x1xf32>
    %166 = math.exp %165 : vector<1x1xf32>
    %cst_84 = arith.constant 1.000000e+00 : f32
    %167 = vector.broadcast %cst_84 : f32 to vector<1x1xf32>
    %168 = arith.addf %167, %166 : vector<1x1xf32>
    %169 = arith.divf %167, %168 : vector<1x1xf32>
    %170 = vector.broadcast %169 : vector<1x1xf32> to vector<16x64xf32>
    %171 = arith.mulf %127, %170 : vector<16x64xf32>
    %172 = arith.addf %149, %171 : vector<16x64xf32>
    %173 = arith.negf %172 : vector<16x64xf32>
    %174 = math.exp %173 : vector<16x64xf32>
    %cst_85 = arith.constant 1.000000e+00 : f32
    %175 = vector.broadcast %cst_85 : f32 to vector<16x64xf32>
    %176 = arith.addf %175, %174 : vector<16x64xf32>
    %177 = arith.divf %175, %176 : vector<16x64xf32>
    %178 = vector.extract_strided_slice %177 {offsets = [0, 0], sizes = [16, 32], strides = [1, 1]} : vector<16x64xf32> to vector<16x32xf32>
    %179 = vector.extract_strided_slice %177 {offsets = [0, 32], sizes = [16, 32], strides = [1, 1]} : vector<16x64xf32> to vector<16x32xf32>
    %180 = arith.mulf %178, %3 : vector<16x32xf32>
    %181 = vector.extract_strided_slice %61 {offsets = [0, 64], sizes = [16, 32], strides = [1, 1]} : vector<16x96xf32> to vector<16x32xf32>
    %c0_86 = arith.constant 0 : index
    %c0_87 = arith.constant 0 : index
    %182 = vector.load %arg8[%c0_86, %c0_87] : memref<16x32xf32, #tpu.memory_space<vmem>>, vector<16x32xf32>
    %cst_88 = arith.constant dense<0.000000e+00> : vector<48x32xf32>
    %183 = tpu.matmul %4, %180, %cst_88 {dimension_numbers = #tpu.dot_dimension_numbers<[1], [0], [0], [1], [0, 0, 1, 1], [], []>} : vector<48x16xf32>, vector<16x32xf32>, vector<48x32xf32> -> vector<48x32xf32>
    %184 = vector.extract_strided_slice %183 {offsets = [0, 0], sizes = [16, 32], strides = [1, 1]} : vector<48x32xf32> to vector<16x32xf32>
    %c0_89 = arith.constant 0 : index
    %c0_90 = arith.constant 0 : index
    %c0_91 = arith.constant 0 : index
    %185 = vector.load %arg20[%c0_89, %c0_90, %c0_91] : memref<3x32x256xf32, #tpu.memory_space<vmem>>, vector<1x32x256xf32>
    %186 = vector.shape_cast %185 : vector<1x32x256xf32> to vector<32x256xf32>
    %cst_92 = arith.constant dense<0.000000e+00> : vector<16x256xf32>
    %187 = tpu.matmul %184, %186, %cst_92 {dimension_numbers = #tpu.dot_dimension_numbers<[1], [0], [0], [1], [0, 0, 1, 1], [], []>} : vector<16x32xf32>, vector<32x256xf32>, vector<16x256xf32> -> vector<16x256xf32>
    %188 = vector.extract_strided_slice %183 {offsets = [16, 0], sizes = [16, 32], strides = [1, 1]} : vector<48x32xf32> to vector<16x32xf32>
    %c1_93 = arith.constant 1 : index
    %c0_94 = arith.constant 0 : index
    %c0_95 = arith.constant 0 : index
    %189 = vector.load %arg20[%c1_93, %c0_94, %c0_95] : memref<3x32x256xf32, #tpu.memory_space<vmem>>, vector<1x32x256xf32>
    %190 = vector.shape_cast %189 : vector<1x32x256xf32> to vector<32x256xf32>
    %cst_96 = arith.constant dense<0.000000e+00> : vector<16x256xf32>
    %191 = tpu.matmul %188, %190, %cst_96 {dimension_numbers = #tpu.dot_dimension_numbers<[1], [0], [0], [1], [0, 0, 1, 1], [], []>} : vector<16x32xf32>, vector<32x256xf32>, vector<16x256xf32> -> vector<16x256xf32>
    %192 = arith.addf %187, %191 : vector<16x256xf32>
    %193 = vector.extract_strided_slice %183 {offsets = [32, 0], sizes = [16, 32], strides = [1, 1]} : vector<48x32xf32> to vector<16x32xf32>
    %c2_97 = arith.constant 2 : index
    %c0_98 = arith.constant 0 : index
    %c0_99 = arith.constant 0 : index
    %194 = vector.load %arg20[%c2_97, %c0_98, %c0_99] : memref<3x32x256xf32, #tpu.memory_space<vmem>>, vector<1x32x256xf32>
    %195 = vector.shape_cast %194 : vector<1x32x256xf32> to vector<32x256xf32>
    %cst_100 = arith.constant dense<0.000000e+00> : vector<16x256xf32>
    %196 = tpu.matmul %193, %195, %cst_100 {dimension_numbers = #tpu.dot_dimension_numbers<[1], [0], [0], [1], [0, 0, 1, 1], [], []>} : vector<16x32xf32>, vector<32x256xf32>, vector<16x256xf32> -> vector<16x256xf32>
    %197 = arith.addf %192, %196 : vector<16x256xf32>
    %198 = arith.addf %182, %56 : vector<16x32xf32>
    %199 = arith.mulf %197, %7 : vector<16x256xf32>
    %200 = vector.extract_strided_slice %199 {offsets = [0, 0], sizes = [16, 32], strides = [1, 1]} : vector<16x256xf32> to vector<16x32xf32>
    %201 = vector.extract_strided_slice %199 {offsets = [0, 32], sizes = [16, 32], strides = [1, 1]} : vector<16x256xf32> to vector<16x32xf32>
    %202 = arith.addf %200, %201 : vector<16x32xf32>
    %203 = vector.extract_strided_slice %199 {offsets = [0, 64], sizes = [16, 32], strides = [1, 1]} : vector<16x256xf32> to vector<16x32xf32>
    %204 = arith.addf %202, %203 : vector<16x32xf32>
    %205 = vector.extract_strided_slice %199 {offsets = [0, 96], sizes = [16, 32], strides = [1, 1]} : vector<16x256xf32> to vector<16x32xf32>
    %206 = arith.addf %204, %205 : vector<16x32xf32>
    %207 = vector.extract_strided_slice %199 {offsets = [0, 128], sizes = [16, 32], strides = [1, 1]} : vector<16x256xf32> to vector<16x32xf32>
    %208 = arith.addf %206, %207 : vector<16x32xf32>
    %209 = vector.extract_strided_slice %199 {offsets = [0, 160], sizes = [16, 32], strides = [1, 1]} : vector<16x256xf32> to vector<16x32xf32>
    %210 = arith.addf %208, %209 : vector<16x32xf32>
    %211 = vector.extract_strided_slice %199 {offsets = [0, 192], sizes = [16, 32], strides = [1, 1]} : vector<16x256xf32> to vector<16x32xf32>
    %212 = arith.addf %210, %211 : vector<16x32xf32>
    %213 = vector.extract_strided_slice %199 {offsets = [0, 224], sizes = [16, 32], strides = [1, 1]} : vector<16x256xf32> to vector<16x32xf32>
    %214 = arith.addf %212, %213 : vector<16x32xf32>
    %215 = arith.addf %198, %214 : vector<16x32xf32>
    %c0_101 = arith.constant 0 : index
    %c0_102 = arith.constant 0 : index
    %216 = vector.load %arg21[%c0_101, %c0_102] : memref<32x32xf32, #tpu.memory_space<vmem>>, vector<32x32xf32>
    %cst_103 = arith.constant dense<0.000000e+00> : vector<16x32xf32>
    %217 = tpu.matmul %180, %216, %cst_103 {dimension_numbers = #tpu.dot_dimension_numbers<[1], [0], [0], [1], [0, 0, 1, 1], [], []>} : vector<16x32xf32>, vector<32x32xf32>, vector<16x32xf32> -> vector<16x32xf32>
    %218 = arith.addf %181, %217 : vector<16x32xf32>
    %cst_104 = arith.constant dense<0.000000e+00> : vector<48x32xf32>
    %219 = tpu.matmul %5, %218, %cst_104 {dimension_numbers = #tpu.dot_dimension_numbers<[1], [0], [0], [1], [0, 0, 1, 1], [], []>} : vector<48x16xf32>, vector<16x32xf32>, vector<48x32xf32> -> vector<48x32xf32>
    %c0_105 = arith.constant 0 : index
    %c0_106 = arith.constant 0 : index
    %220 = vector.load %arg23[%c0_105, %c0_106] : memref<1x32xf32, #tpu.memory_space<vmem>>, vector<1x32xf32>
    %221 = vector.extract_strided_slice %219 {offsets = [0, 0], sizes = [16, 32], strides = [1, 1]} : vector<48x32xf32> to vector<16x32xf32>
    %c0_107 = arith.constant 0 : index
    %c0_108 = arith.constant 0 : index
    %c0_109 = arith.constant 0 : index
    %222 = vector.load %arg22[%c0_107, %c0_108, %c0_109] : memref<3x32x32xf32, #tpu.memory_space<vmem>>, vector<1x32x32xf32>
    %223 = vector.shape_cast %222 : vector<1x32x32xf32> to vector<32x32xf32>
    %cst_110 = arith.constant dense<0.000000e+00> : vector<16x32xf32>
    %224 = tpu.matmul %221, %223, %cst_110 {dimension_numbers = #tpu.dot_dimension_numbers<[1], [0], [0], [1], [0, 0, 1, 1], [], []>} : vector<16x32xf32>, vector<32x32xf32>, vector<16x32xf32> -> vector<16x32xf32>
    %225 = vector.broadcast %220 : vector<1x32xf32> to vector<16x32xf32>
    %226 = arith.addf %225, %224 : vector<16x32xf32>
    %227 = vector.extract_strided_slice %219 {offsets = [16, 0], sizes = [16, 32], strides = [1, 1]} : vector<48x32xf32> to vector<16x32xf32>
    %c1_111 = arith.constant 1 : index
    %c0_112 = arith.constant 0 : index
    %c0_113 = arith.constant 0 : index
    %228 = vector.load %arg22[%c1_111, %c0_112, %c0_113] : memref<3x32x32xf32, #tpu.memory_space<vmem>>, vector<1x32x32xf32>
    %229 = vector.shape_cast %228 : vector<1x32x32xf32> to vector<32x32xf32>
    %cst_114 = arith.constant dense<0.000000e+00> : vector<16x32xf32>
    %230 = tpu.matmul %227, %229, %cst_114 {dimension_numbers = #tpu.dot_dimension_numbers<[1], [0], [0], [1], [0, 0, 1, 1], [], []>} : vector<16x32xf32>, vector<32x32xf32>, vector<16x32xf32> -> vector<16x32xf32>
    %231 = arith.addf %226, %230 : vector<16x32xf32>
    %232 = vector.extract_strided_slice %219 {offsets = [32, 0], sizes = [16, 32], strides = [1, 1]} : vector<48x32xf32> to vector<16x32xf32>
    %c2_115 = arith.constant 2 : index
    %c0_116 = arith.constant 0 : index
    %c0_117 = arith.constant 0 : index
    %233 = vector.load %arg22[%c2_115, %c0_116, %c0_117] : memref<3x32x32xf32, #tpu.memory_space<vmem>>, vector<1x32x32xf32>
    %234 = vector.shape_cast %233 : vector<1x32x32xf32> to vector<32x32xf32>
    %cst_118 = arith.constant dense<0.000000e+00> : vector<16x32xf32>
    %235 = tpu.matmul %232, %234, %cst_118 {dimension_numbers = #tpu.dot_dimension_numbers<[1], [0], [0], [1], [0, 0, 1, 1], [], []>} : vector<16x32xf32>, vector<32x32xf32>, vector<16x32xf32> -> vector<16x32xf32>
    %236 = arith.addf %231, %235 : vector<16x32xf32>
    %cst_119 = arith.constant 0.000000e+00 : f32
    %237 = vector.broadcast %cst_119 : f32 to vector<16x32xf32>
    %238 = arith.cmpf oge, %215, %237 : vector<16x32xf32>
    %cst_120 = arith.constant 0.00999999977 : f32
    %239 = vector.broadcast %cst_120 : f32 to vector<16x32xf32>
    %240 = arith.mulf %239, %215 : vector<16x32xf32>
    %241 = arith.select %238, %215, %240 : vector<16x32xi1>, vector<16x32xf32>
    %cst_121 = arith.constant 0.000000e+00 : f32
    %242 = vector.broadcast %cst_121 : f32 to vector<16x32xf32>
    %243 = arith.cmpf oge, %236, %242 : vector<16x32xf32>
    %cst_122 = arith.constant 0.00999999977 : f32
    %244 = vector.broadcast %cst_122 : f32 to vector<16x32xf32>
    %245 = arith.mulf %244, %236 : vector<16x32xf32>
    %246 = arith.select %243, %236, %245 : vector<16x32xi1>, vector<16x32xf32>
    %c0_123 = arith.constant 0 : index
    %c0_124 = arith.constant 0 : index
    %247 = vector.load %arg24[%c0_123, %c0_124] : memref<2x32xf32, #tpu.memory_space<vmem>>, vector<2x32xf32>
    %c0_125 = arith.constant 0 : index
    %c0_126 = arith.constant 0 : index
    %248 = vector.load %arg25[%c0_125, %c0_126] : memref<2x1xf32, #tpu.memory_space<vmem>>, vector<2x1xf32>
    %cst_127 = arith.constant dense<0.000000e+00> : vector<32xf32>
    %249 = vector.multi_reduction <add>, %241, %cst_127 [0] : vector<16x32xf32> to vector<32xf32>
    %250 = vector.shape_cast %249 : vector<32xf32> to vector<1x32xf32>
    %cst_128 = arith.constant 1.600000e+01 : f32
    %251 = vector.broadcast %cst_128 : f32 to vector<1x32xf32>
    %252 = arith.divf %250, %251 : vector<1x32xf32>
    %253 = vector.broadcast %252 : vector<1x32xf32> to vector<2x32xf32>
    %254 = arith.mulf %253, %247 : vector<2x32xf32>
    %cst_129 = arith.constant dense<0.000000e+00> : vector<2xf32>
    %255 = vector.multi_reduction <add>, %254, %cst_129 [1] : vector<2x32xf32> to vector<2xf32>
    %256 = vector.shape_cast %255 : vector<2xf32> to vector<2x1xf32>
    %cst_130 = arith.constant 0.000000e+00 : f32
    %257 = vector.broadcast %cst_130 : f32 to vector<2x1xf32>
    %258 = arith.maximumf %256, %257 : vector<2x1xf32>
    %259 = arith.mulf %258, %248 : vector<2x1xf32>
    %cst_131 = arith.constant dense<0.000000e+00> : vector<1xf32>
    %260 = vector.multi_reduction <add>, %259, %cst_131 [0] : vector<2x1xf32> to vector<1xf32>
    %261 = vector.shape_cast %260 : vector<1xf32> to vector<1x1xf32>
    %262 = arith.negf %261 : vector<1x1xf32>
    %263 = math.exp %262 : vector<1x1xf32>
    %cst_132 = arith.constant 1.000000e+00 : f32
    %264 = vector.broadcast %cst_132 : f32 to vector<1x1xf32>
    %265 = arith.addf %264, %263 : vector<1x1xf32>
    %266 = arith.divf %264, %265 : vector<1x1xf32>
    %267 = vector.broadcast %266 : vector<1x1xf32> to vector<16x32xf32>
    %268 = arith.mulf %241, %267 : vector<16x32xf32>
    %c0_133 = arith.constant 0 : index
    %c0_134 = arith.constant 0 : index
    %269 = vector.load %arg26[%c0_133, %c0_134] : memref<2x32xf32, #tpu.memory_space<vmem>>, vector<2x32xf32>
    %c0_135 = arith.constant 0 : index
    %c0_136 = arith.constant 0 : index
    %270 = vector.load %arg27[%c0_135, %c0_136] : memref<2x1xf32, #tpu.memory_space<vmem>>, vector<2x1xf32>
    %cst_137 = arith.constant dense<0.000000e+00> : vector<32xf32>
    %271 = vector.multi_reduction <add>, %246, %cst_137 [0] : vector<16x32xf32> to vector<32xf32>
    %272 = vector.shape_cast %271 : vector<32xf32> to vector<1x32xf32>
    %cst_138 = arith.constant 1.600000e+01 : f32
    %273 = vector.broadcast %cst_138 : f32 to vector<1x32xf32>
    %274 = arith.divf %272, %273 : vector<1x32xf32>
    %275 = vector.broadcast %274 : vector<1x32xf32> to vector<2x32xf32>
    %276 = arith.mulf %275, %269 : vector<2x32xf32>
    %cst_139 = arith.constant dense<0.000000e+00> : vector<2xf32>
    %277 = vector.multi_reduction <add>, %276, %cst_139 [1] : vector<2x32xf32> to vector<2xf32>
    %278 = vector.shape_cast %277 : vector<2xf32> to vector<2x1xf32>
    %cst_140 = arith.constant 0.000000e+00 : f32
    %279 = vector.broadcast %cst_140 : f32 to vector<2x1xf32>
    %280 = arith.maximumf %278, %279 : vector<2x1xf32>
    %281 = arith.mulf %280, %270 : vector<2x1xf32>
    %cst_141 = arith.constant dense<0.000000e+00> : vector<1xf32>
    %282 = vector.multi_reduction <add>, %281, %cst_141 [0] : vector<2x1xf32> to vector<1xf32>
    %283 = vector.shape_cast %282 : vector<1xf32> to vector<1x1xf32>
    %284 = arith.negf %283 : vector<1x1xf32>
    %285 = math.exp %284 : vector<1x1xf32>
    %cst_142 = arith.constant 1.000000e+00 : f32
    %286 = vector.broadcast %cst_142 : f32 to vector<1x1xf32>
    %287 = arith.addf %286, %285 : vector<1x1xf32>
    %288 = arith.divf %286, %287 : vector<1x1xf32>
    %289 = vector.broadcast %288 : vector<1x1xf32> to vector<16x32xf32>
    %290 = arith.mulf %246, %289 : vector<16x32xf32>
    %291 = arith.addf %268, %290 : vector<16x32xf32>
    %292 = math.tanh %291 : vector<16x32xf32>
    %293 = arith.mulf %179, %3 : vector<16x32xf32>
    %cst_143 = arith.constant 1.000000e+00 : f32
    %294 = vector.broadcast %cst_143 : f32 to vector<16x32xf32>
    %295 = arith.subf %294, %179 : vector<16x32xf32>
    %296 = arith.mulf %295, %292 : vector<16x32xf32>
    %297 = arith.addf %293, %296 : vector<16x32xf32>
    %c0_144 = arith.constant 0 : index
    %c0_145 = arith.constant 0 : index
    %c0_146 = arith.constant 0 : index
    %298 = vector.load %arg28[%c0_144, %c0_145, %c0_146] : memref<1x16x32xf32, #tpu.memory_space<vmem>>, vector<1x16x32xf32>
    %299 = vector.shape_cast %298 : vector<1x16x32xf32> to vector<16x32xf32>
    %300 = vector.shape_cast %297 : vector<16x32xf32> to vector<1x16x32xf32>
    tpu.vector_store %arg28[%c0_144, %c0_145, %c0_146], %300 {strides = array<i32>} : memref<1x16x32xf32, #tpu.memory_space<vmem>>, vector<1x16x32xf32>,
    return
  }
  func.func @transform_0(%arg0: i32) -> (i32, i32, i32) {
    %c0_i32 = arith.constant 0 : i32
    %c0_i32_0 = arith.constant 0 : i32
    %c0_i32_1 = arith.constant 0 : i32
    return %arg0, %c0_i32, %c0_i32_0 : i32, i32, i32
  }
  func.func @transform_1(%arg0: i32) -> (i32, i32, i32) {
    %c0_i32 = arith.constant 0 : i32
    %c0_i32_0 = arith.constant 0 : i32
    %c0_i32_1 = arith.constant 0 : i32
    return %arg0, %c0_i32, %c0_i32_0 : i32, i32, i32
  }
  func.func @transform_2(%arg0: i32) -> (i32, i32) {
    %c0_i32 = arith.constant 0 : i32
    %c0_i32_0 = arith.constant 0 : i32
    %c0_i32_1 = arith.constant 0 : i32
    return %c0_i32, %c0_i32_0 : i32, i32
  }
  func.func @transform_3(%arg0: i32) -> (i32, i32) {
    %c0_i32 = arith.constant 0 : i32
    %c0_i32_0 = arith.constant 0 : i32
    %c0_i32_1 = arith.constant 0 : i32
    return %c0_i32, %c0_i32_0 : i32, i32
  }
  func.func @transform_4(%arg0: i32) -> (i32, i32) {
    %c0_i32 = arith.constant 0 : i32
    %c0_i32_0 = arith.constant 0 : i32
    %c0_i32_1 = arith.constant 0 : i32
    return %c0_i32, %c0_i32_0 : i32, i32
  }
  func.func @transform_5(%arg0: i32) -> (i32, i32) {
    %c0_i32 = arith.constant 0 : i32
    %c0_i32_0 = arith.constant 0 : i32
    %c0_i32_1 = arith.constant 0 : i32
    return %c0_i32, %c0_i32_0 : i32, i32
  }
  func.func @transform_6(%arg0: i32) -> (i32, i32) {
    %c0_i32 = arith.constant 0 : i32
    %c0_i32_0 = arith.constant 0 : i32
    %c0_i32_1 = arith.constant 0 : i32
    return %c0_i32, %c0_i32_0 : i32, i32
  }
  func.func @transform_7(%arg0: i32) -> (i32, i32) {
    %c0_i32 = arith.constant 0 : i32
    %c0_i32_0 = arith.constant 0 : i32
    %c0_i32_1 = arith.constant 0 : i32
    return %c0_i32, %c0_i32_0 : i32, i32
  }
  func.func @transform_8(%arg0: i32) -> (i32, i32, i32) {
    %c0_i32 = arith.constant 0 : i32
    %c0_i32_0 = arith.constant 0 : i32
    %c0_i32_1 = arith.constant 0 : i32
    %c0_i32_2 = arith.constant 0 : i32
    return %c0_i32, %c0_i32_0, %c0_i32_1 : i32, i32, i32
  }
  func.func @transform_9(%arg0: i32) -> (i32, i32) {
    %c0_i32 = arith.constant 0 : i32
    %c0_i32_0 = arith.constant 0 : i32
    %c0_i32_1 = arith.constant 0 : i32
    return %c0_i32, %c0_i32_0 : i32, i32
  }
  func.func @transform_10(%arg0: i32) -> (i32, i32) {
    %c0_i32 = arith.constant 0 : i32
    %c0_i32_0 = arith.constant 0 : i32
    %c0_i32_1 = arith.constant 0 : i32
    return %c0_i32, %c0_i32_0 : i32, i32
  }
  func.func @transform_11(%arg0: i32) -> (i32, i32, i32) {
    %c0_i32 = arith.constant 0 : i32
    %c0_i32_0 = arith.constant 0 : i32
    %c0_i32_1 = arith.constant 0 : i32
    %c0_i32_2 = arith.constant 0 : i32
    return %c0_i32, %c0_i32_0, %c0_i32_1 : i32, i32, i32
  }
  func.func @transform_12(%arg0: i32) -> (i32, i32) {
    %c0_i32 = arith.constant 0 : i32
    %c0_i32_0 = arith.constant 0 : i32
    %c0_i32_1 = arith.constant 0 : i32
    return %c0_i32, %c0_i32_0 : i32, i32
  }
  func.func @transform_13(%arg0: i32) -> (i32, i32, i32) {
    %c0_i32 = arith.constant 0 : i32
    %c0_i32_0 = arith.constant 0 : i32
    %c0_i32_1 = arith.constant 0 : i32
    %c0_i32_2 = arith.constant 0 : i32
    return %c0_i32, %c0_i32_0, %c0_i32_1 : i32, i32, i32
  }
  func.func @transform_14(%arg0: i32) -> (i32, i32) {
    %c0_i32 = arith.constant 0 : i32
    %c0_i32_0 = arith.constant 0 : i32
    %c0_i32_1 = arith.constant 0 : i32
    return %c0_i32, %c0_i32_0 : i32, i32
  }
  func.func @transform_15(%arg0: i32) -> (i32, i32) {
    %c0_i32 = arith.constant 0 : i32
    %c0_i32_0 = arith.constant 0 : i32
    %c0_i32_1 = arith.constant 0 : i32
    return %c0_i32, %c0_i32_0 : i32, i32
  }
  func.func @transform_16(%arg0: i32) -> (i32, i32) {
    %c0_i32 = arith.constant 0 : i32
    %c0_i32_0 = arith.constant 0 : i32
    %c0_i32_1 = arith.constant 0 : i32
    return %c0_i32, %c0_i32_0 : i32, i32
  }
  func.func @transform_17(%arg0: i32) -> (i32, i32) {
    %c0_i32 = arith.constant 0 : i32
    %c0_i32_0 = arith.constant 0 : i32
    %c0_i32_1 = arith.constant 0 : i32
    return %c0_i32, %c0_i32_0 : i32, i32
  }
  func.func @transform_18(%arg0: i32) -> (i32, i32) {
    %c0_i32 = arith.constant 0 : i32
    %c0_i32_0 = arith.constant 0 : i32
    %c0_i32_1 = arith.constant 0 : i32
    return %c0_i32, %c0_i32_0 : i32, i32
  }
  func.func @transform_19(%arg0: i32) -> (i32, i32, i32) {
    %c0_i32 = arith.constant 0 : i32
    %c0_i32_0 = arith.constant 0 : i32
    %c0_i32_1 = arith.constant 0 : i32
    %c0_i32_2 = arith.constant 0 : i32
    return %c0_i32, %c0_i32_0, %c0_i32_1 : i32, i32, i32
  }
  func.func @transform_20(%arg0: i32) -> (i32, i32) {
    %c0_i32 = arith.constant 0 : i32
    %c0_i32_0 = arith.constant 0 : i32
    %c0_i32_1 = arith.constant 0 : i32
    return %c0_i32, %c0_i32_0 : i32, i32
  }
  func.func @transform_21(%arg0: i32) -> (i32, i32, i32) {
    %c0_i32 = arith.constant 0 : i32
    %c0_i32_0 = arith.constant 0 : i32
    %c0_i32_1 = arith.constant 0 : i32
    %c0_i32_2 = arith.constant 0 : i32
    return %c0_i32, %c0_i32_0, %c0_i32_1 : i32, i32, i32
  }
  func.func @transform_22(%arg0: i32) -> (i32, i32) {
    %c0_i32 = arith.constant 0 : i32
    %c0_i32_0 = arith.constant 0 : i32
    %c0_i32_1 = arith.constant 0 : i32
    return %c0_i32, %c0_i32_0 : i32, i32
  }
  func.func @transform_23(%arg0: i32) -> (i32, i32) {
    %c0_i32 = arith.constant 0 : i32
    %c0_i32_0 = arith.constant 0 : i32
    %c0_i32_1 = arith.constant 0 : i32
    return %c0_i32, %c0_i32_0 : i32, i32
  }
  func.func @transform_24(%arg0: i32) -> (i32, i32) {
    %c0_i32 = arith.constant 0 : i32
    %c0_i32_0 = arith.constant 0 : i32
    %c0_i32_1 = arith.constant 0 : i32
    return %c0_i32, %c0_i32_0 : i32, i32
  }
  func.func @transform_25(%arg0: i32) -> (i32, i32) {
    %c0_i32 = arith.constant 0 : i32
    %c0_i32_0 = arith.constant 0 : i32
    %c0_i32_1 = arith.constant 0 : i32
    return %c0_i32, %c0_i32_0 : i32, i32
  }
  func.func @transform_26(%arg0: i32) -> (i32, i32) {
    %c0_i32 = arith.constant 0 : i32
    %c0_i32_0 = arith.constant 0 : i32
    %c0_i32_1 = arith.constant 0 : i32
    return %c0_i32, %c0_i32_0 : i32, i32
  }
  func.func @transform_27(%arg0: i32) -> (i32, i32, i32) {
    %c0_i32 = arith.constant 0 : i32
    %c0_i32_0 = arith.constant 0 : i32
    %c0_i32_1 = arith.constant 0 : i32
    return %arg0, %c0_i32, %c0_i32_0 : i32, i32, i32
  }
}

</mosaic_0001>

<llo_original>
// kernel: tpu_custom_call.1
$region0: #{tpu_custom_call.1}
  #allocation0 [shape = 'u32[]', space=smem, size = 0x4, offset = 0x4, fixed_abs, tag = 'smem constant byte address 0x4 - core index']
  #allocation1 [shape = 'u32[72,128]{1,0:T(1,128)}', space=vmem, size = 0x9000, scoped, tag = 'internal scratch']
  %s0 = inlined_call_operand.vmem [shape: f32[2,16,4], index: 0, kind: input, shape index: {}]
  %s1 = inlined_call_operand.hbm [shape: f32[2,16,32], index: 1, kind: input, shape index: {}]
  %s2 = inlined_call_operand.vmem [shape: f32[48,16], index: 2, kind: input, shape index: {}]
  %s3 = inlined_call_operand.vmem [shape: f32[48,16], index: 3, kind: input, shape index: {}]
  %s4 = inlined_call_operand.hbm [shape: f32[16,512], index: 4, kind: input, shape index: {}]
  %s5 = inlined_call_operand.hbm [shape: f32[16,256], index: 5, kind: input, shape index: {}]
  %s6 = inlined_call_operand.hbm [shape: f32[16,64], index: 6, kind: input, shape index: {}]
  %s7 = inlined_call_operand.hbm [shape: f32[16,32], index: 7, kind: input, shape index: {}]
  %s8 = inlined_call_operand.hbm [shape: f32[3,4,768], index: 8, kind: input, shape index: {}]
  %s9 = inlined_call_operand.vmem [shape: f32[4,96], index: 9, kind: input, shape index: {}]
  %s10 = inlined_call_operand.hbm [shape: f32[1,96], index: 10, kind: input, shape index: {}]
  %s11 = inlined_call_operand.hbm [shape: f32[3,32,512], index: 11, kind: input, shape index: {}]
  %s12 = inlined_call_operand.hbm [shape: f32[32,64], index: 12, kind: input, shape index: {}]
  %s13 = inlined_call_operand.vmem [shape: f32[3,64,64], index: 13, kind: input, shape index: {}]
  %s14 = inlined_call_operand.hbm [shape: f32[1,64], index: 14, kind: input, shape index: {}]
  %s15 = inlined_call_operand.hbm [shape: f32[4,64], index: 15, kind: input, shape index: {}]
  %s16 = inlined_call_operand.vmem [shape: f32[4,1], index: 16, kind: input, shape index: {}]
  %s17 = inlined_call_operand.hbm [shape: f32[4,64], index: 17, kind: input, shape index: {}]
  %s18 = inlined_call_operand.vmem [shape: f32[4,1], index: 18, kind: input, shape index: {}]
  %s19 = inlined_call_operand.hbm [shape: f32[3,32,256], index: 19, kind: input, shape index: {}]
  %s20 = inlined_call_operand.hbm [shape: f32[32,32], index: 20, kind: input, shape index: {}]
  %s21 = inlined_call_operand.hbm [shape: f32[3,32,32], index: 21, kind: input, shape index: {}]
  %s22 = inlined_call_operand.vmem [shape: f32[1,32], index: 22, kind: input, shape index: {}]
  %s23 = inlined_call_operand.vmem [shape: f32[2,32], index: 23, kind: input, shape index: {}]
  %s24 = inlined_call_operand.vmem [shape: f32[2,1], index: 24, kind: input, shape index: {}]
  %s25 = inlined_call_operand.vmem [shape: f32[2,32], index: 25, kind: input, shape index: {}]
  %s26 = inlined_call_operand.vmem [shape: f32[2,1], index: 26, kind: input, shape index: {}]
  %s27 = inlined_call_operand.hbm [shape: f32[2,16,32], index: 27, kind: output, shape index: {}]
  %s28 = sld [smem:[#allocation0]]
  $region201: #{tpu_custom_call.1} parent=0
    _
  %s30 = ssub.s32 1, %s28
  %s31 = scalar_select 0, %s30, %s28
  $region1: #{tpu_custom_call.1} parent=0
    #allocation2 [shape = 'u8[16384]{0}', space=vmem, size = 0x4000, scoped, tag = 'input window, operand 1']
    #allocation3 [shape = 's32[2]{0}', space=sflag, size = 0x8, scoped, tag = 'scoped memory for tpu_custom_call.1']
    #allocation4 [shape = 's32[2]{0}', space=sflag, size = 0x8, scoped, tag = 'scoped memory for tpu_custom_call.1']
    #allocation5 [shape = 'u8[32768]{0}', space=vmem, size = 0x8000, scoped, tag = 'input window, operand 4, single buffered']
    #allocation6 [shape = 's32[1]{0}', space=sflag, size = 0x4, scoped, tag = 'scoped memory for tpu_custom_call.1']
    #allocation7 [shape = 'u8[16384]{0}', space=vmem, size = 0x4000, scoped, tag = 'input window, operand 5, single buffered']
    #allocation8 [shape = 'u8[8192]{0}', space=vmem, size = 0x2000, scoped, tag = 'input window, operand 6, single buffered']
    #allocation9 [shape = 's32[1]{0}', space=sflag, size = 0x4, scoped, tag = 'scoped memory for tpu_custom_call.1']
    #allocation10 [shape = 'u8[8192]{0}', space=vmem, size = 0x2000, scoped, tag = 'input window, operand 7, single buffered']
    #allocation11 [shape = 'u8[36864]{0}', space=vmem, size = 0x9000, scoped, tag = 'input window, operand 8, single buffered']
    #allocation12 [shape = 's32[1]{0}', space=sflag, size = 0x4, scoped, tag = 'scoped memory for tpu_custom_call.1']
    #allocation13 [shape = 'u8[512]{0}', space=vmem, size = 0x400, scoped, tag = 'input window, operand 10, single buffered']
    #allocation14 [shape = 'u8[196608]{0}', space=vmem, size = 0x30000, scoped, tag = 'input window, operand 11, single buffered']
    #allocation15 [shape = 's32[1]{0}', space=sflag, size = 0x4, scoped, tag = 'scoped memory for tpu_custom_call.1']
    #allocation16 [shape = 'u8[16384]{0}', space=vmem, size = 0x4000, scoped, tag = 'input window, operand 12, single buffered']
    #allocation17 [shape = 'u8[512]{0}', space=vmem, size = 0x400, scoped, tag = 'input window, operand 14, single buffered']
    #allocation18 [shape = 's32[1]{0}', space=sflag, size = 0x4, scoped, tag = 'scoped memory for tpu_custom_call.1']
    #allocation19 [shape = 'u8[2048]{0}', space=vmem, size = 0x800, scoped, tag = 'input window, operand 15, single buffered']
    #allocation20 [shape = 'u8[2048]{0}', space=vmem, size = 0x800, scoped, tag = 'input window, operand 17, single buffered']
    #allocation21 [shape = 's32[1]{0}', space=sflag, size = 0x4, scoped, tag = 'scoped memory for tpu_custom_call.1']
    #allocation22 [shape = 'u8[98304]{0}', space=vmem, size = 0x18000, scoped, tag = 'input window, operand 19, single buffered']
    #allocation23 [shape = 'u8[16384]{0}', space=vmem, size = 0x4000, scoped, tag = 'input window, operand 20, single buffered']
    #allocation24 [shape = 's32[1]{0}', space=sflag, size = 0x4, scoped, tag = 'scoped memory for tpu_custom_call.1']
    #allocation25 [shape = 'u8[49152]{0}', space=vmem, size = 0xc000, scoped, tag = 'input window, operand 21, single buffered']
    #allocation26 [shape = 'u8[16384]{0}', space=vmem, size = 0x4000, scoped, tag = 'output window, operand 0']
    %32 = vsyncpa [#allocation3], 0
    %s33 = scalar_lea.sflag [#allocation3], 1
    %34 = vsyncpa %s33, 0
    %35 = vsyncpa [#allocation6], 0
    %36 = vsyncpa [#allocation9], 0
    %37 = vsyncpa [#allocation12], 0
    %38 = vsyncpa [#allocation15], 0
    %39 = vsyncpa [#allocation18], 0
    %40 = vsyncpa [#allocation21], 0
    %41 = vsyncpa [#allocation24], 0
    %42 = vsyncpa [#allocation4], 0
    %s43 = scalar_lea.sflag [#allocation4], 1
    %44 = vsyncpa %s43, 0
    loop: start=0, step=1, limit=4
    $region2: #{tpu_custom_call.1} parent=1 // loop_pre_header
      _
    $region3: #{tpu_custom_call.1} parent=1 // loop_header
      %s46 = sphi 0, %s50
      %p47 = scmp.ge.s32.totalorder %s46, 4
      %s56 = sphi 0, %s58
      %s59 = sphi 0, %s56
      %s60 = sphi 0, %s59
      %s76 = sphi 0, %s60
      %s82 = sphi 0, %s84
      %s85 = sphi 0, %s82
      %s86 = sphi 0, %s85
      %s102 = sphi 0, %s86
      %s106 = sphi 0, %s106
      %s108 = sphi 0, %s106
      %s109 = sphi 0, %s108
      %s123 = sphi 0, %s109
      %s127 = sphi 0, %s127
      %s129 = sphi 0, %s127
      %s130 = sphi 0, %s129
      %s144 = sphi 0, %s130
      %s148 = sphi 0, %s148
      %s150 = sphi 0, %s148
      %s151 = sphi 0, %s150
      %s165 = sphi 0, %s151
      %s169 = sphi 0, %s169
      %s171 = sphi 0, %s169
      %s172 = sphi 0, %s171
      %s186 = sphi 0, %s172
      %s190 = sphi 0, %s190
      %s192 = sphi 0, %s190
      %s193 = sphi 0, %s192
      %s207 = sphi 0, %s193
      %s211 = sphi 0, %s211
      %s213 = sphi 0, %s211
      %s214 = sphi 0, %s213
      %s228 = sphi 0, %s214
      %s232 = sphi 0, %s232
      %s234 = sphi 0, %s232
      %s235 = sphi 0, %s234
      %s249 = sphi 0, %s235
      %s253 = sphi 0, %s253
      %s255 = sphi 0, %s253
      %s256 = sphi 0, %s255
      %s270 = sphi 0, %s256
      %s274 = sphi 0, %s274
      %s276 = sphi 0, %s274
      %s277 = sphi 0, %s276
      %s291 = sphi 0, %s277
      %s295 = sphi 0, %s295
      %s297 = sphi 0, %s295
      %s298 = sphi 0, %s297
      %s312 = sphi 0, %s298
      %s316 = sphi 0, %s316
      %s318 = sphi 0, %s316
      %s319 = sphi 0, %s318
      %s333 = sphi 0, %s319
      %s337 = sphi 0, %s337
      %s339 = sphi 0, %s337
      %s340 = sphi 0, %s339
      %s354 = sphi 0, %s340
      %s358 = sphi 0, %s358
      %s360 = sphi 0, %s358
      %s361 = sphi 0, %s360
      %s375 = sphi 0, %s361
      %s379 = sphi 0, %s379
      %s381 = sphi 0, %s379
      %s382 = sphi 0, %s381
      %s396 = sphi 0, %s382
      %s400 = sphi 0, %s400
      %s402 = sphi 0, %s400
      %s403 = sphi 0, %s402
      %s417 = sphi 0, %s403
      %s421 = sphi 0, %s421
      %s423 = sphi 0, %s421
      %s424 = sphi 0, %s423
      %s438 = sphi 0, %s424
      %s442 = sphi 0, %s442
      %s444 = sphi 0, %s442
      %s445 = sphi 0, %s444
      %s459 = sphi 0, %s445
      %s463 = sphi 0, %s463
      %s465 = sphi 0, %s463
      %s466 = sphi 0, %s465
      %s480 = sphi 0, %s466
      %s484 = sphi 0, %s484
      %s486 = sphi 0, %s484
      %s487 = sphi 0, %s486
      %s501 = sphi 0, %s487
      %s505 = sphi 0, %s505
      %s507 = sphi 0, %s505
      %s508 = sphi 0, %s507
      %s522 = sphi 0, %s508
      %s526 = sphi 0, %s526
      %s528 = sphi 0, %s526
      %s529 = sphi 0, %s528
      %s543 = sphi 0, %s529
      %s547 = sphi 0, %s547
      %s549 = sphi 0, %s547
      %s550 = sphi 0, %s549
      %s564 = sphi 0, %s550
      %s568 = sphi 0, %s568
      %s570 = sphi 0, %s568
      %s571 = sphi 0, %s570
      %s585 = sphi 0, %s571
      %s589 = sphi 0, %s589
      %s591 = sphi 0, %s589
      %s592 = sphi 0, %s591
      %s606 = sphi 0, %s592
      %s610 = sphi 0, %s610
      %s612 = sphi 0, %s610
      %s613 = sphi 0, %s612
      %s627 = sphi 0, %s613
      %s633 = sphi 0, %s635
      %s636 = sphi 0, %s633
      %s637 = sphi 0, %s636
      %s653 = sphi 0, %s637
    $region4: #{tpu_custom_call.1} parent=1 // loop_header_branch
      %49 = sbr.rel (%p47) target = $region8
    $region5: #{tpu_custom_call.1} parent=1 // loop_body
      %s51 = ssub.s32 %s46, 1
      %s52 = ssub.s32 %s46, 2
      %s53 = sadd.s32 %s46, 1
      %s54 = ssub.s32 %s46, %s53
      %p55 = scmp.eq.s32.totalorder %s54, 0
      %s57 = sadd.s32 %s56, 1
      %s58 = scalar_select %p55, %s56, %s57
      %p61 = pneg %p55
      %p62 = scmp.eq.s32.totalorder %s46, 1
      %p63 = por %p61, %p62
      %p64 = scmp.ne.s32.totalorder %s56, %s59
      %p65 = scmp.eq.s32.totalorder %s46, 0
      %p66 = por %p64, %p65
      %p67 = scmp.ne.s32.totalorder %s56, %s59
      %p68 = scmp.eq.s32.totalorder %s51, 1
      %p69 = por %p67, %p68
      %p70 = scmp.ne.s32.totalorder %s59, %s60
      %p71 = scmp.eq.s32.totalorder %s51, 0
      %p72 = por %p70, %p71
      %p73 = scmp.ne.s32.totalorder %s59, %s60
      %p74 = scmp.eq.s32.totalorder %s52, 1
      %p75 = por %p73, %p74
      %p77 = scmp.ne.s32.totalorder %s60, %s76
      %p78 = scmp.eq.s32.totalorder %s52, 0
      %p79 = por %p77, %p78
      %s80 = ssub.s32 %s46, %s53
      %p81 = scmp.eq.s32.totalorder %s80, 0
      %s83 = sadd.s32 %s82, 1
      %s84 = scalar_select %p81, %s82, %s83
      %p87 = pneg %p81
      %p88 = scmp.eq.s32.totalorder %s46, 1
      %p89 = por %p87, %p88
      %p90 = scmp.ne.s32.totalorder %s82, %s85
      %p91 = scmp.eq.s32.totalorder %s46, 0
      %p92 = por %p90, %p91
      %p93 = scmp.ne.s32.totalorder %s82, %s85
      %p94 = scmp.eq.s32.totalorder %s51, 1
      %p95 = por %p93, %p94
      %p96 = scmp.ne.s32.totalorder %s85, %s86
      %p97 = scmp.eq.s32.totalorder %s51, 0
      %p98 = por %p96, %p97
      %p99 = scmp.ne.s32.totalorder %s85, %s86
      %p100 = scmp.eq.s32.totalorder %s52, 1
      %p101 = por %p99, %p100
      %p103 = scmp.ne.s32.totalorder %s86, %s102
      %p104 = scmp.eq.s32.totalorder %s52, 0
      %p105 = por %p103, %p104
      %s107 = sadd.s32 %s106, 1
      %p110 = scmp.eq.s32.totalorder %s46, 1
      %p111 = scmp.ne.s32.totalorder %s106, %s108
      %p112 = scmp.eq.s32.totalorder %s46, 0
      %p113 = por %p111, %p112
      %p114 = scmp.ne.s32.totalorder %s106, %s108
      %p115 = scmp.eq.s32.totalorder %s51, 1
      %p116 = por %p114, %p115
      %p117 = scmp.ne.s32.totalorder %s108, %s109
      %p118 = scmp.eq.s32.totalorder %s51, 0
      %p119 = por %p117, %p118
      %p120 = scmp.ne.s32.totalorder %s108, %s109
      %p121 = scmp.eq.s32.totalorder %s52, 1
      %p122 = por %p120, %p121
      %p124 = scmp.ne.s32.totalorder %s109, %s123
      %p125 = scmp.eq.s32.totalorder %s52, 0
      %p126 = por %p124, %p125
      %s128 = sadd.s32 %s127, 1
      %p131 = scmp.eq.s32.totalorder %s46, 1
      %p132 = scmp.ne.s32.totalorder %s127, %s129
      %p133 = scmp.eq.s32.totalorder %s46, 0
      %p134 = por %p132, %p133
      %p135 = scmp.ne.s32.totalorder %s127, %s129
      %p136 = scmp.eq.s32.totalorder %s51, 1
      %p137 = por %p135, %p136
      %p138 = scmp.ne.s32.totalorder %s129, %s130
      %p139 = scmp.eq.s32.totalorder %s51, 0
      %p140 = por %p138, %p139
      %p141 = scmp.ne.s32.totalorder %s129, %s130
      %p142 = scmp.eq.s32.totalorder %s52, 1
      %p143 = por %p141, %p142
      %p145 = scmp.ne.s32.totalorder %s130, %s144
      %p146 = scmp.eq.s32.totalorder %s52, 0
      %p147 = por %p145, %p146
      %s149 = sadd.s32 %s148, 1
      %p152 = scmp.eq.s32.totalorder %s46, 1
      %p153 = scmp.ne.s32.totalorder %s148, %s150
      %p154 = scmp.eq.s32.totalorder %s46, 0
      %p155 = por %p153, %p154
      %p156 = scmp.ne.s32.totalorder %s148, %s150
      %p157 = scmp.eq.s32.totalorder %s51, 1
      %p158 = por %p156, %p157
      %p159 = scmp.ne.s32.totalorder %s150, %s151
      %p160 = scmp.eq.s32.totalorder %s51, 0
      %p161 = por %p159, %p160
      %p162 = scmp.ne.s32.totalorder %s150, %s151
      %p163 = scmp.eq.s32.totalorder %s52, 1
      %p164 = por %p162, %p163
      %p166 = scmp.ne.s32.totalorder %s151, %s165
      %p167 = scmp.eq.s32.totalorder %s52, 0
      %p168 = por %p166, %p167
      %s170 = sadd.s32 %s169, 1
      %p173 = scmp.eq.s32.totalorder %s46, 1
      %p174 = scmp.ne.s32.totalorder %s169, %s171
      %p175 = scmp.eq.s32.totalorder %s46, 0
      %p176 = por %p174, %p175
      %p177 = scmp.ne.s32.totalorder %s169, %s171
      %p178 = scmp.eq.s32.totalorder %s51, 1
      %p179 = por %p177, %p178
      %p180 = scmp.ne.s32.totalorder %s171, %s172
      %p181 = scmp.eq.s32.totalorder %s51, 0
      %p182 = por %p180, %p181
      %p183 = scmp.ne.s32.totalorder %s171, %s172
      %p184 = scmp.eq.s32.totalorder %s52, 1
      %p185 = por %p183, %p184
      %p187 = scmp.ne.s32.totalorder %s172, %s186
      %p188 = scmp.eq.s32.totalorder %s52, 0
      %p189 = por %p187, %p188
      %s191 = sadd.s32 %s190, 1
      %p194 = scmp.eq.s32.totalorder %s46, 1
      %p195 = scmp.ne.s32.totalorder %s190, %s192
      %p196 = scmp.eq.s32.totalorder %s46, 0
      %p197 = por %p195, %p196
      %p198 = scmp.ne.s32.totalorder %s190, %s192
      %p199 = scmp.eq.s32.totalorder %s51, 1
      %p200 = por %p198, %p199
      %p201 = scmp.ne.s32.totalorder %s192, %s193
      %p202 = scmp.eq.s32.totalorder %s51, 0
      %p203 = por %p201, %p202
      %p204 = scmp.ne.s32.totalorder %s192, %s193
      %p205 = scmp.eq.s32.totalorder %s52, 1
      %p206 = por %p204, %p205
      %p208 = scmp.ne.s32.totalorder %s193, %s207
      %p209 = scmp.eq.s32.totalorder %s52, 0
      %p210 = por %p208, %p209
      %s212 = sadd.s32 %s211, 1
      %p215 = scmp.eq.s32.totalorder %s46, 1
      %p216 = scmp.ne.s32.totalorder %s211, %s213
      %p217 = scmp.eq.s32.totalorder %s46, 0
      %p218 = por %p216, %p217
      %p219 = scmp.ne.s32.totalorder %s211, %s213
      %p220 = scmp.eq.s32.totalorder %s51, 1
      %p221 = por %p219, %p220
      %p222 = scmp.ne.s32.totalorder %s213, %s214
      %p223 = scmp.eq.s32.totalorder %s51, 0
      %p224 = por %p222, %p223
      %p225 = scmp.ne.s32.totalorder %s213, %s214
      %p226 = scmp.eq.s32.totalorder %s52, 1
      %p227 = por %p225, %p226
      %p229 = scmp.ne.s32.totalorder %s214, %s228
      %p230 = scmp.eq.s32.totalorder %s52, 0
      %p231 = por %p229, %p230
      %s233 = sadd.s32 %s232, 1
      %p236 = scmp.eq.s32.totalorder %s46, 1
      %p237 = scmp.ne.s32.totalorder %s232, %s234
      %p238 = scmp.eq.s32.totalorder %s46, 0
      %p239 = por %p237, %p238
      %p240 = scmp.ne.s32.totalorder %s232, %s234
      %p241 = scmp.eq.s32.totalorder %s51, 1
      %p242 = por %p240, %p241
      %p243 = scmp.ne.s32.totalorder %s234, %s235
      %p244 = scmp.eq.s32.totalorder %s51, 0
      %p245 = por %p243, %p244
      %p246 = scmp.ne.s32.totalorder %s234, %s235
      %p247 = scmp.eq.s32.totalorder %s52, 1
      %p248 = por %p246, %p247
      %p250 = scmp.ne.s32.totalorder %s235, %s249
      %p251 = scmp.eq.s32.totalorder %s52, 0
      %p252 = por %p250, %p251
      %s254 = sadd.s32 %s253, 1
      %p257 = scmp.eq.s32.totalorder %s46, 1
      %p258 = scmp.ne.s32.totalorder %s253, %s255
      %p259 = scmp.eq.s32.totalorder %s46, 0
      %p260 = por %p258, %p259
      %p261 = scmp.ne.s32.totalorder %s253, %s255
      %p262 = scmp.eq.s32.totalorder %s51, 1
      %p263 = por %p261, %p262
      %p264 = scmp.ne.s32.totalorder %s255, %s256
      %p265 = scmp.eq.s32.totalorder %s51, 0
      %p266 = por %p264, %p265
      %p267 = scmp.ne.s32.totalorder %s255, %s256
      %p268 = scmp.eq.s32.totalorder %s52, 1
      %p269 = por %p267, %p268
      %p271 = scmp.ne.s32.totalorder %s256, %s270
      %p272 = scmp.eq.s32.totalorder %s52, 0
      %p273 = por %p271, %p272
      %s275 = sadd.s32 %s274, 1
      %p278 = scmp.eq.s32.totalorder %s46, 1
      %p279 = scmp.ne.s32.totalorder %s274, %s276
      %p280 = scmp.eq.s32.totalorder %s46, 0
      %p281 = por %p279, %p280
      %p282 = scmp.ne.s32.totalorder %s274, %s276
      %p283 = scmp.eq.s32.totalorder %s51, 1
      %p284 = por %p282, %p283
      %p285 = scmp.ne.s32.totalorder %s276, %s277
      %p286 = scmp.eq.s32.totalorder %s51, 0
      %p287 = por %p285, %p286
      %p288 = scmp.ne.s32.totalorder %s276, %s277
      %p289 = scmp.eq.s32.totalorder %s52, 1
      %p290 = por %p288, %p289
      %p292 = scmp.ne.s32.totalorder %s277, %s291
      %p293 = scmp.eq.s32.totalorder %s52, 0
      %p294 = por %p292, %p293
      %s296 = sadd.s32 %s295, 1
      %p299 = scmp.eq.s32.totalorder %s46, 1
      %p300 = scmp.ne.s32.totalorder %s295, %s297
      %p301 = scmp.eq.s32.totalorder %s46, 0
      %p302 = por %p300, %p301
      %p303 = scmp.ne.s32.totalorder %s295, %s297
      %p304 = scmp.eq.s32.totalorder %s51, 1
      %p305 = por %p303, %p304
      %p306 = scmp.ne.s32.totalorder %s297, %s298
      %p307 = scmp.eq.s32.totalorder %s51, 0
      %p308 = por %p306, %p307
      %p309 = scmp.ne.s32.totalorder %s297, %s298
      %p310 = scmp.eq.s32.totalorder %s52, 1
      %p311 = por %p309, %p310
      %p313 = scmp.ne.s32.totalorder %s298, %s312
      %p314 = scmp.eq.s32.totalorder %s52, 0
      %p315 = por %p313, %p314
      %s317 = sadd.s32 %s316, 1
      %p320 = scmp.eq.s32.totalorder %s46, 1
      %p321 = scmp.ne.s32.totalorder %s316, %s318
      %p322 = scmp.eq.s32.totalorder %s46, 0
      %p323 = por %p321, %p322
      %p324 = scmp.ne.s32.totalorder %s316, %s318
      %p325 = scmp.eq.s32.totalorder %s51, 1
      %p326 = por %p324, %p325
      %p327 = scmp.ne.s32.totalorder %s318, %s319
      %p328 = scmp.eq.s32.totalorder %s51, 0
      %p329 = por %p327, %p328
      %p330 = scmp.ne.s32.totalorder %s318, %s319
      %p331 = scmp.eq.s32.totalorder %s52, 1
      %p332 = por %p330, %p331
      %p334 = scmp.ne.s32.totalorder %s319, %s333
      %p335 = scmp.eq.s32.totalorder %s52, 0
      %p336 = por %p334, %p335
      %s338 = sadd.s32 %s337, 1
      %p341 = scmp.eq.s32.totalorder %s46, 1
      %p342 = scmp.ne.s32.totalorder %s337, %s339
      %p343 = scmp.eq.s32.totalorder %s46, 0
      %p344 = por %p342, %p343
      %p345 = scmp.ne.s32.totalorder %s337, %s339
      %p346 = scmp.eq.s32.totalorder %s51, 1
      %p347 = por %p345, %p346
      %p348 = scmp.ne.s32.totalorder %s339, %s340
      %p349 = scmp.eq.s32.totalorder %s51, 0
      %p350 = por %p348, %p349
      %p351 = scmp.ne.s32.totalorder %s339, %s340
      %p352 = scmp.eq.s32.totalorder %s52, 1
      %p353 = por %p351, %p352
      %p355 = scmp.ne.s32.totalorder %s340, %s354
      %p356 = scmp.eq.s32.totalorder %s52, 0
      %p357 = por %p355, %p356
      %s359 = sadd.s32 %s358, 1
      %p362 = scmp.eq.s32.totalorder %s46, 1
      %p363 = scmp.ne.s32.totalorder %s358, %s360
      %p364 = scmp.eq.s32.totalorder %s46, 0
      %p365 = por %p363, %p364
      %p366 = scmp.ne.s32.totalorder %s358, %s360
      %p367 = scmp.eq.s32.totalorder %s51, 1
      %p368 = por %p366, %p367
      %p369 = scmp.ne.s32.totalorder %s360, %s361
      %p370 = scmp.eq.s32.totalorder %s51, 0
      %p371 = por %p369, %p370
      %p372 = scmp.ne.s32.totalorder %s360, %s361
      %p373 = scmp.eq.s32.totalorder %s52, 1
      %p374 = por %p372, %p373
      %p376 = scmp.ne.s32.totalorder %s361, %s375
      %p377 = scmp.eq.s32.totalorder %s52, 0
      %p378 = por %p376, %p377
      %s380 = sadd.s32 %s379, 1
      %p383 = scmp.eq.s32.totalorder %s46, 1
      %p384 = scmp.ne.s32.totalorder %s379, %s381
      %p385 = scmp.eq.s32.totalorder %s46, 0
      %p386 = por %p384, %p385
      %p387 = scmp.ne.s32.totalorder %s379, %s381
      %p388 = scmp.eq.s32.totalorder %s51, 1
      %p389 = por %p387, %p388
      %p390 = scmp.ne.s32.totalorder %s381, %s382
      %p391 = scmp.eq.s32.totalorder %s51, 0
      %p392 = por %p390, %p391
      %p393 = scmp.ne.s32.totalorder %s381, %s382
      %p394 = scmp.eq.s32.totalorder %s52, 1
      %p395 = por %p393, %p394
      %p397 = scmp.ne.s32.totalorder %s382, %s396
      %p398 = scmp.eq.s32.totalorder %s52, 0
      %p399 = por %p397, %p398
      %s401 = sadd.s32 %s400, 1
      %p404 = scmp.eq.s32.totalorder %s46, 1
      %p405 = scmp.ne.s32.totalorder %s400, %s402
      %p406 = scmp.eq.s32.totalorder %s46, 0
      %p407 = por %p405, %p406
      %p408 = scmp.ne.s32.totalorder %s400, %s402
      %p409 = scmp.eq.s32.totalorder %s51, 1
      %p410 = por %p408, %p409
      %p411 = scmp.ne.s32.totalorder %s402, %s403
      %p412 = scmp.eq.s32.totalorder %s51, 0
      %p413 = por %p411, %p412
      %p414 = scmp.ne.s32.totalorder %s402, %s403
      %p415 = scmp.eq.s32.totalorder %s52, 1
      %p416 = por %p414, %p415
      %p418 = scmp.ne.s32.totalorder %s403, %s417
      %p419 = scmp.eq.s32.totalorder %s52, 0
      %p420 = por %p418, %p419
      %s422 = sadd.s32 %s421, 1
      %p425 = scmp.eq.s32.totalorder %s46, 1
      %p426 = scmp.ne.s32.totalorder %s421, %s423
      %p427 = scmp.eq.s32.totalorder %s46, 0
      %p428 = por %p426, %p427
      %p429 = scmp.ne.s32.totalorder %s421, %s423
      %p430 = scmp.eq.s32.totalorder %s51, 1
      %p431 = por %p429, %p430
      %p432 = scmp.ne.s32.totalorder %s423, %s424
      %p433 = scmp.eq.s32.totalorder %s51, 0
      %p434 = por %p432, %p433
      %p435 = scmp.ne.s32.totalorder %s423, %s424
      %p436 = scmp.eq.s32.totalorder %s52, 1
      %p437 = por %p435, %p436
      %p439 = scmp.ne.s32.totalorder %s424, %s438
      %p440 = scmp.eq.s32.totalorder %s52, 0
      %p441 = por %p439, %p440
      %s443 = sadd.s32 %s442, 1
      %p446 = scmp.eq.s32.totalorder %s46, 1
      %p447 = scmp.ne.s32.totalorder %s442, %s444
      %p448 = scmp.eq.s32.totalorder %s46, 0
      %p449 = por %p447, %p448
      %p450 = scmp.ne.s32.totalorder %s442, %s444
      %p451 = scmp.eq.s32.totalorder %s51, 1
      %p452 = por %p450, %p451
      %p453 = scmp.ne.s32.totalorder %s444, %s445
      %p454 = scmp.eq.s32.totalorder %s51, 0
      %p455 = por %p453, %p454
      %p456 = scmp.ne.s32.totalorder %s444, %s445
      %p457 = scmp.eq.s32.totalorder %s52, 1
      %p458 = por %p456, %p457
      %p460 = scmp.ne.s32.totalorder %s445, %s459
      %p461 = scmp.eq.s32.totalorder %s52, 0
      %p462 = por %p460, %p461
      %s464 = sadd.s32 %s463, 1
      %p467 = scmp.eq.s32.totalorder %s46, 1
      %p468 = scmp.ne.s32.totalorder %s463, %s465
      %p469 = scmp.eq.s32.totalorder %s46, 0
      %p470 = por %p468, %p469
      %p471 = scmp.ne.s32.totalorder %s463, %s465
      %p472 = scmp.eq.s32.totalorder %s51, 1
      %p473 = por %p471, %p472
      %p474 = scmp.ne.s32.totalorder %s465, %s466
      %p475 = scmp.eq.s32.totalorder %s51, 0
      %p476 = por %p474, %p475
      %p477 = scmp.ne.s32.totalorder %s465, %s466
      %p478 = scmp.eq.s32.totalorder %s52, 1
      %p479 = por %p477, %p478
      %p481 = scmp.ne.s32.totalorder %s466, %s480
      %p482 = scmp.eq.s32.totalorder %s52, 0
      %p483 = por %p481, %p482
      %s485 = sadd.s32 %s484, 1
      %p488 = scmp.eq.s32.totalorder %s46, 1
      %p489 = scmp.ne.s32.totalorder %s484, %s486
      %p490 = scmp.eq.s32.totalorder %s46, 0
      %p491 = por %p489, %p490
      %p492 = scmp.ne.s32.totalorder %s484, %s486
      %p493 = scmp.eq.s32.totalorder %s51, 1
      %p494 = por %p492, %p493
      %p495 = scmp.ne.s32.totalorder %s486, %s487
      %p496 = scmp.eq.s32.totalorder %s51, 0
      %p497 = por %p495, %p496
      %p498 = scmp.ne.s32.totalorder %s486, %s487
      %p499 = scmp.eq.s32.totalorder %s52, 1
      %p500 = por %p498, %p499
      %p502 = scmp.ne.s32.totalorder %s487, %s501
      %p503 = scmp.eq.s32.totalorder %s52, 0
      %p504 = por %p502, %p503
      %s506 = sadd.s32 %s505, 1
      %p509 = scmp.eq.s32.totalorder %s46, 1
      %p510 = scmp.ne.s32.totalorder %s505, %s507
      %p511 = scmp.eq.s32.totalorder %s46, 0
      %p512 = por %p510, %p511
      %p513 = scmp.ne.s32.totalorder %s505, %s507
      %p514 = scmp.eq.s32.totalorder %s51, 1
      %p515 = por %p513, %p514
      %p516 = scmp.ne.s32.totalorder %s507, %s508
      %p517 = scmp.eq.s32.totalorder %s51, 0
      %p518 = por %p516, %p517
      %p519 = scmp.ne.s32.totalorder %s507, %s508
      %p520 = scmp.eq.s32.totalorder %s52, 1
      %p521 = por %p519, %p520
      %p523 = scmp.ne.s32.totalorder %s508, %s522
      %p524 = scmp.eq.s32.totalorder %s52, 0
      %p525 = por %p523, %p524
      %s527 = sadd.s32 %s526, 1
      %p530 = scmp.eq.s32.totalorder %s46, 1
      %p531 = scmp.ne.s32.totalorder %s526, %s528
      %p532 = scmp.eq.s32.totalorder %s46, 0
      %p533 = por %p531, %p532
      %p534 = scmp.ne.s32.totalorder %s526, %s528
      %p535 = scmp.eq.s32.totalorder %s51, 1
      %p536 = por %p534, %p535
      %p537 = scmp.ne.s32.totalorder %s528, %s529
      %p538 = scmp.eq.s32.totalorder %s51, 0
      %p539 = por %p537, %p538
      %p540 = scmp.ne.s32.totalorder %s528, %s529
      %p541 = scmp.eq.s32.totalorder %s52, 1
      %p542 = por %p540, %p541
      %p544 = scmp.ne.s32.totalorder %s529, %s543
      %p545 = scmp.eq.s32.totalorder %s52, 0
      %p546 = por %p544, %p545
      %s548 = sadd.s32 %s547, 1
      %p551 = scmp.eq.s32.totalorder %s46, 1
      %p552 = scmp.ne.s32.totalorder %s547, %s549
      %p553 = scmp.eq.s32.totalorder %s46, 0
      %p554 = por %p552, %p553
      %p555 = scmp.ne.s32.totalorder %s547, %s549
      %p556 = scmp.eq.s32.totalorder %s51, 1
      %p557 = por %p555, %p556
      %p558 = scmp.ne.s32.totalorder %s549, %s550
      %p559 = scmp.eq.s32.totalorder %s51, 0
      %p560 = por %p558, %p559
      %p561 = scmp.ne.s32.totalorder %s549, %s550
      %p562 = scmp.eq.s32.totalorder %s52, 1
      %p563 = por %p561, %p562
      %p565 = scmp.ne.s32.totalorder %s550, %s564
      %p566 = scmp.eq.s32.totalorder %s52, 0
      %p567 = por %p565, %p566
      %s569 = sadd.s32 %s568, 1
      %p572 = scmp.eq.s32.totalorder %s46, 1
      %p573 = scmp.ne.s32.totalorder %s568, %s570
      %p574 = scmp.eq.s32.totalorder %s46, 0
      %p575 = por %p573, %p574
      %p576 = scmp.ne.s32.totalorder %s568, %s570
      %p577 = scmp.eq.s32.totalorder %s51, 1
      %p578 = por %p576, %p577
      %p579 = scmp.ne.s32.totalorder %s570, %s571
      %p580 = scmp.eq.s32.totalorder %s51, 0
      %p581 = por %p579, %p580
      %p582 = scmp.ne.s32.totalorder %s570, %s571
      %p583 = scmp.eq.s32.totalorder %s52, 1
      %p584 = por %p582, %p583
      %p586 = scmp.ne.s32.totalorder %s571, %s585
      %p587 = scmp.eq.s32.totalorder %s52, 0
      %p588 = por %p586, %p587
      %s590 = sadd.s32 %s589, 1
      %p593 = scmp.eq.s32.totalorder %s46, 1
      %p594 = scmp.ne.s32.totalorder %s589, %s591
      %p595 = scmp.eq.s32.totalorder %s46, 0
      %p596 = por %p594, %p595
      %p597 = scmp.ne.s32.totalorder %s589, %s591
      %p598 = scmp.eq.s32.totalorder %s51, 1
      %p599 = por %p597, %p598
      %p600 = scmp.ne.s32.totalorder %s591, %s592
      %p601 = scmp.eq.s32.totalorder %s51, 0
      %p602 = por %p600, %p601
      %p603 = scmp.ne.s32.totalorder %s591, %s592
      %p604 = scmp.eq.s32.totalorder %s52, 1
      %p605 = por %p603, %p604
      %p607 = scmp.ne.s32.totalorder %s592, %s606
      %p608 = scmp.eq.s32.totalorder %s52, 0
      %p609 = por %p607, %p608
      %s611 = sadd.s32 %s610, 1
      %p614 = scmp.eq.s32.totalorder %s46, 1
      %p615 = scmp.ne.s32.totalorder %s610, %s612
      %p616 = scmp.eq.s32.totalorder %s46, 0
      %p617 = por %p615, %p616
      %p618 = scmp.ne.s32.totalorder %s610, %s612
      %p619 = scmp.eq.s32.totalorder %s51, 1
      %p620 = por %p618, %p619
      %p621 = scmp.ne.s32.totalorder %s612, %s613
      %p622 = scmp.eq.s32.totalorder %s51, 0
      %p623 = por %p621, %p622
      %p624 = scmp.ne.s32.totalorder %s612, %s613
      %p625 = scmp.eq.s32.totalorder %s52, 1
      %p626 = por %p624, %p625
      %p628 = scmp.ne.s32.totalorder %s613, %s627
      %p629 = scmp.eq.s32.totalorder %s52, 0
      %p630 = por %p628, %p629
      %s631 = ssub.s32 %s46, %s53
      %p632 = scmp.eq.s32.totalorder %s631, 0
      %s634 = sadd.s32 %s633, 1
      %s635 = scalar_select %p632, %s633, %s634
      %p638 = pneg %p632
      %p639 = scmp.eq.s32.totalorder %s46, 1
      %p640 = por %p638, %p639
      %p641 = scmp.ne.s32.totalorder %s633, %s636
      %p642 = scmp.eq.s32.totalorder %s46, 0
      %p643 = por %p641, %p642
      %p644 = scmp.ne.s32.totalorder %s633, %s636
      %p645 = scmp.eq.s32.totalorder %s51, 1
      %p646 = por %p644, %p645
      %p647 = scmp.ne.s32.totalorder %s636, %s637
      %p648 = scmp.eq.s32.totalorder %s51, 0
      %p649 = por %p647, %p648
      %p650 = scmp.ne.s32.totalorder %s636, %s637
      %p651 = scmp.eq.s32.totalorder %s52, 1
      %p652 = por %p650, %p651
      %p654 = scmp.ne.s32.totalorder %s637, %s653
      %p655 = scmp.eq.s32.totalorder %s52, 0
      %p656 = por %p654, %p655
      %p657 = scmp.le.s32.totalorder 1, %s46
      %p658 = scmp.lt.s32.totalorder %s46, 3
      %p659 = pnand %p657, %p658
      %p660 = pneg %p659
      // Predicated region
      $region9: #{tpu_custom_call.1} parent=5 // pred_check
        _
      $region10: #{tpu_custom_call.1} parent=5 // pred_check_branch
        %662 = sbr.rel (%p659) target = $region12
      $region11: #{tpu_custom_call.1} parent=5 // pred_region
        %s663 = ssub.s32 %s46, 1
        // Predicated region
        $region13: #{tpu_custom_call.1} parent=11 // pred_check
          %p664 = pneg %p119
        $region14: #{tpu_custom_call.1} parent=11 // pred_check_branch
          %666 = sbr.rel (%p664) target = $region16
        $region15: #{tpu_custom_call.1} parent=11 // pred_region
          _
        $region16: #{tpu_custom_call.1} parent=11 // pred_fallthru
          _
        // Predicated region
        $region17: #{tpu_custom_call.1} parent=11 // pred_check
          %p667 = pneg %p140
        $region18: #{tpu_custom_call.1} parent=11 // pred_check_branch
          %669 = sbr.rel (%p667) target = $region20
        $region19: #{tpu_custom_call.1} parent=11 // pred_region
          _
        $region20: #{tpu_custom_call.1} parent=11 // pred_fallthru
          _
        // Predicated region
        $region21: #{tpu_custom_call.1} parent=11 // pred_check
          %p670 = pneg %p161
        $region22: #{tpu_custom_call.1} parent=11 // pred_check_branch
          %672 = sbr.rel (%p670) target = $region24
        $region23: #{tpu_custom_call.1} parent=11 // pred_region
          %674 = vsyncadd [#allocation6], 0
          %s675 = sshll.u32 %s4, 4
          %s676 = int_to_ptr.hbm [resolvable:$true] %s675
          %s677 = sshll.u32 [#allocation5], 4
          %s678 = int_to_ptr.vmem [resolvable:$true] %s677
          %683 = dma.hbm_to_vmem [thread:$0]  %s676, 1024, %s678, [#allocation6], 512, 512, 32
        $region24: #{tpu_custom_call.1} parent=11 // pred_fallthru
          _
        // Predicated region
        $region25: #{tpu_custom_call.1} parent=11 // pred_check
          %p684 = pneg %p182
        $region26: #{tpu_custom_call.1} parent=11 // pred_check_branch
          %686 = sbr.rel (%p684) target = $region28
        $region27: #{tpu_custom_call.1} parent=11 // pred_region
          %688 = vsyncadd [#allocation6], 0
          %s689 = sshll.u32 %s5, 4
          %s690 = int_to_ptr.hbm [resolvable:$true] %s689
          %s691 = sshll.u32 [#allocation7], 4
          %s692 = int_to_ptr.vmem [resolvable:$true] %s691
          %697 = dma.hbm_to_vmem [thread:$0]  %s690, 512, %s692, [#allocation6], 256, 256, 16
        $region28: #{tpu_custom_call.1} parent=11 // pred_fallthru
          _
        // Predicated region
        $region29: #{tpu_custom_call.1} parent=11 // pred_check
          %p698 = pneg %p203
        $region30: #{tpu_custom_call.1} parent=11 // pred_check_branch
          %700 = sbr.rel (%p698) target = $region32
        $region31: #{tpu_custom_call.1} parent=11 // pred_region
          %702 = vsyncadd [#allocation9], 0
          %s703 = sshll.u32 %s6, 4
          %s704 = int_to_ptr.hbm [resolvable:$true] %s703
          %s705 = sshll.u32 [#allocation8], 4
          %s706 = int_to_ptr.vmem [resolvable:$true] %s705
          %711 = dma.hbm_to_vmem [thread:$0]  %s704, 256, %s706, [#allocation9], 128, 128, 8
        $region32: #{tpu_custom_call.1} parent=11 // pred_fallthru
          _
        // Predicated region
        $region33: #{tpu_custom_call.1} parent=11 // pred_check
          %p712 = pneg %p224
        $region34: #{tpu_custom_call.1} parent=11 // pred_check_branch
          %714 = sbr.rel (%p712) target = $region36
        $region35: #{tpu_custom_call.1} parent=11 // pred_region
          %716 = vsyncadd [#allocation9], 0
          %s717 = sshll.u32 %s7, 4
          %s718 = int_to_ptr.hbm [resolvable:$true] %s717
          %s719 = sshll.u32 [#allocation10], 4
          %s720 = int_to_ptr.vmem [resolvable:$true] %s719
          %725 = dma.hbm_to_vmem [thread:$0]  %s718, 256, %s720, [#allocation9], 128, 128, 8
        $region36: #{tpu_custom_call.1} parent=11 // pred_fallthru
          _
        // Predicated region
        $region37: #{tpu_custom_call.1} parent=11 // pred_check
          %p726 = pneg %p245
        $region38: #{tpu_custom_call.1} parent=11 // pred_check_branch
          %728 = sbr.rel (%p726) target = $region40
        $region39: #{tpu_custom_call.1} parent=11 // pred_region
          %730 = vsyncadd [#allocation12], 0
          %s731 = sshll.u32 %s8, 4
          %s732 = int_to_ptr.hbm [resolvable:$true] %s731
          %s733 = sshll.u32 [#allocation11], 4
          %s734 = int_to_ptr.vmem [resolvable:$true] %s733
          %739 = dma.hbm_to_vmem [thread:$0]  %s732, 1152, %s734, [#allocation12], 384, 384, 24
        $region40: #{tpu_custom_call.1} parent=11 // pred_fallthru
          _
        // Predicated region
        $region41: #{tpu_custom_call.1} parent=11 // pred_check
          %p740 = pneg %p266
        $region42: #{tpu_custom_call.1} parent=11 // pred_check_branch
          %742 = sbr.rel (%p740) target = $region44
        $region43: #{tpu_custom_call.1} parent=11 // pred_region
          _
        $region44: #{tpu_custom_call.1} parent=11 // pred_fallthru
          _
        // Predicated region
        $region45: #{tpu_custom_call.1} parent=11 // pred_check
          %p743 = pneg %p287
        $region46: #{tpu_custom_call.1} parent=11 // pred_check_branch
          %745 = sbr.rel (%p743) target = $region48
        $region47: #{tpu_custom_call.1} parent=11 // pred_region
          %747 = vsyncadd [#allocation12], 0
          %s749 = sshll.u32 %s10, 4
          %s750 = int_to_ptr.hbm [resolvable:$true] %s749
          %s751 = sshll.u32 [#allocation13], 4
          %s752 = int_to_ptr.vmem [resolvable:$true] %s751
          %754 = dma.hbm_to_vmem [thread:$0]  %s750, 16, %s752, [#allocation12]
        $region48: #{tpu_custom_call.1} parent=11 // pred_fallthru
          _
        // Predicated region
        $region49: #{tpu_custom_call.1} parent=11 // pred_check
          %p755 = pneg %p308
        $region50: #{tpu_custom_call.1} parent=11 // pred_check_branch
          %757 = sbr.rel (%p755) target = $region52
        $region51: #{tpu_custom_call.1} parent=11 // pred_region
          %759 = vsyncadd [#allocation15], 0
          %s760 = sshll.u32 %s11, 4
          %s761 = int_to_ptr.hbm [resolvable:$true] %s760
          %s762 = sshll.u32 [#allocation14], 4
          %s763 = int_to_ptr.vmem [resolvable:$true] %s762
          %768 = dma.hbm_to_vmem [thread:$0]  %s761, 6144, %s763, [#allocation15], 512, 512, 32
        $region52: #{tpu_custom_call.1} parent=11 // pred_fallthru
          _
        // Predicated region
        $region53: #{tpu_custom_call.1} parent=11 // pred_check
          %p769 = pneg %p329
        $region54: #{tpu_custom_call.1} parent=11 // pred_check_branch
          %771 = sbr.rel (%p769) target = $region56
        $region55: #{tpu_custom_call.1} parent=11 // pred_region
          %773 = vsyncadd [#allocation15], 0
          %s774 = sshll.u32 %s12, 4
          %s775 = int_to_ptr.hbm [resolvable:$true] %s774
          %s776 = sshll.u32 [#allocation16], 4
          %s777 = int_to_ptr.vmem [resolvable:$true] %s776
          %782 = dma.hbm_to_vmem [thread:$0]  %s775, 512, %s777, [#allocation15], 128, 128, 8
        $region56: #{tpu_custom_call.1} parent=11 // pred_fallthru
          _
        // Predicated region
        $region57: #{tpu_custom_call.1} parent=11 // pred_check
          %p783 = pneg %p350
        $region58: #{tpu_custom_call.1} parent=11 // pred_check_branch
          %785 = sbr.rel (%p783) target = $region60
        $region59: #{tpu_custom_call.1} parent=11 // pred_region
          _
        $region60: #{tpu_custom_call.1} parent=11 // pred_fallthru
          _
        // Predicated region
        $region61: #{tpu_custom_call.1} parent=11 // pred_check
          %p786 = pneg %p371
        $region62: #{tpu_custom_call.1} parent=11 // pred_check_branch
          %788 = sbr.rel (%p786) target = $region64
        $region63: #{tpu_custom_call.1} parent=11 // pred_region
          %790 = vsyncadd [#allocation18], 0
          %s792 = sshll.u32 %s14, 4
          %s793 = int_to_ptr.hbm [resolvable:$true] %s792
          %s794 = sshll.u32 [#allocation17], 4
          %s795 = int_to_ptr.vmem [resolvable:$true] %s794
          %797 = dma.hbm_to_vmem [thread:$0]  %s793, 16, %s795, [#allocation18]
        $region64: #{tpu_custom_call.1} parent=11 // pred_fallthru
          _
        // Predicated region
        $region65: #{tpu_custom_call.1} parent=11 // pred_check
          %p798 = pneg %p392
        $region66: #{tpu_custom_call.1} parent=11 // pred_check_branch
          %800 = sbr.rel (%p798) target = $region68
        $region67: #{tpu_custom_call.1} parent=11 // pred_region
          %802 = vsyncadd [#allocation18], 0
          %s804 = sshll.u32 %s15, 4
          %s805 = int_to_ptr.hbm [resolvable:$true] %s804
          %s806 = sshll.u32 [#allocation19], 4
          %s807 = int_to_ptr.vmem [resolvable:$true] %s806
          %809 = dma.hbm_to_vmem [thread:$0]  %s805, 64, %s807, [#allocation18]
        $region68: #{tpu_custom_call.1} parent=11 // pred_fallthru
          _
        // Predicated region
        $region69: #{tpu_custom_call.1} parent=11 // pred_check
          %p810 = pneg %p413
        $region70: #{tpu_custom_call.1} parent=11 // pred_check_branch
          %812 = sbr.rel (%p810) target = $region72
        $region71: #{tpu_custom_call.1} parent=11 // pred_region
          _
        $region72: #{tpu_custom_call.1} parent=11 // pred_fallthru
          _
        // Predicated region
        $region73: #{tpu_custom_call.1} parent=11 // pred_check
          %p813 = pneg %p434
        $region74: #{tpu_custom_call.1} parent=11 // pred_check_branch
          %815 = sbr.rel (%p813) target = $region76
        $region75: #{tpu_custom_call.1} parent=11 // pred_region
          %817 = vsyncadd [#allocation21], 0
          %s819 = sshll.u32 %s17, 4
          %s820 = int_to_ptr.hbm [resolvable:$true] %s819
          %s821 = sshll.u32 [#allocation20], 4
          %s822 = int_to_ptr.vmem [resolvable:$true] %s821
          %824 = dma.hbm_to_vmem [thread:$0]  %s820, 64, %s822, [#allocation21]
        $region76: #{tpu_custom_call.1} parent=11 // pred_fallthru
          _
        // Predicated region
        $region77: #{tpu_custom_call.1} parent=11 // pred_check
          %p825 = pneg %p455
        $region78: #{tpu_custom_call.1} parent=11 // pred_check_branch
          %827 = sbr.rel (%p825) target = $region80
        $region79: #{tpu_custom_call.1} parent=11 // pred_region
          _
        $region80: #{tpu_custom_call.1} parent=11 // pred_fallthru
          _
        // Predicated region
        $region81: #{tpu_custom_call.1} parent=11 // pred_check
          %p828 = pneg %p476
        $region82: #{tpu_custom_call.1} parent=11 // pred_check_branch
          %830 = sbr.rel (%p828) target = $region84
        $region83: #{tpu_custom_call.1} parent=11 // pred_region
          %832 = vsyncadd [#allocation21], 0
          %s833 = sshll.u32 %s19, 4
          %s834 = int_to_ptr.hbm [resolvable:$true] %s833
          %s835 = sshll.u32 [#allocation22], 4
          %s836 = int_to_ptr.vmem [resolvable:$true] %s835
          %841 = dma.hbm_to_vmem [thread:$0]  %s834, 3072, %s836, [#allocation21], 256, 256, 16
        $region84: #{tpu_custom_call.1} parent=11 // pred_fallthru
          _
        // Predicated region
        $region85: #{tpu_custom_call.1} parent=11 // pred_check
          %p842 = pneg %p497
        $region86: #{tpu_custom_call.1} parent=11 // pred_check_branch
          %844 = sbr.rel (%p842) target = $region88
        $region87: #{tpu_custom_call.1} parent=11 // pred_region
          %846 = vsyncadd [#allocation24], 0
          %s847 = sshll.u32 %s20, 4
          %s848 = int_to_ptr.hbm [resolvable:$true] %s847
          %s849 = sshll.u32 [#allocation23], 4
          %s850 = int_to_ptr.vmem [resolvable:$true] %s849
          %855 = dma.hbm_to_vmem [thread:$0]  %s848, 512, %s850, [#allocation24], 128, 128, 8
        $region88: #{tpu_custom_call.1} parent=11 // pred_fallthru
          _
        // Predicated region
        $region89: #{tpu_custom_call.1} parent=11 // pred_check
          %p856 = pneg %p518
        $region90: #{tpu_custom_call.1} parent=11 // pred_check_branch
          %858 = sbr.rel (%p856) target = $region92
        $region91: #{tpu_custom_call.1} parent=11 // pred_region
          %860 = vsyncadd [#allocation24], 0
          %s861 = sshll.u32 %s21, 4
          %s862 = int_to_ptr.hbm [resolvable:$true] %s861
          %s863 = sshll.u32 [#allocation25], 4
          %s864 = int_to_ptr.vmem [resolvable:$true] %s863
          %869 = dma.hbm_to_vmem [thread:$0]  %s862, 1536, %s864, [#allocation24], 128, 128, 8
        $region92: #{tpu_custom_call.1} parent=11 // pred_fallthru
          _
        // Predicated region
        $region93: #{tpu_custom_call.1} parent=11 // pred_check
          %p870 = pneg %p539
        $region94: #{tpu_custom_call.1} parent=11 // pred_check_branch
          %872 = sbr.rel (%p870) target = $region96
        $region95: #{tpu_custom_call.1} parent=11 // pred_region
          _
        $region96: #{tpu_custom_call.1} parent=11 // pred_fallthru
          _
        // Predicated region
        $region97: #{tpu_custom_call.1} parent=11 // pred_check
          %p873 = pneg %p560
        $region98: #{tpu_custom_call.1} parent=11 // pred_check_branch
          %875 = sbr.rel (%p873) target = $region100
        $region99: #{tpu_custom_call.1} parent=11 // pred_region
          _
        $region100: #{tpu_custom_call.1} parent=11 // pred_fallthru
          _
        // Predicated region
        $region101: #{tpu_custom_call.1} parent=11 // pred_check
          %p876 = pneg %p581
        $region102: #{tpu_custom_call.1} parent=11 // pred_check_branch
          %878 = sbr.rel (%p876) target = $region104
        $region103: #{tpu_custom_call.1} parent=11 // pred_region
          _
        $region104: #{tpu_custom_call.1} parent=11 // pred_fallthru
          _
        // Predicated region
        $region105: #{tpu_custom_call.1} parent=11 // pred_check
          %p879 = pneg %p602
        $region106: #{tpu_custom_call.1} parent=11 // pred_check_branch
          %881 = sbr.rel (%p879) target = $region108
        $region107: #{tpu_custom_call.1} parent=11 // pred_region
          _
        $region108: #{tpu_custom_call.1} parent=11 // pred_fallthru
          _
        // Predicated region
        $region109: #{tpu_custom_call.1} parent=11 // pred_check
          %p882 = pneg %p623
        $region110: #{tpu_custom_call.1} parent=11 // pred_check_branch
          %884 = sbr.rel (%p882) target = $region112
        $region111: #{tpu_custom_call.1} parent=11 // pred_region
          _
        $region112: #{tpu_custom_call.1} parent=11 // pred_fallthru
          _
      $region12: #{tpu_custom_call.1} parent=5 // pred_fallthru
        _
      %p885 = scmp.lt.s32.totalorder %s46, 2
      // Predicated region
      $region113: #{tpu_custom_call.1} parent=5 // pred_check
        %p886 = pneg %p885
      $region114: #{tpu_custom_call.1} parent=5 // pred_check_branch
        %888 = sbr.rel (%p886) target = $region116
      $region115: #{tpu_custom_call.1} parent=5 // pred_region
        // Predicated region
        $region117: #{tpu_custom_call.1} parent=115 // pred_check
          %p889 = pneg %p66
        $region118: #{tpu_custom_call.1} parent=115 // pred_check_branch
          %891 = sbr.rel (%p889) target = $region120
        $region119: #{tpu_custom_call.1} parent=115 // pred_region
          %p892 = scmp.lt.s32.totalorder %s46, 1
          %s893 = scalar_select %p892, %s46, 1
          %s894 = smul.addr %s893, 2
          %s895 = smul.addr %s894, 8
          %s896 = scalar_lea.vmem %s0, %s895
        $region120: #{tpu_custom_call.1} parent=115 // pred_fallthru
          _
        // Predicated region
        $region121: #{tpu_custom_call.1} parent=115 // pred_check
          %p897 = pneg %p92
        $region122: #{tpu_custom_call.1} parent=115 // pred_check_branch
          %899 = sbr.rel (%p897) target = $region124
        $region123: #{tpu_custom_call.1} parent=115 // pred_region
          %s900 = sand.u32 %s82, 1
          %s901 = scalar_lea.sflag [#allocation3], %s900
          %s902 = sand.u32 %s82, 1
          %s903 = smul.addr %s902, 16
          %s904 = scalar_lea.vmem [#allocation2], %s903
          %906 = vsyncadd %s901, 0
          %s907 = smul.addr %s46, 2
          %s908 = smul.addr %s907, 8
          %s909 = scalar_lea.hbm %s1, %s908
          %s910 = sshll.u32 %s909, 4
          %s911 = int_to_ptr.hbm [resolvable:$true] %s910
          %s912 = sshll.u32 %s904, 4
          %s913 = int_to_ptr.vmem [resolvable:$true] %s912
          %918 = dma.hbm_to_vmem [thread:$0]  %s911, 256, %s913, %s901, 128, 128, 8
        $region124: #{tpu_custom_call.1} parent=115 // pred_fallthru
          _
      $region116: #{tpu_custom_call.1} parent=5 // pred_fallthru
        _
      %p919 = scmp.le.s32.totalorder 1, %s46
      %p920 = scmp.lt.s32.totalorder %s46, 3
      %p921 = pnand %p919, %p920
      %p922 = pneg %p921
      // Predicated region
      $region125: #{tpu_custom_call.1} parent=5 // pred_check
        _
      $region126: #{tpu_custom_call.1} parent=5 // pred_check_branch
        %924 = sbr.rel (%p921) target = $region128
      $region127: #{tpu_custom_call.1} parent=5 // pred_region
        %s925 = ssub.s32 %s46, 1
        %s926 = sand.u32 %s85, 1
        %s927 = scalar_lea.sflag [#allocation3], %s926
        %s928 = sand.u32 %s85, 1
        %s929 = smul.addr %s928, 16
        %s930 = scalar_lea.vmem [#allocation2], %s929
        // Predicated region
        $region129: #{tpu_custom_call.1} parent=127 // pred_check
          %p931 = pneg %p98
        $region130: #{tpu_custom_call.1} parent=127 // pred_check_branch
          %933 = sbr.rel (%p931) target = $region132
        $region131: #{tpu_custom_call.1} parent=127 // pred_region
          %935 = dma.done %s927, 256
        $region132: #{tpu_custom_call.1} parent=127 // pred_fallthru
          _
        // Predicated region
        $region133: #{tpu_custom_call.1} parent=127 // pred_check
          %p936 = pneg %p161
        $region134: #{tpu_custom_call.1} parent=127 // pred_check_branch
          %938 = sbr.rel (%p936) target = $region136
        $region135: #{tpu_custom_call.1} parent=127 // pred_region
          %940 = dma.done [#allocation6], 1024
        $region136: #{tpu_custom_call.1} parent=127 // pred_fallthru
          _
        // Predicated region
        $region137: #{tpu_custom_call.1} parent=127 // pred_check
          %p941 = pneg %p182
        $region138: #{tpu_custom_call.1} parent=127 // pred_check_branch
          %943 = sbr.rel (%p941) target = $region140
        $region139: #{tpu_custom_call.1} parent=127 // pred_region
          %945 = dma.done [#allocation6], 512
        $region140: #{tpu_custom_call.1} parent=127 // pred_fallthru
          _
        // Predicated region
        $region141: #{tpu_custom_call.1} parent=127 // pred_check
          %p946 = pneg %p203
        $region142: #{tpu_custom_call.1} parent=127 // pred_check_branch
          %948 = sbr.rel (%p946) target = $region144
        $region143: #{tpu_custom_call.1} parent=127 // pred_region
          %950 = dma.done [#allocation9], 256
        $region144: #{tpu_custom_call.1} parent=127 // pred_fallthru
          _
        // Predicated region
        $region145: #{tpu_custom_call.1} parent=127 // pred_check
          %p951 = pneg %p224
        $region146: #{tpu_custom_call.1} parent=127 // pred_check_branch
          %953 = sbr.rel (%p951) target = $region148
        $region147: #{tpu_custom_call.1} parent=127 // pred_region
          %955 = dma.done [#allocation9], 256
        $region148: #{tpu_custom_call.1} parent=127 // pred_fallthru
          _
        // Predicated region
        $region149: #{tpu_custom_call.1} parent=127 // pred_check
          %p956 = pneg %p245
        $region150: #{tpu_custom_call.1} parent=127 // pred_check_branch
          %958 = sbr.rel (%p956) target = $region152
        $region151: #{tpu_custom_call.1} parent=127 // pred_region
          %960 = dma.done [#allocation12], 1152
        $region152: #{tpu_custom_call.1} parent=127 // pred_fallthru
          _
        // Predicated region
        $region153: #{tpu_custom_call.1} parent=127 // pred_check
          %p961 = pneg %p287
        $region154: #{tpu_custom_call.1} parent=127 // pred_check_branch
          %963 = sbr.rel (%p961) target = $region156
        $region155: #{tpu_custom_call.1} parent=127 // pred_region
          %965 = dma.done [#allocation12], 16
        $region156: #{tpu_custom_call.1} parent=127 // pred_fallthru
          _
        // Predicated region
        $region157: #{tpu_custom_call.1} parent=127 // pred_check
          %p966 = pneg %p308
        $region158: #{tpu_custom_call.1} parent=127 // pred_check_branch
          %968 = sbr.rel (%p966) target = $region160
        $region159: #{tpu_custom_call.1} parent=127 // pred_region
          %970 = dma.done [#allocation15], 6144
        $region160: #{tpu_custom_call.1} parent=127 // pred_fallthru
          _
        // Predicated region
        $region161: #{tpu_custom_call.1} parent=127 // pred_check
          %p971 = pneg %p329
        $region162: #{tpu_custom_call.1} parent=127 // pred_check_branch
          %973 = sbr.rel (%p971) target = $region164
        $region163: #{tpu_custom_call.1} parent=127 // pred_region
          %975 = dma.done [#allocation15], 512
        $region164: #{tpu_custom_call.1} parent=127 // pred_fallthru
          _
        // Predicated region
        $region165: #{tpu_custom_call.1} parent=127 // pred_check
          %p976 = pneg %p371
        $region166: #{tpu_custom_call.1} parent=127 // pred_check_branch
          %978 = sbr.rel (%p976) target = $region168
        $region167: #{tpu_custom_call.1} parent=127 // pred_region
          %980 = dma.done [#allocation18], 16
        $region168: #{tpu_custom_call.1} parent=127 // pred_fallthru
          _
        // Predicated region
        $region169: #{tpu_custom_call.1} parent=127 // pred_check
          %p981 = pneg %p392
        $region170: #{tpu_custom_call.1} parent=127 // pred_check_branch
          %983 = sbr.rel (%p981) target = $region172
        $region171: #{tpu_custom_call.1} parent=127 // pred_region
          %985 = dma.done [#allocation18], 64
        $region172: #{tpu_custom_call.1} parent=127 // pred_fallthru
          _
        // Predicated region
        $region173: #{tpu_custom_call.1} parent=127 // pred_check
          %p986 = pneg %p434
        $region174: #{tpu_custom_call.1} parent=127 // pred_check_branch
          %988 = sbr.rel (%p986) target = $region176
        $region175: #{tpu_custom_call.1} parent=127 // pred_region
          %990 = dma.done [#allocation21], 64
        $region176: #{tpu_custom_call.1} parent=127 // pred_fallthru
          _
        // Predicated region
        $region177: #{tpu_custom_call.1} parent=127 // pred_check
          %p991 = pneg %p476
        $region178: #{tpu_custom_call.1} parent=127 // pred_check_branch
          %993 = sbr.rel (%p991) target = $region180
        $region179: #{tpu_custom_call.1} parent=127 // pred_region
          %995 = dma.done [#allocation21], 3072
        $region180: #{tpu_custom_call.1} parent=127 // pred_fallthru
          _
        // Predicated region
        $region181: #{tpu_custom_call.1} parent=127 // pred_check
          %p996 = pneg %p497
        $region182: #{tpu_custom_call.1} parent=127 // pred_check_branch
          %998 = sbr.rel (%p996) target = $region184
        $region183: #{tpu_custom_call.1} parent=127 // pred_region
          %1000 = dma.done [#allocation24], 512
        $region184: #{tpu_custom_call.1} parent=127 // pred_fallthru
          _
        // Predicated region
        $region185: #{tpu_custom_call.1} parent=127 // pred_check
          %p1001 = pneg %p518
        $region186: #{tpu_custom_call.1} parent=127 // pred_check_branch
          %1003 = sbr.rel (%p1001) target = $region188
        $region187: #{tpu_custom_call.1} parent=127 // pred_region
          %1005 = dma.done [#allocation24], 1536
        $region188: #{tpu_custom_call.1} parent=127 // pred_fallthru
          _
        %p1006 = scmp.lt.s32.totalorder %s51, 1
        %s1007 = scalar_select %p1006, %s51, 1
        %s1008 = smul.addr %s1007, 2
        %s1009 = smul.addr %s1008, 8
        %s1010 = scalar_lea.vmem %s0, %s1009
        %p1011 = pneg %p72
        %p1012 = pneg %p69
        %s1013 = sand.u32 %s85, 1
        %s1014 = scalar_lea.sflag [#allocation3], %s1013
        %s1015 = sand.u32 %s85, 1
        %s1016 = smul.addr %s1015, 16
        %s1017 = scalar_lea.vmem [#allocation2], %s1016
        %p1018 = pneg %p98
        %p1019 = pneg %p95
        %p1020 = pneg %p119
        %p1021 = pneg %p116
        %p1022 = pneg %p140
        %p1023 = pneg %p137
        %p1024 = pneg %p161
        %p1025 = pneg %p158
        %p1026 = pneg %p182
        %p1027 = pneg %p179
        %p1028 = pneg %p203
        %p1029 = pneg %p200
        %p1030 = pneg %p224
        %p1031 = pneg %p221
        %p1032 = pneg %p245
        %p1033 = pneg %p242
        %p1034 = pneg %p266
        %p1035 = pneg %p263
        %p1036 = pneg %p287
        %p1037 = pneg %p284
        %p1038 = pneg %p308
        %p1039 = pneg %p305
        %p1040 = pneg %p329
        %p1041 = pneg %p326
        %p1042 = pneg %p350
        %p1043 = pneg %p347
        %p1044 = pneg %p371
        %p1045 = pneg %p368
        %p1046 = pneg %p392
        %p1047 = pneg %p389
        %p1048 = pneg %p413
        %p1049 = pneg %p410
        %p1050 = pneg %p434
        %p1051 = pneg %p431
        %p1052 = pneg %p455
        %p1053 = pneg %p452
        %p1054 = pneg %p476
        %p1055 = pneg %p473
        %p1056 = pneg %p497
        %p1057 = pneg %p494
        %p1058 = pneg %p518
        %p1059 = pneg %p515
        %p1060 = pneg %p539
        %p1061 = pneg %p536
        %p1062 = pneg %p560
        %p1063 = pneg %p557
        %p1064 = pneg %p581
        %p1065 = pneg %p578
        %p1066 = pneg %p602
        %p1067 = pneg %p599
        %p1068 = pneg %p623
        %p1069 = pneg %p620
        %p1070 = pneg %p649
        %p1071 = pneg %p646
        %s1072 = sand.u32 %s636, 1
        %s1073 = scalar_lea.sflag [#allocation4], %s1072
        %s1074 = sand.u32 %s636, 1
        %s1075 = smul.addr %s1074, 16
        %s1076 = scalar_lea.vmem [#allocation26], %s1075
        %p1077 = scmp.lt.s32.totalorder %s51, 1
        %s1078 = scalar_select %p1077, %s51, 1
        %s1079 = smul.addr %s1078, 2
        %s1080 = smul.addr %s1079, 8
        %s1081 = scalar_lea.vmem %s0, %s1080
        %v1082 = vld [vmem:[%s1081] sm:$0xff]
        %v1083 = vld [vmem:[%s1081 + $0x8] sm:$0xff]
        %v1084 = vld [vmem:[%s930] sm:$0xff]
        %v1085 = vld [vmem:[%s930 + $0x8] sm:$0xff]
        %v1086 = vld [vmem:[%s2] sm:$0xff]
        %v1087 = vld [vmem:[%s2 + $0x8] sm:$0xff]
        %v1088 = vld [vmem:[%s2 + $0x10] sm:$0xff]
        %v1089 = vld [vmem:[%s2 + $0x18] sm:$0xff]
        %v1090 = vld [vmem:[%s2 + $0x20] sm:$0xff]
        %v1091 = vld [vmem:[%s2 + $0x28] sm:$0xff]
        %v1092 = vld [vmem:[%s3] sm:$0xff]
        %v1093 = vld [vmem:[%s3 + $0x8] sm:$0xff]
        %v1094 = vld [vmem:[%s3 + $0x10] sm:$0xff]
        %v1095 = vld [vmem:[%s3 + $0x18] sm:$0xff]
        %v1096 = vld [vmem:[%s3 + $0x20] sm:$0xff]
        %v1097 = vld [vmem:[%s3 + $0x28] sm:$0xff]
        %v1098 = vld [vmem:[#allocation5] sm:$0xff]
        %v1099 = vld [vmem:[#allocation5 + $0x8] sm:$0xff]
        %v1100 = vld [vmem:[#allocation5 + $0x10] sm:$0xff]
        %v1101 = vld [vmem:[#allocation5 + $0x18] sm:$0xff]
        %v1102 = vld [vmem:[#allocation5 + $0x20] sm:$0xff]
        %v1103 = vld [vmem:[#allocation5 + $0x28] sm:$0xff]
        %v1104 = vld [vmem:[#allocation5 + $0x30] sm:$0xff]
        %v1105 = vld [vmem:[#allocation5 + $0x38] sm:$0xff]
        %v1106 = vld [vmem:[#allocation7] sm:$0xff]
        %v1107 = vld [vmem:[#allocation7 + $0x8] sm:$0xff]
        %v1108 = vld [vmem:[#allocation7 + $0x10] sm:$0xff]
        %v1109 = vld [vmem:[#allocation7 + $0x18] sm:$0xff]
        %vm1110 = vcmask 130048
        %v1112 = vsel %vm1110, %v1086, 0
        %v1115 = vsel %vm1110, %v1087, 0
        %v1118 = vsel %vm1110, %v1088, 0
        %v1121 = vsel %vm1110, %v1089, 0
        %v1124 = vsel %vm1110, %v1090, 0
        %v1127 = vsel %vm1110, %v1091, 0
        %1129 = vmatpush.msra.mxu0 0.0
        %1130 = vmatpush.msra.mxu0 0.0
        %1131 = vmatpush.msra.mxu0 0.0
        %1132 = vmatpush.msra.mxu0 0.0
        %1133 = vmatpush.msra.mxu0 0.0
        %1134 = vmatpush.msra.mxu0 0.0
        %1135 = vmatpush.msra.mxu0 0.0
        %1136 = vmatpush.msra.mxu0 0.0
        %1137 = vmatpush.msra.mxu0 0.0
        %1138 = vmatpush.msra.mxu0 0.0
        %1139 = vmatpush.msra.mxu0 0.0
        %1140 = vmatpush.msra.mxu0 0.0
        %1141 = vmatpush.msra.mxu0 0.0
        %1142 = vmatpush.msra.mxu0 0.0
        %1143 = vmatpush.msra.mxu0 %v1083
        %1144 = vmatpush.msra.mxu0 %v1082
        %1145 = vmatmul.f32.gmra.mxu0 %v1112
        %v1146 = vpop.f32.mrf.mxu0
        %v1147 = vadd.f32 0.0, %v1146
        %1148 = vmatmul.f32.gmra.mxu0 %v1115
        %v1149 = vpop.f32.mrf.mxu0
        %v1150 = vadd.f32 0.0, %v1149
        %1151 = vmatmul.f32.gmra.mxu0 %v1118
        %v1152 = vpop.f32.mrf.mxu0
        %v1153 = vadd.f32 0.0, %v1152
        %1154 = vmatmul.f32.gmra.mxu0 %v1121
        %v1155 = vpop.f32.mrf.mxu0
        %v1156 = vadd.f32 0.0, %v1155
        %1157 = vmatmul.f32.gmra.mxu0 %v1124
        %v1158 = vpop.f32.mrf.mxu0
        %v1159 = vadd.f32 0.0, %v1158
        %1160 = vmatmul.f32.gmra.mxu0 %v1127
        %v1161 = vpop.f32.mrf.mxu0
        %v1162 = vadd.f32 0.0, %v1161
        %1163 = vdwg.mxu0
        %v1164 = vld [vmem:[#allocation11] sm:$0xff]
        %v1165 = vld [vmem:[#allocation11 + $0x8] sm:$0xff]
        %v1166 = vld [vmem:[#allocation11 + $0x10] sm:$0xff]
        %s1167 = scalar_lea.vmem [#allocation11], 24
        %v1168 = vld [vmem:[%s1167] sm:$0xff]
        %v1169 = vld [vmem:[%s1167 + $0x8] sm:$0xff]
        %v1170 = vld [vmem:[%s1167 + $0x10] sm:$0xff]
        %1174 = vst [vmem:[#allocation1] ss:$2 sm:$0xff] %v1168
        %s1175 = scalar_lea.vmem [#allocation1], 16
        %1176 = vst [vmem:[%s1175] ss:$2 sm:$0xff] %v1169
        %s1177 = scalar_lea.vmem [#allocation1], 32
        %1178 = vst [vmem:[%s1177] ss:$2 sm:$0xff] %v1170
        %v1179 = vld.sshfl [vmem:[#allocation1] sm:$0xff pattern:$0x75316420]
        %v1180 = vld.sshfl [vmem:[#allocation1 + $0x8] sm:$0xff pattern:$0x75316420]
        %v1181 = vld.sshfl [vmem:[#allocation1 + $0x10] sm:$0xff pattern:$0x75316420]
        %v1182 = vld.sshfl [vmem:[#allocation1 + $0x18] sm:$0xff pattern:$0x75316420]
        %v1183 = vld.sshfl [vmem:[#allocation1 + $0x20] sm:$0xff pattern:$0x75316420]
        %v1184 = vld.sshfl [vmem:[#allocation1 + $0x28] sm:$0xff pattern:$0x75316420]
        %vm1185 = vcmask 31744
        %v1187 = vsel %vm1185, %v1153, 0
        %v1190 = vsel %vm1185, %v1156, 0
        %vm1192 = vcmask 1043456
        %v1193 = vsel %vm1192, %v1179, 0
        %v1195 = vsel %vm1192, %v1180, 0
        %v1197 = vsel %vm1192, %v1181, 0
        %v1199 = vsel %vm1192, %v1182, 0
        %v1201 = vsel %vm1192, %v1183, 0
        %v1203 = vsel %vm1192, %v1184, 0
        %1205 = vmatpush.msra.mxu0 0.0
        %1206 = vmatpush.msra.mxu0 0.0
        %1207 = vmatpush.msra.mxu0 0.0
        %1208 = vmatpush.msra.mxu0 0.0
        %1209 = vmatpush.msra.mxu0 0.0
        %1210 = vmatpush.msra.mxu0 0.0
        %1211 = vmatpush.msra.mxu0 0.0
        %1212 = vmatpush.msra.mxu0 0.0
        %1213 = vmatpush.msra.mxu0 0.0
        %1214 = vmatpush.msra.mxu0 0.0
        %1215 = vmatpush.msra.mxu0 0.0
        %1216 = vmatpush.msra.mxu0 0.0
        %1217 = vmatpush.msra.mxu0 0.0
        %1218 = vmatpush.msra.mxu0 0.0
        %1219 = vmatpush.msra.mxu0 0.0
        %1220 = vmatpush.msra.mxu0 %v1193
        %1221 = vmatmul.f32.gmra.mxu0 %v1187
        %v1222 = vpop.f32.mrf.mxu0
        %v1223 = vadd.f32 0.0, %v1222
        %1224 = vmatmul.f32.gmra.mxu0 %v1190
        %v1225 = vpop.f32.mrf.mxu0
        %v1226 = vadd.f32 0.0, %v1225
        %1227 = vdwg.mxu0
        %1228 = vmatpush.msra.mxu0 0.0
        %1229 = vmatpush.msra.mxu0 0.0
        %1230 = vmatpush.msra.mxu0 0.0
        %1231 = vmatpush.msra.mxu0 0.0
        %1232 = vmatpush.msra.mxu0 0.0
        %1233 = vmatpush.msra.mxu0 0.0
        %1234 = vmatpush.msra.mxu0 0.0
        %1235 = vmatpush.msra.mxu0 0.0
        %1236 = vmatpush.msra.mxu0 0.0
        %1237 = vmatpush.msra.mxu0 0.0
        %1238 = vmatpush.msra.mxu0 0.0
        %1239 = vmatpush.msra.mxu0 0.0
        %1240 = vmatpush.msra.mxu0 0.0
        %1241 = vmatpush.msra.mxu0 0.0
        %1242 = vmatpush.msra.mxu0 0.0
        %1243 = vmatpush.msra.mxu0 %v1195
        %1244 = vmatmul.f32.gmra.mxu0 %v1187
        %v1245 = vpop.f32.mrf.mxu0
        %v1246 = vadd.f32 0.0, %v1245
        %1247 = vmatmul.f32.gmra.mxu0 %v1190
        %v1248 = vpop.f32.mrf.mxu0
        %v1249 = vadd.f32 0.0, %v1248
        %1250 = vdwg.mxu0
        %1251 = vmatpush.msra.mxu0 0.0
        %1252 = vmatpush.msra.mxu0 0.0
        %1253 = vmatpush.msra.mxu0 0.0
        %1254 = vmatpush.msra.mxu0 0.0
        %1255 = vmatpush.msra.mxu0 0.0
        %1256 = vmatpush.msra.mxu0 0.0
        %1257 = vmatpush.msra.mxu0 0.0
        %1258 = vmatpush.msra.mxu0 0.0
        %1259 = vmatpush.msra.mxu0 0.0
        %1260 = vmatpush.msra.mxu0 0.0
        %1261 = vmatpush.msra.mxu0 0.0
        %1262 = vmatpush.msra.mxu0 0.0
        %1263 = vmatpush.msra.mxu0 0.0
        %1264 = vmatpush.msra.mxu0 0.0
        %1265 = vmatpush.msra.mxu0 0.0
        %1266 = vmatpush.msra.mxu0 %v1197
        %1267 = vmatmul.f32.gmra.mxu0 %v1187
        %v1268 = vpop.f32.mrf.mxu0
        %v1269 = vadd.f32 0.0, %v1268
        %1270 = vmatmul.f32.gmra.mxu0 %v1190
        %v1271 = vpop.f32.mrf.mxu0
        %v1272 = vadd.f32 0.0, %v1271
        %1273 = vdwg.mxu0
        %1274 = vmatpush.msra.mxu0 0.0
        %1275 = vmatpush.msra.mxu0 0.0
        %1276 = vmatpush.msra.mxu0 0.0
        %1277 = vmatpush.msra.mxu0 0.0
        %1278 = vmatpush.msra.mxu0 0.0
        %1279 = vmatpush.msra.mxu0 0.0
        %1280 = vmatpush.msra.mxu0 0.0
        %1281 = vmatpush.msra.mxu0 0.0
        %1282 = vmatpush.msra.mxu0 0.0
        %1283 = vmatpush.msra.mxu0 0.0
        %1284 = vmatpush.msra.mxu0 0.0
        %1285 = vmatpush.msra.mxu0 0.0
        %1286 = vmatpush.msra.mxu0 0.0
        %1287 = vmatpush.msra.mxu0 0.0
        %1288 = vmatpush.msra.mxu0 0.0
        %1289 = vmatpush.msra.mxu0 %v1199
        %1290 = vmatmul.f32.gmra.mxu0 %v1187
        %v1291 = vpop.f32.mrf.mxu0
        %v1292 = vadd.f32 0.0, %v1291
        %1293 = vmatmul.f32.gmra.mxu0 %v1190
        %v1294 = vpop.f32.mrf.mxu0
        %v1295 = vadd.f32 0.0, %v1294
        %1296 = vdwg.mxu0
        %1297 = vmatpush.msra.mxu0 0.0
        %1298 = vmatpush.msra.mxu0 0.0
        %1299 = vmatpush.msra.mxu0 0.0
        %1300 = vmatpush.msra.mxu0 0.0
        %1301 = vmatpush.msra.mxu0 0.0
        %1302 = vmatpush.msra.mxu0 0.0
        %1303 = vmatpush.msra.mxu0 0.0
        %1304 = vmatpush.msra.mxu0 0.0
        %1305 = vmatpush.msra.mxu0 0.0
        %1306 = vmatpush.msra.mxu0 0.0
        %1307 = vmatpush.msra.mxu0 0.0
        %1308 = vmatpush.msra.mxu0 0.0
        %1309 = vmatpush.msra.mxu0 0.0
        %1310 = vmatpush.msra.mxu0 0.0
        %1311 = vmatpush.msra.mxu0 0.0
        %1312 = vmatpush.msra.mxu0 %v1201
        %1313 = vmatmul.f32.gmra.mxu0 %v1187
        %v1314 = vpop.f32.mrf.mxu0
        %v1315 = vadd.f32 0.0, %v1314
        %1316 = vmatmul.f32.gmra.mxu0 %v1190
        %v1317 = vpop.f32.mrf.mxu0
        %v1318 = vadd.f32 0.0, %v1317
        %1319 = vdwg.mxu0
        %1320 = vmatpush.msra.mxu0 0.0
        %1321 = vmatpush.msra.mxu0 0.0
        %1322 = vmatpush.msra.mxu0 0.0
        %1323 = vmatpush.msra.mxu0 0.0
        %1324 = vmatpush.msra.mxu0 0.0
        %1325 = vmatpush.msra.mxu0 0.0
        %1326 = vmatpush.msra.mxu0 0.0
        %1327 = vmatpush.msra.mxu0 0.0
        %1328 = vmatpush.msra.mxu0 0.0
        %1329 = vmatpush.msra.mxu0 0.0
        %1330 = vmatpush.msra.mxu0 0.0
        %1331 = vmatpush.msra.mxu0 0.0
        %1332 = vmatpush.msra.mxu0 0.0
        %1333 = vmatpush.msra.mxu0 0.0
        %1334 = vmatpush.msra.mxu0 0.0
        %1335 = vmatpush.msra.mxu0 %v1203
        %1336 = vmatmul.f32.gmra.mxu0 %v1187
        %v1337 = vpop.f32.mrf.mxu0
        %v1338 = vadd.f32 0.0, %v1337
        %1339 = vmatmul.f32.gmra.mxu0 %v1190
        %v1340 = vpop.f32.mrf.mxu0
        %v1341 = vadd.f32 0.0, %v1340
        %1342 = vdwg.mxu0
        %1346 = vst [vmem:[#allocation1] ss:$2 sm:$0xff] %v1164
        %s1347 = scalar_lea.vmem [#allocation1], 16
        %1348 = vst [vmem:[%s1347] ss:$2 sm:$0xff] %v1165
        %s1349 = scalar_lea.vmem [#allocation1], 32
        %1350 = vst [vmem:[%s1349] ss:$2 sm:$0xff] %v1166
        %v1351 = vld.sshfl [vmem:[#allocation1] sm:$0xff pattern:$0x75316420]
        %v1352 = vld.sshfl [vmem:[#allocation1 + $0x8] sm:$0xff pattern:$0x75316420]
        %v1353 = vld.sshfl [vmem:[#allocation1 + $0x10] sm:$0xff pattern:$0x75316420]
        %v1354 = vld.sshfl [vmem:[#allocation1 + $0x18] sm:$0xff pattern:$0x75316420]
        %v1355 = vld.sshfl [vmem:[#allocation1 + $0x20] sm:$0xff pattern:$0x75316420]
        %v1356 = vld.sshfl [vmem:[#allocation1 + $0x28] sm:$0xff pattern:$0x75316420]
        %v1358 = vsel %vm1185, %v1147, 0
        %v1361 = vsel %vm1185, %v1150, 0
        %v1363 = vsel %vm1192, %v1351, 0
        %v1365 = vsel %vm1192, %v1352, 0
        %v1367 = vsel %vm1192, %v1353, 0
        %v1369 = vsel %vm1192, %v1354, 0
        %v1371 = vsel %vm1192, %v1355, 0
        %v1373 = vsel %vm1192, %v1356, 0
        %1375 = vmatpush.msra.mxu0 0.0
        %1376 = vmatpush.msra.mxu0 0.0
        %1377 = vmatpush.msra.mxu0 0.0
        %1378 = vmatpush.msra.mxu0 0.0
        %1379 = vmatpush.msra.mxu0 0.0
        %1380 = vmatpush.msra.mxu0 0.0
        %1381 = vmatpush.msra.mxu0 0.0
        %1382 = vmatpush.msra.mxu0 0.0
        %1383 = vmatpush.msra.mxu0 0.0
        %1384 = vmatpush.msra.mxu0 0.0
        %1385 = vmatpush.msra.mxu0 0.0
        %1386 = vmatpush.msra.mxu0 0.0
        %1387 = vmatpush.msra.mxu0 0.0
        %1388 = vmatpush.msra.mxu0 0.0
        %1389 = vmatpush.msra.mxu0 0.0
        %1390 = vmatpush.msra.mxu0 %v1363
        %1391 = vmatmul.f32.gmra.mxu0 %v1358
        %v1392 = vpop.f32.mrf.mxu0
        %v1393 = vadd.f32 %v1223, %v1392
        %1394 = vmatmul.f32.gmra.mxu0 %v1361
        %v1395 = vpop.f32.mrf.mxu0
        %v1396 = vadd.f32 %v1226, %v1395
        %1397 = vdwg.mxu0
        %1398 = vmatpush.msra.mxu0 0.0
        %1399 = vmatpush.msra.mxu0 0.0
        %1400 = vmatpush.msra.mxu0 0.0
        %1401 = vmatpush.msra.mxu0 0.0
        %1402 = vmatpush.msra.mxu0 0.0
        %1403 = vmatpush.msra.mxu0 0.0
        %1404 = vmatpush.msra.mxu0 0.0
        %1405 = vmatpush.msra.mxu0 0.0
        %1406 = vmatpush.msra.mxu0 0.0
        %1407 = vmatpush.msra.mxu0 0.0
        %1408 = vmatpush.msra.mxu0 0.0
        %1409 = vmatpush.msra.mxu0 0.0
        %1410 = vmatpush.msra.mxu0 0.0
        %1411 = vmatpush.msra.mxu0 0.0
        %1412 = vmatpush.msra.mxu0 0.0
        %1413 = vmatpush.msra.mxu0 %v1365
        %1414 = vmatmul.f32.gmra.mxu0 %v1358
        %v1415 = vpop.f32.mrf.mxu0
        %v1416 = vadd.f32 %v1246, %v1415
        %1417 = vmatmul.f32.gmra.mxu0 %v1361
        %v1418 = vpop.f32.mrf.mxu0
        %v1419 = vadd.f32 %v1249, %v1418
        %1420 = vdwg.mxu0
        %1421 = vmatpush.msra.mxu0 0.0
        %1422 = vmatpush.msra.mxu0 0.0
        %1423 = vmatpush.msra.mxu0 0.0
        %1424 = vmatpush.msra.mxu0 0.0
        %1425 = vmatpush.msra.mxu0 0.0
        %1426 = vmatpush.msra.mxu0 0.0
        %1427 = vmatpush.msra.mxu0 0.0
        %1428 = vmatpush.msra.mxu0 0.0
        %1429 = vmatpush.msra.mxu0 0.0
        %1430 = vmatpush.msra.mxu0 0.0
        %1431 = vmatpush.msra.mxu0 0.0
        %1432 = vmatpush.msra.mxu0 0.0
        %1433 = vmatpush.msra.mxu0 0.0
        %1434 = vmatpush.msra.mxu0 0.0
        %1435 = vmatpush.msra.mxu0 0.0
        %1436 = vmatpush.msra.mxu0 %v1367
        %1437 = vmatmul.f32.gmra.mxu0 %v1358
        %v1438 = vpop.f32.mrf.mxu0
        %v1439 = vadd.f32 %v1269, %v1438
        %1440 = vmatmul.f32.gmra.mxu0 %v1361
        %v1441 = vpop.f32.mrf.mxu0
        %v1442 = vadd.f32 %v1272, %v1441
        %1443 = vdwg.mxu0
        %1444 = vmatpush.msra.mxu0 0.0
        %1445 = vmatpush.msra.mxu0 0.0
        %1446 = vmatpush.msra.mxu0 0.0
        %1447 = vmatpush.msra.mxu0 0.0
        %1448 = vmatpush.msra.mxu0 0.0
        %1449 = vmatpush.msra.mxu0 0.0
        %1450 = vmatpush.msra.mxu0 0.0
        %1451 = vmatpush.msra.mxu0 0.0
        %1452 = vmatpush.msra.mxu0 0.0
        %1453 = vmatpush.msra.mxu0 0.0
        %1454 = vmatpush.msra.mxu0 0.0
        %1455 = vmatpush.msra.mxu0 0.0
        %1456 = vmatpush.msra.mxu0 0.0
        %1457 = vmatpush.msra.mxu0 0.0
        %1458 = vmatpush.msra.mxu0 0.0
        %1459 = vmatpush.msra.mxu0 %v1369
        %1460 = vmatmul.f32.gmra.mxu0 %v1358
        %v1461 = vpop.f32.mrf.mxu0
        %v1462 = vadd.f32 %v1292, %v1461
        %1463 = vmatmul.f32.gmra.mxu0 %v1361
        %v1464 = vpop.f32.mrf.mxu0
        %v1465 = vadd.f32 %v1295, %v1464
        %1466 = vdwg.mxu0
        %1467 = vmatpush.msra.mxu0 0.0
        %1468 = vmatpush.msra.mxu0 0.0
        %1469 = vmatpush.msra.mxu0 0.0
        %1470 = vmatpush.msra.mxu0 0.0
        %1471 = vmatpush.msra.mxu0 0.0
        %1472 = vmatpush.msra.mxu0 0.0
        %1473 = vmatpush.msra.mxu0 0.0
        %1474 = vmatpush.msra.mxu0 0.0
        %1475 = vmatpush.msra.mxu0 0.0
        %1476 = vmatpush.msra.mxu0 0.0
        %1477 = vmatpush.msra.mxu0 0.0
        %1478 = vmatpush.msra.mxu0 0.0
        %1479 = vmatpush.msra.mxu0 0.0
        %1480 = vmatpush.msra.mxu0 0.0
        %1481 = vmatpush.msra.mxu0 0.0
        %1482 = vmatpush.msra.mxu0 %v1371
        %1483 = vmatmul.f32.gmra.mxu0 %v1358
        %v1484 = vpop.f32.mrf.mxu0
        %v1485 = vadd.f32 %v1315, %v1484
        %1486 = vmatmul.f32.gmra.mxu0 %v1361
        %v1487 = vpop.f32.mrf.mxu0
        %v1488 = vadd.f32 %v1318, %v1487
        %1489 = vdwg.mxu0
        %1490 = vmatpush.msra.mxu0 0.0
        %1491 = vmatpush.msra.mxu0 0.0
        %1492 = vmatpush.msra.mxu0 0.0
        %1493 = vmatpush.msra.mxu0 0.0
        %1494 = vmatpush.msra.mxu0 0.0
        %1495 = vmatpush.msra.mxu0 0.0
        %1496 = vmatpush.msra.mxu0 0.0
        %1497 = vmatpush.msra.mxu0 0.0
        %1498 = vmatpush.msra.mxu0 0.0
        %1499 = vmatpush.msra.mxu0 0.0
        %1500 = vmatpush.msra.mxu0 0.0
        %1501 = vmatpush.msra.mxu0 0.0
        %1502 = vmatpush.msra.mxu0 0.0
        %1503 = vmatpush.msra.mxu0 0.0
        %1504 = vmatpush.msra.mxu0 0.0
        %1505 = vmatpush.msra.mxu0 %v1373
        %1506 = vmatmul.f32.gmra.mxu0 %v1358
        %v1507 = vpop.f32.mrf.mxu0
        %v1508 = vadd.f32 %v1338, %v1507
        %1509 = vmatmul.f32.gmra.mxu0 %v1361
        %v1510 = vpop.f32.mrf.mxu0
        %v1511 = vadd.f32 %v1341, %v1510
        %1512 = vdwg.mxu0
        %s1513 = scalar_lea.vmem [#allocation11], 48
        %v1514 = vld [vmem:[%s1513] sm:$0xff]
        %v1515 = vld [vmem:[%s1513 + $0x8] sm:$0xff]
        %v1516 = vld [vmem:[%s1513 + $0x10] sm:$0xff]
        %1520 = vst [vmem:[#allocation1] ss:$2 sm:$0xff] %v1514
        %s1521 = scalar_lea.vmem [#allocation1], 16
        %1522 = vst [vmem:[%s1521] ss:$2 sm:$0xff] %v1515
        %s1523 = scalar_lea.vmem [#allocation1], 32
        %1524 = vst [vmem:[%s1523] ss:$2 sm:$0xff] %v1516
        %v1525 = vld.sshfl [vmem:[#allocation1] sm:$0xff pattern:$0x75316420]
        %v1526 = vld.sshfl [vmem:[#allocation1 + $0x8] sm:$0xff pattern:$0x75316420]
        %v1527 = vld.sshfl [vmem:[#allocation1 + $0x10] sm:$0xff pattern:$0x75316420]
        %v1528 = vld.sshfl [vmem:[#allocation1 + $0x18] sm:$0xff pattern:$0x75316420]
        %v1529 = vld.sshfl [vmem:[#allocation1 + $0x20] sm:$0xff pattern:$0x75316420]
        %v1530 = vld.sshfl [vmem:[#allocation1 + $0x28] sm:$0xff pattern:$0x75316420]
        %v1532 = vsel %vm1185, %v1159, 0
        %v1535 = vsel %vm1185, %v1162, 0
        %v1537 = vsel %vm1192, %v1525, 0
        %v1539 = vsel %vm1192, %v1526, 0
        %v1541 = vsel %vm1192, %v1527, 0
        %v1543 = vsel %vm1192, %v1528, 0
        %v1545 = vsel %vm1192, %v1529, 0
        %v1547 = vsel %vm1192, %v1530, 0
        %1549 = vmatpush.msra.mxu0 0.0
        %1550 = vmatpush.msra.mxu0 0.0
        %1551 = vmatpush.msra.mxu0 0.0
        %1552 = vmatpush.msra.mxu0 0.0
        %1553 = vmatpush.msra.mxu0 0.0
        %1554 = vmatpush.msra.mxu0 0.0
        %1555 = vmatpush.msra.mxu0 0.0
        %1556 = vmatpush.msra.mxu0 0.0
        %1557 = vmatpush.msra.mxu0 0.0
        %1558 = vmatpush.msra.mxu0 0.0
        %1559 = vmatpush.msra.mxu0 0.0
        %1560 = vmatpush.msra.mxu0 0.0
        %1561 = vmatpush.msra.mxu0 0.0
        %1562 = vmatpush.msra.mxu0 0.0
        %1563 = vmatpush.msra.mxu0 0.0
        %1564 = vmatpush.msra.mxu0 %v1537
        %1565 = vmatmul.f32.gmra.mxu0 %v1532
        %v1566 = vpop.f32.mrf.mxu0
        %v1567 = vadd.f32 0.0, %v1566
        %1568 = vmatmul.f32.gmra.mxu0 %v1535
        %v1569 = vpop.f32.mrf.mxu0
        %v1570 = vadd.f32 0.0, %v1569
        %1571 = vdwg.mxu0
        %1572 = vmatpush.msra.mxu0 0.0
        %1573 = vmatpush.msra.mxu0 0.0
        %1574 = vmatpush.msra.mxu0 0.0
        %1575 = vmatpush.msra.mxu0 0.0
        %1576 = vmatpush.msra.mxu0 0.0
        %1577 = vmatpush.msra.mxu0 0.0
        %1578 = vmatpush.msra.mxu0 0.0
        %1579 = vmatpush.msra.mxu0 0.0
        %1580 = vmatpush.msra.mxu0 0.0
        %1581 = vmatpush.msra.mxu0 0.0
        %1582 = vmatpush.msra.mxu0 0.0
        %1583 = vmatpush.msra.mxu0 0.0
        %1584 = vmatpush.msra.mxu0 0.0
        %1585 = vmatpush.msra.mxu0 0.0
        %1586 = vmatpush.msra.mxu0 0.0
        %1587 = vmatpush.msra.mxu0 %v1539
        %1588 = vmatmul.f32.gmra.mxu0 %v1532
        %v1589 = vpop.f32.mrf.mxu0
        %v1590 = vadd.f32 0.0, %v1589
        %1591 = vmatmul.f32.gmra.mxu0 %v1535
        %v1592 = vpop.f32.mrf.mxu0
        %v1593 = vadd.f32 0.0, %v1592
        %1594 = vdwg.mxu0
        %1595 = vmatpush.msra.mxu0 0.0
        %1596 = vmatpush.msra.mxu0 0.0
        %1597 = vmatpush.msra.mxu0 0.0
        %1598 = vmatpush.msra.mxu0 0.0
        %1599 = vmatpush.msra.mxu0 0.0
        %1600 = vmatpush.msra.mxu0 0.0
        %1601 = vmatpush.msra.mxu0 0.0
        %1602 = vmatpush.msra.mxu0 0.0
        %1603 = vmatpush.msra.mxu0 0.0
        %1604 = vmatpush.msra.mxu0 0.0
        %1605 = vmatpush.msra.mxu0 0.0
        %1606 = vmatpush.msra.mxu0 0.0
        %1607 = vmatpush.msra.mxu0 0.0
        %1608 = vmatpush.msra.mxu0 0.0
        %1609 = vmatpush.msra.mxu0 0.0
        %1610 = vmatpush.msra.mxu0 %v1541
        %1611 = vmatmul.f32.gmra.mxu0 %v1532
        %v1612 = vpop.f32.mrf.mxu0
        %v1613 = vadd.f32 0.0, %v1612
        %1614 = vmatmul.f32.gmra.mxu0 %v1535
        %v1615 = vpop.f32.mrf.mxu0
        %v1616 = vadd.f32 0.0, %v1615
        %1617 = vdwg.mxu0
        %1618 = vmatpush.msra.mxu0 0.0
        %1619 = vmatpush.msra.mxu0 0.0
        %1620 = vmatpush.msra.mxu0 0.0
        %1621 = vmatpush.msra.mxu0 0.0
        %1622 = vmatpush.msra.mxu0 0.0
        %1623 = vmatpush.msra.mxu0 0.0
        %1624 = vmatpush.msra.mxu0 0.0
        %1625 = vmatpush.msra.mxu0 0.0
        %1626 = vmatpush.msra.mxu0 0.0
        %1627 = vmatpush.msra.mxu0 0.0
        %1628 = vmatpush.msra.mxu0 0.0
        %1629 = vmatpush.msra.mxu0 0.0
        %1630 = vmatpush.msra.mxu0 0.0
        %1631 = vmatpush.msra.mxu0 0.0
        %1632 = vmatpush.msra.mxu0 0.0
        %1633 = vmatpush.msra.mxu0 %v1543
        %1634 = vmatmul.f32.gmra.mxu0 %v1532
        %v1635 = vpop.f32.mrf.mxu0
        %v1636 = vadd.f32 0.0, %v1635
        %1637 = vmatmul.f32.gmra.mxu0 %v1535
        %v1638 = vpop.f32.mrf.mxu0
        %v1639 = vadd.f32 0.0, %v1638
        %1640 = vdwg.mxu0
        %1641 = vmatpush.msra.mxu0 0.0
        %1642 = vmatpush.msra.mxu0 0.0
        %1643 = vmatpush.msra.mxu0 0.0
        %1644 = vmatpush.msra.mxu0 0.0
        %1645 = vmatpush.msra.mxu0 0.0
        %1646 = vmatpush.msra.mxu0 0.0
        %1647 = vmatpush.msra.mxu0 0.0
        %1648 = vmatpush.msra.mxu0 0.0
        %1649 = vmatpush.msra.mxu0 0.0
        %1650 = vmatpush.msra.mxu0 0.0
        %1651 = vmatpush.msra.mxu0 0.0
        %1652 = vmatpush.msra.mxu0 0.0
        %1653 = vmatpush.msra.mxu0 0.0
        %1654 = vmatpush.msra.mxu0 0.0
        %1655 = vmatpush.msra.mxu0 0.0
        %1656 = vmatpush.msra.mxu0 %v1545
        %1657 = vmatmul.f32.gmra.mxu0 %v1532
        %v1658 = vpop.f32.mrf.mxu0
        %v1659 = vadd.f32 0.0, %v1658
        %1660 = vmatmul.f32.gmra.mxu0 %v1535
        %v1661 = vpop.f32.mrf.mxu0
        %v1662 = vadd.f32 0.0, %v1661
        %1663 = vdwg.mxu0
        %1664 = vmatpush.msra.mxu0 0.0
        %1665 = vmatpush.msra.mxu0 0.0
        %1666 = vmatpush.msra.mxu0 0.0
        %1667 = vmatpush.msra.mxu0 0.0
        %1668 = vmatpush.msra.mxu0 0.0
        %1669 = vmatpush.msra.mxu0 0.0
        %1670 = vmatpush.msra.mxu0 0.0
        %1671 = vmatpush.msra.mxu0 0.0
        %1672 = vmatpush.msra.mxu0 0.0
        %1673 = vmatpush.msra.mxu0 0.0
        %1674 = vmatpush.msra.mxu0 0.0
        %1675 = vmatpush.msra.mxu0 0.0
        %1676 = vmatpush.msra.mxu0 0.0
        %1677 = vmatpush.msra.mxu0 0.0
        %1678 = vmatpush.msra.mxu0 0.0
        %1679 = vmatpush.msra.mxu0 %v1547
        %1680 = vmatmul.f32.gmra.mxu0 %v1532
        %v1681 = vpop.f32.mrf.mxu0
        %v1682 = vadd.f32 0.0, %v1681
        %1683 = vmatmul.f32.gmra.mxu0 %v1535
        %v1684 = vpop.f32.mrf.mxu0
        %v1685 = vadd.f32 0.0, %v1684
        %1686 = vdwg.mxu0
        %v1687 = vadd.f32 %v1393, %v1567
        %v1688 = vadd.f32 %v1416, %v1590
        %v1689 = vadd.f32 %v1439, %v1613
        %v1690 = vadd.f32 %v1462, %v1636
        %v1691 = vadd.f32 %v1485, %v1659
        %v1692 = vadd.f32 %v1508, %v1682
        %v1693 = vadd.f32 %v1396, %v1570
        %v1694 = vadd.f32 %v1419, %v1593
        %v1695 = vadd.f32 %v1442, %v1616
        %v1696 = vadd.f32 %v1465, %v1639
        %v1697 = vadd.f32 %v1488, %v1662
        %v1698 = vadd.f32 %v1511, %v1685
        %v1699 = vmul.f32 %v1687, %v1098
        %v1700 = vmul.f32 %v1688, %v1099
        %v1701 = vmul.f32 %v1689, %v1100
        %v1702 = vmul.f32 %v1690, %v1101
        %v1703 = vmul.f32 %v1693, %v1102
        %v1704 = vmul.f32 %v1694, %v1103
        %v1705 = vmul.f32 %v1695, %v1104
        %v1706 = vmul.f32 %v1696, %v1105
        %1709 = vrot.lane.b32.xlu0 %v1699, 64
        %v1710 = vpop.permute.xlu0 %1709
        %1711 = vrot.lane.b32.xlu0 %v1703, 64
        %v1712 = vpop.permute.xlu0 %1711
        %v1715 = vadd.f32 %v1699, %v1710
        %v1716 = vadd.f32 %v1703, %v1712
        %v1717 = vadd.f32 %v1715, %v1700
        %v1718 = vadd.f32 %v1716, %v1704
        %1721 = vrot.lane.b32.xlu0 %v1700, 64
        %v1722 = vpop.permute.xlu0 %1721
        %1723 = vrot.lane.b32.xlu0 %v1704, 64
        %v1724 = vpop.permute.xlu0 %1723
        %v1727 = vadd.f32 %v1717, %v1722
        %v1728 = vadd.f32 %v1718, %v1724
        %v1729 = vadd.f32 %v1727, %v1701
        %v1730 = vadd.f32 %v1728, %v1705
        %1733 = vrot.lane.b32.xlu0 %v1701, 64
        %v1734 = vpop.permute.xlu0 %1733
        %1735 = vrot.lane.b32.xlu0 %v1705, 64
        %v1736 = vpop.permute.xlu0 %1735
        %v1739 = vadd.f32 %v1729, %v1734
        %v1740 = vadd.f32 %v1730, %v1736
        %v1741 = vadd.f32 %v1739, %v1702
        %v1742 = vadd.f32 %v1740, %v1706
        %1745 = vrot.lane.b32.xlu0 %v1702, 64
        %v1746 = vpop.permute.xlu0 %1745
        %1747 = vrot.lane.b32.xlu0 %v1706, 64
        %v1748 = vpop.permute.xlu0 %1747
        %v1751 = vadd.f32 %v1741, %v1746
        %v1752 = vadd.f32 %v1742, %v1748
        %v1753 = vmul.f32 %v1691, %v1106
        %v1754 = vmul.f32 %v1692, %v1107
        %v1755 = vmul.f32 %v1697, %v1108
        %v1756 = vmul.f32 %v1698, %v1109
        %1759 = vrot.lane.b32.xlu0 %v1753, 96
        %v1760 = vpop.permute.xlu0 %1759
        %1761 = vrot.lane.b32.xlu0 %v1755, 96
        %v1762 = vpop.permute.xlu0 %1761
        %v1765 = vadd.f32 %v1753, %v1760
        %v1766 = vadd.f32 %v1755, %v1762
        %1767 = vrot.lane.b32.xlu0 %v1753, 64
        %v1768 = vpop.permute.xlu0 %1767
        %1769 = vrot.lane.b32.xlu0 %v1755, 64
        %v1770 = vpop.permute.xlu0 %1769
        %v1773 = vadd.f32 %v1765, %v1768
        %v1774 = vadd.f32 %v1766, %v1770
        %1775 = vrot.lane.b32.xlu0 %v1753, 32
        %v1776 = vpop.permute.xlu0 %1775
        %1777 = vrot.lane.b32.xlu0 %v1755, 32
        %v1778 = vpop.permute.xlu0 %1777
        %v1781 = vadd.f32 %v1773, %v1776
        %v1782 = vadd.f32 %v1774, %v1778
        %v1783 = vadd.f32 %v1781, %v1754
        %v1784 = vadd.f32 %v1782, %v1756
        %1787 = vrot.lane.b32.xlu0 %v1754, 96
        %v1788 = vpop.permute.xlu0 %1787
        %1789 = vrot.lane.b32.xlu0 %v1756, 96
        %v1790 = vpop.permute.xlu0 %1789
        %v1793 = vadd.f32 %v1783, %v1788
        %v1794 = vadd.f32 %v1784, %v1790
        %1795 = vrot.lane.b32.xlu0 %v1754, 64
        %v1796 = vpop.permute.xlu0 %1795
        %1797 = vrot.lane.b32.xlu0 %v1756, 64
        %v1798 = vpop.permute.xlu0 %1797
        %v1801 = vadd.f32 %v1793, %v1796
        %v1802 = vadd.f32 %v1794, %v1798
        %1803 = vrot.lane.b32.xlu0 %v1754, 32
        %v1804 = vpop.permute.xlu0 %1803
        %1805 = vrot.lane.b32.xlu0 %v1756, 32
        %v1806 = vpop.permute.xlu0 %1805
        %v1809 = vadd.f32 %v1801, %v1804
        %v1810 = vadd.f32 %v1802, %v1806
        %v1811 = vld [vmem:[%s9] sm:$0xf]
        %v1812 = vld [vmem:[#allocation13] sm:$0x1]
        %v1814 = vperm.slane %v1812, 0
        %v1817 = vsel %vm1185, %v1082, 0
        %v1820 = vsel %vm1185, %v1083, 0
        %v1823 = vsel %vm1192, %v1811, 0
        %1825 = vmatpush.msra.mxu0 0.0
        %1826 = vmatpush.msra.mxu0 0.0
        %1827 = vmatpush.msra.mxu0 0.0
        %1828 = vmatpush.msra.mxu0 0.0
        %1829 = vmatpush.msra.mxu0 0.0
        %1830 = vmatpush.msra.mxu0 0.0
        %1831 = vmatpush.msra.mxu0 0.0
        %1832 = vmatpush.msra.mxu0 0.0
        %1833 = vmatpush.msra.mxu0 0.0
        %1834 = vmatpush.msra.mxu0 0.0
        %1835 = vmatpush.msra.mxu0 0.0
        %1836 = vmatpush.msra.mxu0 0.0
        %1837 = vmatpush.msra.mxu0 0.0
        %1838 = vmatpush.msra.mxu0 0.0
        %1839 = vmatpush.msra.mxu0 0.0
        %1840 = vmatpush.msra.mxu0 %v1823
        %1841 = vmatmul.f32.gmra.mxu0 %v1817
        %v1842 = vpop.f32.mrf.mxu0
        %v1843 = vadd.f32 %v1814, %v1842
        %1844 = vmatmul.f32.gmra.mxu0 %v1820
        %v1845 = vpop.f32.mrf.mxu0
        %v1846 = vadd.f32 %v1814, %v1845
        %1847 = vdwg.mxu0
        %v1848 = vld [vmem:[#allocation8] sm:$0xff]
        %v1849 = vld [vmem:[#allocation8 + $0x8] sm:$0xff]
        %1850 = vmatpush.msra.mxu0 0.0
        %1851 = vmatpush.msra.mxu0 0.0
        %1852 = vmatpush.msra.mxu0 0.0
        %1853 = vmatpush.msra.mxu0 0.0
        %1854 = vmatpush.msra.mxu0 0.0
        %1855 = vmatpush.msra.mxu0 0.0
        %1856 = vmatpush.msra.mxu0 0.0
        %1857 = vmatpush.msra.mxu0 0.0
        %1858 = vmatpush.msra.mxu0 0.0
        %1859 = vmatpush.msra.mxu0 0.0
        %1860 = vmatpush.msra.mxu0 0.0
        %1861 = vmatpush.msra.mxu0 0.0
        %1862 = vmatpush.msra.mxu0 0.0
        %1863 = vmatpush.msra.mxu0 0.0
        %1864 = vmatpush.msra.mxu0 %v1085
        %1865 = vmatpush.msra.mxu0 %v1084
        %1866 = vmatmul.f32.gmra.mxu0 %v1112
        %v1867 = vpop.f32.mrf.mxu0
        %v1868 = vadd.f32 0.0, %v1867
        %1869 = vmatmul.f32.gmra.mxu0 %v1115
        %v1870 = vpop.f32.mrf.mxu0
        %v1871 = vadd.f32 0.0, %v1870
        %1872 = vmatmul.f32.gmra.mxu0 %v1118
        %v1873 = vpop.f32.mrf.mxu0
        %v1874 = vadd.f32 0.0, %v1873
        %1875 = vmatmul.f32.gmra.mxu0 %v1121
        %v1876 = vpop.f32.mrf.mxu0
        %v1877 = vadd.f32 0.0, %v1876
        %1878 = vmatmul.f32.gmra.mxu0 %v1124
        %v1879 = vpop.f32.mrf.mxu0
        %v1880 = vadd.f32 0.0, %v1879
        %1881 = vmatmul.f32.gmra.mxu0 %v1127
        %v1882 = vpop.f32.mrf.mxu0
        %v1883 = vadd.f32 0.0, %v1882
        %1884 = vdwg.mxu0
        %v1885 = vld [vmem:[#allocation14] sm:$0xff]
        %v1886 = vld [vmem:[#allocation14 + $0x8] sm:$0xff]
        %v1887 = vld [vmem:[#allocation14 + $0x10] sm:$0xff]
        %v1888 = vld [vmem:[#allocation14 + $0x18] sm:$0xff]
        %v1889 = vld [vmem:[#allocation14 + $0x20] sm:$0xff]
        %v1890 = vld [vmem:[#allocation14 + $0x28] sm:$0xff]
        %v1891 = vld [vmem:[#allocation14 + $0x30] sm:$0xff]
        %v1892 = vld [vmem:[#allocation14 + $0x38] sm:$0xff]
        %v1893 = vld [vmem:[#allocation14 + $0x40] sm:$0xff]
        %v1894 = vld [vmem:[#allocation14 + $0x48] sm:$0xff]
        %v1895 = vld [vmem:[#allocation14 + $0x50] sm:$0xff]
        %v1896 = vld [vmem:[#allocation14 + $0x58] sm:$0xff]
        %v1897 = vld [vmem:[#allocation14 + $0x60] sm:$0xff]
        %v1898 = vld [vmem:[#allocation14 + $0x68] sm:$0xff]
        %v1899 = vld [vmem:[#allocation14 + $0x70] sm:$0xff]
        %v1900 = vld [vmem:[#allocation14 + $0x78] sm:$0xff]
        %s1901 = scalar_lea.vmem [#allocation14], 128
        %v1902 = vld [vmem:[%s1901] sm:$0xff]
        %v1903 = vld [vmem:[%s1901 + $0x8] sm:$0xff]
        %v1904 = vld [vmem:[%s1901 + $0x10] sm:$0xff]
        %v1905 = vld [vmem:[%s1901 + $0x18] sm:$0xff]
        %v1906 = vld [vmem:[%s1901 + $0x20] sm:$0xff]
        %v1907 = vld [vmem:[%s1901 + $0x28] sm:$0xff]
        %v1908 = vld [vmem:[%s1901 + $0x30] sm:$0xff]
        %v1909 = vld [vmem:[%s1901 + $0x38] sm:$0xff]
        %v1910 = vld [vmem:[%s1901 + $0x40] sm:$0xff]
        %v1911 = vld [vmem:[%s1901 + $0x48] sm:$0xff]
        %v1912 = vld [vmem:[%s1901 + $0x50] sm:$0xff]
        %v1913 = vld [vmem:[%s1901 + $0x58] sm:$0xff]
        %v1914 = vld [vmem:[%s1901 + $0x60] sm:$0xff]
        %v1915 = vld [vmem:[%s1901 + $0x68] sm:$0xff]
        %v1916 = vld [vmem:[%s1901 + $0x70] sm:$0xff]
        %v1917 = vld [vmem:[%s1901 + $0x78] sm:$0xff]
        %vm1918 = vcmask 261120
        %v1920 = vsel %vm1918, %v1874, 0
        %v1923 = vsel %vm1918, %v1877, 0
        %1925 = vmatpush.msra.mxu0 0.0
        %1926 = vmatpush.msra.mxu0 0.0
        %1927 = vmatpush.msra.mxu0 0.0
        %1928 = vmatpush.msra.mxu0 0.0
        %1929 = vmatpush.msra.mxu0 0.0
        %1930 = vmatpush.msra.mxu0 0.0
        %1931 = vmatpush.msra.mxu0 0.0
        %1932 = vmatpush.msra.mxu0 0.0
        %1933 = vmatpush.msra.mxu0 0.0
        %1934 = vmatpush.msra.mxu0 0.0
        %1935 = vmatpush.msra.mxu0 0.0
        %1936 = vmatpush.msra.mxu0 0.0
        %1937 = vmatpush.msra.mxu0 %v1914
        %1938 = vmatpush.msra.mxu0 %v1910
        %1939 = vmatpush.msra.mxu0 %v1906
        %1940 = vmatpush.msra.mxu0 %v1902
        %1941 = vmatmul.f32.gmra.mxu0 %v1920
        %v1942 = vpop.f32.mrf.mxu0
        %v1943 = vadd.f32 0.0, %v1942
        %1944 = vmatmul.f32.gmra.mxu0 %v1923
        %v1945 = vpop.f32.mrf.mxu0
        %v1946 = vadd.f32 0.0, %v1945
        %1947 = vdwg.mxu0
        %1948 = vmatpush.msra.mxu0 0.0
        %1949 = vmatpush.msra.mxu0 0.0
        %1950 = vmatpush.msra.mxu0 0.0
        %1951 = vmatpush.msra.mxu0 0.0
        %1952 = vmatpush.msra.mxu0 0.0
        %1953 = vmatpush.msra.mxu0 0.0
        %1954 = vmatpush.msra.mxu0 0.0
        %1955 = vmatpush.msra.mxu0 0.0
        %1956 = vmatpush.msra.mxu0 0.0
        %1957 = vmatpush.msra.mxu0 0.0
        %1958 = vmatpush.msra.mxu0 0.0
        %1959 = vmatpush.msra.mxu0 0.0
        %1960 = vmatpush.msra.mxu0 %v1915
        %1961 = vmatpush.msra.mxu0 %v1911
        %1962 = vmatpush.msra.mxu0 %v1907
        %1963 = vmatpush.msra.mxu0 %v1903
        %1964 = vmatmul.f32.gmra.mxu0 %v1920
        %v1965 = vpop.f32.mrf.mxu0
        %v1966 = vadd.f32 0.0, %v1965
        %1967 = vmatmul.f32.gmra.mxu0 %v1923
        %v1968 = vpop.f32.mrf.mxu0
        %v1969 = vadd.f32 0.0, %v1968
        %1970 = vdwg.mxu0
        %1971 = vmatpush.msra.mxu0 0.0
        %1972 = vmatpush.msra.mxu0 0.0
        %1973 = vmatpush.msra.mxu0 0.0
        %1974 = vmatpush.msra.mxu0 0.0
        %1975 = vmatpush.msra.mxu0 0.0
        %1976 = vmatpush.msra.mxu0 0.0
        %1977 = vmatpush.msra.mxu0 0.0
        %1978 = vmatpush.msra.mxu0 0.0
        %1979 = vmatpush.msra.mxu0 0.0
        %1980 = vmatpush.msra.mxu0 0.0
        %1981 = vmatpush.msra.mxu0 0.0
        %1982 = vmatpush.msra.mxu0 0.0
        %1983 = vmatpush.msra.mxu0 %v1916
        %1984 = vmatpush.msra.mxu0 %v1912
        %1985 = vmatpush.msra.mxu0 %v1908
        %1986 = vmatpush.msra.mxu0 %v1904
        %1987 = vmatmul.f32.gmra.mxu0 %v1920
        %v1988 = vpop.f32.mrf.mxu0
        %v1989 = vadd.f32 0.0, %v1988
        %1990 = vmatmul.f32.gmra.mxu0 %v1923
        %v1991 = vpop.f32.mrf.mxu0
        %v1992 = vadd.f32 0.0, %v1991
        %1993 = vdwg.mxu0
        %1994 = vmatpush.msra.mxu0 0.0
        %1995 = vmatpush.msra.mxu0 0.0
        %1996 = vmatpush.msra.mxu0 0.0
        %1997 = vmatpush.msra.mxu0 0.0
        %1998 = vmatpush.msra.mxu0 0.0
        %1999 = vmatpush.msra.mxu0 0.0
        %2000 = vmatpush.msra.mxu0 0.0
        %2001 = vmatpush.msra.mxu0 0.0
        %2002 = vmatpush.msra.mxu0 0.0
        %2003 = vmatpush.msra.mxu0 0.0
        %2004 = vmatpush.msra.mxu0 0.0
        %2005 = vmatpush.msra.mxu0 0.0
        %2006 = vmatpush.msra.mxu0 %v1917
        %2007 = vmatpush.msra.mxu0 %v1913
        %2008 = vmatpush.msra.mxu0 %v1909
        %2009 = vmatpush.msra.mxu0 %v1905
        %2010 = vmatmul.f32.gmra.mxu0 %v1920
        %v2011 = vpop.f32.mrf.mxu0
        %v2012 = vadd.f32 0.0, %v2011
        %2013 = vmatmul.f32.gmra.mxu0 %v1923
        %v2014 = vpop.f32.mrf.mxu0
        %v2015 = vadd.f32 0.0, %v2014
        %2016 = vdwg.mxu0
        %v2018 = vsel %vm1918, %v1868, 0
        %v2021 = vsel %vm1918, %v1871, 0
        %2023 = vmatpush.msra.mxu0 0.0
        %2024 = vmatpush.msra.mxu0 0.0
        %2025 = vmatpush.msra.mxu0 0.0
        %2026 = vmatpush.msra.mxu0 0.0
        %2027 = vmatpush.msra.mxu0 0.0
        %2028 = vmatpush.msra.mxu0 0.0
        %2029 = vmatpush.msra.mxu0 0.0
        %2030 = vmatpush.msra.mxu0 0.0
        %2031 = vmatpush.msra.mxu0 0.0
        %2032 = vmatpush.msra.mxu0 0.0
        %2033 = vmatpush.msra.mxu0 0.0
        %2034 = vmatpush.msra.mxu0 0.0
        %2035 = vmatpush.msra.mxu0 %v1897
        %2036 = vmatpush.msra.mxu0 %v1893
        %2037 = vmatpush.msra.mxu0 %v1889
        %2038 = vmatpush.msra.mxu0 %v1885
        %2039 = vmatmul.f32.gmra.mxu0 %v2018
        %v2040 = vpop.f32.mrf.mxu0
        %v2041 = vadd.f32 %v1943, %v2040
        %2042 = vmatmul.f32.gmra.mxu0 %v2021
        %v2043 = vpop.f32.mrf.mxu0
        %v2044 = vadd.f32 %v1946, %v2043
        %2045 = vdwg.mxu0
        %2046 = vmatpush.msra.mxu0 0.0
        %2047 = vmatpush.msra.mxu0 0.0
        %2048 = vmatpush.msra.mxu0 0.0
        %2049 = vmatpush.msra.mxu0 0.0
        %2050 = vmatpush.msra.mxu0 0.0
        %2051 = vmatpush.msra.mxu0 0.0
        %2052 = vmatpush.msra.mxu0 0.0
        %2053 = vmatpush.msra.mxu0 0.0
        %2054 = vmatpush.msra.mxu0 0.0
        %2055 = vmatpush.msra.mxu0 0.0
        %2056 = vmatpush.msra.mxu0 0.0
        %2057 = vmatpush.msra.mxu0 0.0
        %2058 = vmatpush.msra.mxu0 %v1898
        %2059 = vmatpush.msra.mxu0 %v1894
        %2060 = vmatpush.msra.mxu0 %v1890
        %2061 = vmatpush.msra.mxu0 %v1886
        %2062 = vmatmul.f32.gmra.mxu0 %v2018
        %v2063 = vpop.f32.mrf.mxu0
        %v2064 = vadd.f32 %v1966, %v2063
        %2065 = vmatmul.f32.gmra.mxu0 %v2021
        %v2066 = vpop.f32.mrf.mxu0
        %v2067 = vadd.f32 %v1969, %v2066
        %2068 = vdwg.mxu0
        %2069 = vmatpush.msra.mxu0 0.0
        %2070 = vmatpush.msra.mxu0 0.0
        %2071 = vmatpush.msra.mxu0 0.0
        %2072 = vmatpush.msra.mxu0 0.0
        %2073 = vmatpush.msra.mxu0 0.0
        %2074 = vmatpush.msra.mxu0 0.0
        %2075 = vmatpush.msra.mxu0 0.0
        %2076 = vmatpush.msra.mxu0 0.0
        %2077 = vmatpush.msra.mxu0 0.0
        %2078 = vmatpush.msra.mxu0 0.0
        %2079 = vmatpush.msra.mxu0 0.0
        %2080 = vmatpush.msra.mxu0 0.0
        %2081 = vmatpush.msra.mxu0 %v1899
        %2082 = vmatpush.msra.mxu0 %v1895
        %2083 = vmatpush.msra.mxu0 %v1891
        %2084 = vmatpush.msra.mxu0 %v1887
        %2085 = vmatmul.f32.gmra.mxu0 %v2018
        %v2086 = vpop.f32.mrf.mxu0
        %v2087 = vadd.f32 %v1989, %v2086
        %2088 = vmatmul.f32.gmra.mxu0 %v2021
        %v2089 = vpop.f32.mrf.mxu0
        %v2090 = vadd.f32 %v1992, %v2089
        %2091 = vdwg.mxu0
        %2092 = vmatpush.msra.mxu0 0.0
        %2093 = vmatpush.msra.mxu0 0.0
        %2094 = vmatpush.msra.mxu0 0.0
        %2095 = vmatpush.msra.mxu0 0.0
        %2096 = vmatpush.msra.mxu0 0.0
        %2097 = vmatpush.msra.mxu0 0.0
        %2098 = vmatpush.msra.mxu0 0.0
        %2099 = vmatpush.msra.mxu0 0.0
        %2100 = vmatpush.msra.mxu0 0.0
        %2101 = vmatpush.msra.mxu0 0.0
        %2102 = vmatpush.msra.mxu0 0.0
        %2103 = vmatpush.msra.mxu0 0.0
        %2104 = vmatpush.msra.mxu0 %v1900
        %2105 = vmatpush.msra.mxu0 %v1896
        %2106 = vmatpush.msra.mxu0 %v1892
        %2107 = vmatpush.msra.mxu0 %v1888
        %2108 = vmatmul.f32.gmra.mxu0 %v2018
        %v2109 = vpop.f32.mrf.mxu0
        %v2110 = vadd.f32 %v2012, %v2109
        %2111 = vmatmul.f32.gmra.mxu0 %v2021
        %v2112 = vpop.f32.mrf.mxu0
        %v2113 = vadd.f32 %v2015, %v2112
        %2114 = vdwg.mxu0
        %s2115 = scalar_lea.vmem [#allocation14], 256
        %v2116 = vld [vmem:[%s2115] sm:$0xff]
        %v2117 = vld [vmem:[%s2115 + $0x8] sm:$0xff]
        %v2118 = vld [vmem:[%s2115 + $0x10] sm:$0xff]
        %v2119 = vld [vmem:[%s2115 + $0x18] sm:$0xff]
        %v2120 = vld [vmem:[%s2115 + $0x20] sm:$0xff]
        %v2121 = vld [vmem:[%s2115 + $0x28] sm:$0xff]
        %v2122 = vld [vmem:[%s2115 + $0x30] sm:$0xff]
        %v2123 = vld [vmem:[%s2115 + $0x38] sm:$0xff]
        %v2124 = vld [vmem:[%s2115 + $0x40] sm:$0xff]
        %v2125 = vld [vmem:[%s2115 + $0x48] sm:$0xff]
        %v2126 = vld [vmem:[%s2115 + $0x50] sm:$0xff]
        %v2127 = vld [vmem:[%s2115 + $0x58] sm:$0xff]
        %v2128 = vld [vmem:[%s2115 + $0x60] sm:$0xff]
        %v2129 = vld [vmem:[%s2115 + $0x68] sm:$0xff]
        %v2130 = vld [vmem:[%s2115 + $0x70] sm:$0xff]
        %v2131 = vld [vmem:[%s2115 + $0x78] sm:$0xff]
        %v2133 = vsel %vm1918, %v1880, 0
        %v2136 = vsel %vm1918, %v1883, 0
        %2138 = vmatpush.msra.mxu0 0.0
        %2139 = vmatpush.msra.mxu0 0.0
        %2140 = vmatpush.msra.mxu0 0.0
        %2141 = vmatpush.msra.mxu0 0.0
        %2142 = vmatpush.msra.mxu0 0.0
        %2143 = vmatpush.msra.mxu0 0.0
        %2144 = vmatpush.msra.mxu0 0.0
        %2145 = vmatpush.msra.mxu0 0.0
        %2146 = vmatpush.msra.mxu0 0.0
        %2147 = vmatpush.msra.mxu0 0.0
        %2148 = vmatpush.msra.mxu0 0.0
        %2149 = vmatpush.msra.mxu0 0.0
        %2150 = vmatpush.msra.mxu0 %v2128
        %2151 = vmatpush.msra.mxu0 %v2124
        %2152 = vmatpush.msra.mxu0 %v2120
        %2153 = vmatpush.msra.mxu0 %v2116
        %2154 = vmatmul.f32.gmra.mxu0 %v2133
        %v2155 = vpop.f32.mrf.mxu0
        %v2156 = vadd.f32 0.0, %v2155
        %2157 = vmatmul.f32.gmra.mxu0 %v2136
        %v2158 = vpop.f32.mrf.mxu0
        %v2159 = vadd.f32 0.0, %v2158
        %2160 = vdwg.mxu0
        %2161 = vmatpush.msra.mxu0 0.0
        %2162 = vmatpush.msra.mxu0 0.0
        %2163 = vmatpush.msra.mxu0 0.0
        %2164 = vmatpush.msra.mxu0 0.0
        %2165 = vmatpush.msra.mxu0 0.0
        %2166 = vmatpush.msra.mxu0 0.0
        %2167 = vmatpush.msra.mxu0 0.0
        %2168 = vmatpush.msra.mxu0 0.0
        %2169 = vmatpush.msra.mxu0 0.0
        %2170 = vmatpush.msra.mxu0 0.0
        %2171 = vmatpush.msra.mxu0 0.0
        %2172 = vmatpush.msra.mxu0 0.0
        %2173 = vmatpush.msra.mxu0 %v2129
        %2174 = vmatpush.msra.mxu0 %v2125
        %2175 = vmatpush.msra.mxu0 %v2121
        %2176 = vmatpush.msra.mxu0 %v2117
        %2177 = vmatmul.f32.gmra.mxu0 %v2133
        %v2178 = vpop.f32.mrf.mxu0
        %v2179 = vadd.f32 0.0, %v2178
        %2180 = vmatmul.f32.gmra.mxu0 %v2136
        %v2181 = vpop.f32.mrf.mxu0
        %v2182 = vadd.f32 0.0, %v2181
        %2183 = vdwg.mxu0
        %2184 = vmatpush.msra.mxu0 0.0
        %2185 = vmatpush.msra.mxu0 0.0
        %2186 = vmatpush.msra.mxu0 0.0
        %2187 = vmatpush.msra.mxu0 0.0
        %2188 = vmatpush.msra.mxu0 0.0
        %2189 = vmatpush.msra.mxu0 0.0
        %2190 = vmatpush.msra.mxu0 0.0
        %2191 = vmatpush.msra.mxu0 0.0
        %2192 = vmatpush.msra.mxu0 0.0
        %2193 = vmatpush.msra.mxu0 0.0
        %2194 = vmatpush.msra.mxu0 0.0
        %2195 = vmatpush.msra.mxu0 0.0
        %2196 = vmatpush.msra.mxu0 %v2130
        %2197 = vmatpush.msra.mxu0 %v2126
        %2198 = vmatpush.msra.mxu0 %v2122
        %2199 = vmatpush.msra.mxu0 %v2118
        %2200 = vmatmul.f32.gmra.mxu0 %v2133
        %v2201 = vpop.f32.mrf.mxu0
        %v2202 = vadd.f32 0.0, %v2201
        %2203 = vmatmul.f32.gmra.mxu0 %v2136
        %v2204 = vpop.f32.mrf.mxu0
        %v2205 = vadd.f32 0.0, %v2204
        %2206 = vdwg.mxu0
        %2207 = vmatpush.msra.mxu0 0.0
        %2208 = vmatpush.msra.mxu0 0.0
        %2209 = vmatpush.msra.mxu0 0.0
        %2210 = vmatpush.msra.mxu0 0.0
        %2211 = vmatpush.msra.mxu0 0.0
        %2212 = vmatpush.msra.mxu0 0.0
        %2213 = vmatpush.msra.mxu0 0.0
        %2214 = vmatpush.msra.mxu0 0.0
        %2215 = vmatpush.msra.mxu0 0.0
        %2216 = vmatpush.msra.mxu0 0.0
        %2217 = vmatpush.msra.mxu0 0.0
        %2218 = vmatpush.msra.mxu0 0.0
        %2219 = vmatpush.msra.mxu0 %v2131
        %2220 = vmatpush.msra.mxu0 %v2127
        %2221 = vmatpush.msra.mxu0 %v2123
        %2222 = vmatpush.msra.mxu0 %v2119
        %2223 = vmatmul.f32.gmra.mxu0 %v2133
        %v2224 = vpop.f32.mrf.mxu0
        %v2225 = vadd.f32 0.0, %v2224
        %2226 = vmatmul.f32.gmra.mxu0 %v2136
        %v2227 = vpop.f32.mrf.mxu0
        %v2228 = vadd.f32 0.0, %v2227
        %2229 = vdwg.mxu0
        %v2230 = vadd.f32 %v2041, %v2156
        %v2231 = vadd.f32 %v2064, %v2179
        %v2232 = vadd.f32 %v2087, %v2202
        %v2233 = vadd.f32 %v2110, %v2225
        %v2234 = vadd.f32 %v2044, %v2159
        %v2235 = vadd.f32 %v2067, %v2182
        %v2236 = vadd.f32 %v2090, %v2205
        %v2237 = vadd.f32 %v2113, %v2228
        %v2238 = vadd.f32 %v1848, %v1751
        %v2239 = vadd.f32 %v1849, %v1752
        %v2240 = vmul.f32 %v2230, %v1098
        %v2241 = vmul.f32 %v2231, %v1099
        %v2242 = vmul.f32 %v2232, %v1100
        %v2243 = vmul.f32 %v2233, %v1101
        %v2244 = vmul.f32 %v2234, %v1102
        %v2245 = vmul.f32 %v2235, %v1103
        %v2246 = vmul.f32 %v2236, %v1104
        %v2247 = vmul.f32 %v2237, %v1105
        %2250 = vrot.lane.b32.xlu0 %v2240, 64
        %v2251 = vpop.permute.xlu0 %2250
        %2252 = vrot.lane.b32.xlu0 %v2244, 64
        %v2253 = vpop.permute.xlu0 %2252
        %v2256 = vadd.f32 %v2240, %v2251
        %v2257 = vadd.f32 %v2244, %v2253
        %v2258 = vadd.f32 %v2256, %v2241
        %v2259 = vadd.f32 %v2257, %v2245
        %2262 = vrot.lane.b32.xlu0 %v2241, 64
        %v2263 = vpop.permute.xlu0 %2262
        %2264 = vrot.lane.b32.xlu0 %v2245, 64
        %v2265 = vpop.permute.xlu0 %2264
        %v2268 = vadd.f32 %v2258, %v2263
        %v2269 = vadd.f32 %v2259, %v2265
        %v2270 = vadd.f32 %v2268, %v2242
        %v2271 = vadd.f32 %v2269, %v2246
        %2274 = vrot.lane.b32.xlu0 %v2242, 64
        %v2275 = vpop.permute.xlu0 %2274
        %2276 = vrot.lane.b32.xlu0 %v2246, 64
        %v2277 = vpop.permute.xlu0 %2276
        %v2280 = vadd.f32 %v2270, %v2275
        %v2281 = vadd.f32 %v2271, %v2277
        %v2282 = vadd.f32 %v2280, %v2243
        %v2283 = vadd.f32 %v2281, %v2247
        %2286 = vrot.lane.b32.xlu0 %v2243, 64
        %v2287 = vpop.permute.xlu0 %2286
        %2288 = vrot.lane.b32.xlu0 %v2247, 64
        %v2289 = vpop.permute.xlu0 %2288
        %v2292 = vadd.f32 %v2282, %v2287
        %v2293 = vadd.f32 %v2283, %v2289
        %v2294 = vadd.f32 %v2238, %v2292
        %v2295 = vadd.f32 %v2239, %v2293
        %v2296 = vld [vmem:[#allocation16] sm:$0xff]
        %v2297 = vld [vmem:[#allocation16 + $0x8] sm:$0xff]
        %v2298 = vld [vmem:[#allocation16 + $0x10] sm:$0xff]
        %v2299 = vld [vmem:[#allocation16 + $0x18] sm:$0xff]
        %v2301 = vsel %vm1918, %v1084, 0
        %v2304 = vsel %vm1918, %v1085, 0
        %2306 = vmatpush.msra.mxu0 0.0
        %2307 = vmatpush.msra.mxu0 0.0
        %2308 = vmatpush.msra.mxu0 0.0
        %2309 = vmatpush.msra.mxu0 0.0
        %2310 = vmatpush.msra.mxu0 0.0
        %2311 = vmatpush.msra.mxu0 0.0
        %2312 = vmatpush.msra.mxu0 0.0
        %2313 = vmatpush.msra.mxu0 0.0
        %2314 = vmatpush.msra.mxu0 0.0
        %2315 = vmatpush.msra.mxu0 0.0
        %2316 = vmatpush.msra.mxu0 0.0
        %2317 = vmatpush.msra.mxu0 0.0
        %2318 = vmatpush.msra.mxu0 %v2299
        %2319 = vmatpush.msra.mxu0 %v2298
        %2320 = vmatpush.msra.mxu0 %v2297
        %2321 = vmatpush.msra.mxu0 %v2296
        %2322 = vmatmul.f32.gmra.mxu0 %v2301
        %v2323 = vpop.f32.mrf.mxu0
        %v2324 = vadd.f32 0.0, %v2323
        %2325 = vmatmul.f32.gmra.mxu0 %v2304
        %v2326 = vpop.f32.mrf.mxu0
        %v2327 = vadd.f32 0.0, %v2326
        %2328 = vdwg.mxu0
        %v2329 = vadd.f32 %v1843, %v2324
        %v2330 = vadd.f32 %v1846, %v2327
        %v2332 = vsel %vm1110, %v1092, 0
        %v2335 = vsel %vm1110, %v1093, 0
        %v2338 = vsel %vm1110, %v1094, 0
        %v2341 = vsel %vm1110, %v1095, 0
        %v2344 = vsel %vm1110, %v1096, 0
        %v2347 = vsel %vm1110, %v1097, 0
        %2349 = vmatpush.msra.mxu0 0.0
        %2350 = vmatpush.msra.mxu0 0.0
        %2351 = vmatpush.msra.mxu0 0.0
        %2352 = vmatpush.msra.mxu0 0.0
        %2353 = vmatpush.msra.mxu0 0.0
        %2354 = vmatpush.msra.mxu0 0.0
        %2355 = vmatpush.msra.mxu0 0.0
        %2356 = vmatpush.msra.mxu0 0.0
        %2357 = vmatpush.msra.mxu0 0.0
        %2358 = vmatpush.msra.mxu0 0.0
        %2359 = vmatpush.msra.mxu0 0.0
        %2360 = vmatpush.msra.mxu0 0.0
        %2361 = vmatpush.msra.mxu0 0.0
        %2362 = vmatpush.msra.mxu0 0.0
        %2363 = vmatpush.msra.mxu0 %v2330
        %2364 = vmatpush.msra.mxu0 %v2329
        %2365 = vmatmul.f32.gmra.mxu0 %v2332
        %v2366 = vpop.f32.mrf.mxu0
        %v2367 = vadd.f32 0.0, %v2366
        %2368 = vmatmul.f32.gmra.mxu0 %v2335
        %v2369 = vpop.f32.mrf.mxu0
        %v2370 = vadd.f32 0.0, %v2369
        %2371 = vmatmul.f32.gmra.mxu0 %v2338
        %v2372 = vpop.f32.mrf.mxu0
        %v2373 = vadd.f32 0.0, %v2372
        %2374 = vmatmul.f32.gmra.mxu0 %v2341
        %v2375 = vpop.f32.mrf.mxu0
        %v2376 = vadd.f32 0.0, %v2375
        %2377 = vmatmul.f32.gmra.mxu0 %v2344
        %v2378 = vpop.f32.mrf.mxu0
        %v2379 = vadd.f32 0.0, %v2378
        %2380 = vmatmul.f32.gmra.mxu0 %v2347
        %v2381 = vpop.f32.mrf.mxu0
        %v2382 = vadd.f32 0.0, %v2381
        %2383 = vdwg.mxu0
        %v2384 = vld [vmem:[#allocation17] sm:$0x1]
        %v2385 = vld [vmem:[%s13] sm:$0xff]
        %v2386 = vld [vmem:[%s13 + $0x8] sm:$0xff]
        %v2387 = vld [vmem:[%s13 + $0x10] sm:$0xff]
        %v2388 = vld [vmem:[%s13 + $0x18] sm:$0xff]
        %v2389 = vld [vmem:[%s13 + $0x20] sm:$0xff]
        %v2390 = vld [vmem:[%s13 + $0x28] sm:$0xff]
        %v2391 = vld [vmem:[%s13 + $0x30] sm:$0xff]
        %v2392 = vld [vmem:[%s13 + $0x38] sm:$0xff]
        %vm2393 = vcmask 523264
        %v2395 = vsel %vm2393, %v2367, 0
        %v2398 = vsel %vm2393, %v2370, 0
        %2400 = vmatpush.msra.mxu0 0.0
        %2401 = vmatpush.msra.mxu0 0.0
        %2402 = vmatpush.msra.mxu0 0.0
        %2403 = vmatpush.msra.mxu0 0.0
        %2404 = vmatpush.msra.mxu0 0.0
        %2405 = vmatpush.msra.mxu0 0.0
        %2406 = vmatpush.msra.mxu0 0.0
        %2407 = vmatpush.msra.mxu0 0.0
        %2408 = vmatpush.msra.mxu0 %v2392
        %2409 = vmatpush.msra.mxu0 %v2391
        %2410 = vmatpush.msra.mxu0 %v2390
        %2411 = vmatpush.msra.mxu0 %v2389
        %2412 = vmatpush.msra.mxu0 %v2388
        %2413 = vmatpush.msra.mxu0 %v2387
        %2414 = vmatpush.msra.mxu0 %v2386
        %2415 = vmatpush.msra.mxu0 %v2385
        %2416 = vmatmul.f32.gmra.mxu0 %v2395
        %v2417 = vpop.f32.mrf.mxu0
        %v2418 = vadd.f32 0.0, %v2417
        %2419 = vmatmul.f32.gmra.mxu0 %v2398
        %v2420 = vpop.f32.mrf.mxu0
        %v2421 = vadd.f32 0.0, %v2420
        %2422 = vdwg.mxu0
        %v2424 = vperm.slane %v2384, 0
        %v2426 = vadd.f32 %v2424, %v2418
        %v2427 = vadd.f32 %v2424, %v2421
        %s2428 = scalar_lea.vmem %s13, 64
        %v2429 = vld [vmem:[%s2428] sm:$0xff]
        %v2430 = vld [vmem:[%s2428 + $0x8] sm:$0xff]
        %v2431 = vld [vmem:[%s2428 + $0x10] sm:$0xff]
        %v2432 = vld [vmem:[%s2428 + $0x18] sm:$0xff]
        %v2433 = vld [vmem:[%s2428 + $0x20] sm:$0xff]
        %v2434 = vld [vmem:[%s2428 + $0x28] sm:$0xff]
        %v2435 = vld [vmem:[%s2428 + $0x30] sm:$0xff]
        %v2436 = vld [vmem:[%s2428 + $0x38] sm:$0xff]
        %v2438 = vsel %vm2393, %v2373, 0
        %v2441 = vsel %vm2393, %v2376, 0
        %2443 = vmatpush.msra.mxu0 0.0
        %2444 = vmatpush.msra.mxu0 0.0
        %2445 = vmatpush.msra.mxu0 0.0
        %2446 = vmatpush.msra.mxu0 0.0
        %2447 = vmatpush.msra.mxu0 0.0
        %2448 = vmatpush.msra.mxu0 0.0
        %2449 = vmatpush.msra.mxu0 0.0
        %2450 = vmatpush.msra.mxu0 0.0
        %2451 = vmatpush.msra.mxu0 %v2436
        %2452 = vmatpush.msra.mxu0 %v2435
        %2453 = vmatpush.msra.mxu0 %v2434
        %2454 = vmatpush.msra.mxu0 %v2433
        %2455 = vmatpush.msra.mxu0 %v2432
        %2456 = vmatpush.msra.mxu0 %v2431
        %2457 = vmatpush.msra.mxu0 %v2430
        %2458 = vmatpush.msra.mxu0 %v2429
        %2459 = vmatmul.f32.gmra.mxu0 %v2438
        %v2460 = vpop.f32.mrf.mxu0
        %v2461 = vadd.f32 0.0, %v2460
        %2462 = vmatmul.f32.gmra.mxu0 %v2441
        %v2463 = vpop.f32.mrf.mxu0
        %v2464 = vadd.f32 0.0, %v2463
        %2465 = vdwg.mxu0
        %v2466 = vadd.f32 %v2426, %v2461
        %v2467 = vadd.f32 %v2427, %v2464
        %s2468 = scalar_lea.vmem %s13, 128
        %v2469 = vld [vmem:[%s2468] sm:$0xff]
        %v2470 = vld [vmem:[%s2468 + $0x8] sm:$0xff]
        %v2471 = vld [vmem:[%s2468 + $0x10] sm:$0xff]
        %v2472 = vld [vmem:[%s2468 + $0x18] sm:$0xff]
        %v2473 = vld [vmem:[%s2468 + $0x20] sm:$0xff]
        %v2474 = vld [vmem:[%s2468 + $0x28] sm:$0xff]
        %v2475 = vld [vmem:[%s2468 + $0x30] sm:$0xff]
        %v2476 = vld [vmem:[%s2468 + $0x38] sm:$0xff]
        %v2478 = vsel %vm2393, %v2379, 0
        %v2481 = vsel %vm2393, %v2382, 0
        %2483 = vmatpush.msra.mxu0 0.0
        %2484 = vmatpush.msra.mxu0 0.0
        %2485 = vmatpush.msra.mxu0 0.0
        %2486 = vmatpush.msra.mxu0 0.0
        %2487 = vmatpush.msra.mxu0 0.0
        %2488 = vmatpush.msra.mxu0 0.0
        %2489 = vmatpush.msra.mxu0 0.0
        %2490 = vmatpush.msra.mxu0 0.0
        %2491 = vmatpush.msra.mxu0 %v2476
        %2492 = vmatpush.msra.mxu0 %v2475
        %2493 = vmatpush.msra.mxu0 %v2474
        %2494 = vmatpush.msra.mxu0 %v2473
        %2495 = vmatpush.msra.mxu0 %v2472
        %2496 = vmatpush.msra.mxu0 %v2471
        %2497 = vmatpush.msra.mxu0 %v2470
        %2498 = vmatpush.msra.mxu0 %v2469
        %2499 = vmatmul.f32.gmra.mxu0 %v2478
        %v2500 = vpop.f32.mrf.mxu0
        %v2501 = vadd.f32 0.0, %v2500
        %2502 = vmatmul.f32.gmra.mxu0 %v2481
        %v2503 = vpop.f32.mrf.mxu0
        %v2504 = vadd.f32 0.0, %v2503
        %2505 = vdwg.mxu0
        %v2506 = vadd.f32 %v2466, %v2501
        %v2507 = vadd.f32 %v2467, %v2504
        %vm2508 = vcmp.ge.f32.partialorder %v2294, 0.0
        %vm2509 = vcmp.ge.f32.partialorder %v2295, 0.0
        %v2510 = vmul.f32 %v2294, 0.01
        %v2511 = vmul.f32 %v2295, 0.01
        %v2512 = vsel %vm2508, %v2294, %v2510
        %v2513 = vsel %vm2509, %v2295, %v2511
        %vm2514 = vcmp.ge.f32.partialorder %v2506, 0.0
        %vm2515 = vcmp.ge.f32.partialorder %v2507, 0.0
        %v2516 = vmul.f32 %v2506, 0.01
        %v2517 = vmul.f32 %v2507, 0.01
        %v2518 = vsel %vm2514, %v2506, %v2516
        %v2519 = vsel %vm2515, %v2507, %v2517
        %v2520 = vld [vmem:[#allocation19] sm:$0xf]
        %v2521 = vld [vmem:[%s16] sm:$0xf]
        %v2522 = vsel %vm2393, %v2512, 0.0
        %v2523 = vsel %vm2393, %v2513, 0.0
        %v2524 = vadd.f32 %v2522, %v2523
        %v2525 = vrot.slane %v2524, 4
        %v2526 = vadd.f32 %v2524, %v2525
        %v2527 = vrot.slane %v2526, 2
        %v2528 = vadd.f32 %v2526, %v2527
        %v2529 = vrot.slane %v2528, 1
        %v2530 = vadd.f32 %v2528, %v2529
        %v2531 = vrcp.pop 16.0
        %v2532 = vmul.f32 16.0, %v2531
        %v2533 = vsub.f32 1.0, %v2532
        %v2534 = vmul.f32 %v2531, %v2533
        %v2535 = vadd.f32 %v2531, %v2534
        %vm2536 = vweird.f32 %v2531
        %v2537 = vsel %vm2536, %v2531, %v2535
        %v2538 = vmul.f32 %v2530, %v2537
        %v2539 = vmul.f32 %v2538, %v2520
        %vm2540 = vcmask 519168
        %v2541 = vsel %vm2540, %v2539, 0.0
        %2542 = vadd.xlane.f32.xlu0 %v2541
        %v2543 = vpop.xlane.xlu0 %2542
        %v2544 = vmax.f32 %v2543, 0.0
        %v2545 = vmul.f32 %v2544, %v2521
        %vm2546 = vcmask 3072
        %v2547 = vsel %vm2546, %v2545, 0.0
        %v2548 = vrot.slane %v2547, 4
        %v2549 = vadd.f32 %v2547, %v2548
        %v2550 = vrot.slane %v2549, 2
        %v2551 = vadd.f32 %v2549, %v2550
        %v2552 = vrot.slane %v2551, 1
        %v2553 = vadd.f32 %v2551, %v2552
        %v2554 = vxor.u32 %v2553, 2147483648
        %v2555 = vmul.f32 %v2554, 1.442695
        %v2556 = vpow.pop %v2555
        %v2557 = vadd.f32 %v2556, 1.0
        %v2558 = vrcp.pop %v2557
        %v2559 = vmul.f32 %v2557, %v2558
        %v2560 = vsub.f32 1.0, %v2559
        %v2561 = vmul.f32 %v2558, %v2560
        %v2562 = vadd.f32 %v2558, %v2561
        %vm2563 = vweird.f32 %v2557
        %vm2564 = vweird.f32 %v2558
        %vm2565 = vmor %vm2563, %vm2564
        %v2566 = vsel %vm2565, %v2558, %v2562
        %v2567 = vand.u32 2147483647, %v2557
        %vm2568 = vcmp.eq.f32.partialorder %v2567, 8.507059e+37
        %v2569 = vand.u32 %v2557, 2147483648
        %v2570 = vor.u32 1.1754944e-38, %v2569
        %v2571 = vsel %vm2568, %v2570, %v2566
        %v2572 = vmul.f32 1.0, %v2571
        %2574 = vset.pattern.permute.xlu0 0
        %2575 = vperm.xlu0 %2574, %v2572
        %v2576 = vpop.permute.xlu0 %2575
        %v2578 = vmul.f32 %v2512, %v2576
        %v2579 = vmul.f32 %v2513, %v2576
        %v2580 = vld [vmem:[#allocation20] sm:$0xf]
        %v2581 = vld [vmem:[%s18] sm:$0xf]
        %v2582 = vsel %vm2393, %v2518, 0.0
        %v2583 = vsel %vm2393, %v2519, 0.0
        %v2584 = vadd.f32 %v2582, %v2583
        %v2585 = vrot.slane %v2584, 4
        %v2586 = vadd.f32 %v2584, %v2585
        %v2587 = vrot.slane %v2586, 2
        %v2588 = vadd.f32 %v2586, %v2587
        %v2589 = vrot.slane %v2588, 1
        %v2590 = vadd.f32 %v2588, %v2589
        %v2591 = vmul.f32 %v2590, %v2537
        %v2592 = vmul.f32 %v2591, %v2580
        %v2593 = vsel %vm2540, %v2592, 0.0
        %2594 = vadd.xlane.f32.xlu0 %v2593
        %v2595 = vpop.xlane.xlu0 %2594
        %v2596 = vmax.f32 %v2595, 0.0
        %v2597 = vmul.f32 %v2596, %v2581
        %v2598 = vsel %vm2546, %v2597, 0.0
        %v2599 = vrot.slane %v2598, 4
        %v2600 = vadd.f32 %v2598, %v2599
        %v2601 = vrot.slane %v2600, 2
        %v2602 = vadd.f32 %v2600, %v2601
        %v2603 = vrot.slane %v2602, 1
        %v2604 = vadd.f32 %v2602, %v2603
        %v2605 = vxor.u32 %v2604, 2147483648
        %v2606 = vmul.f32 %v2605, 1.442695
        %v2607 = vpow.pop %v2606
        %v2608 = vadd.f32 %v2607, 1.0
        %v2609 = vrcp.pop %v2608
        %v2610 = vmul.f32 %v2608, %v2609
        %v2611 = vsub.f32 1.0, %v2610
        %v2612 = vmul.f32 %v2609, %v2611
        %v2613 = vadd.f32 %v2609, %v2612
        %vm2614 = vweird.f32 %v2608
        %vm2615 = vweird.f32 %v2609
        %vm2616 = vmor %vm2614, %vm2615
        %v2617 = vsel %vm2616, %v2609, %v2613
        %v2618 = vand.u32 2147483647, %v2608
        %vm2619 = vcmp.eq.f32.partialorder %v2618, 8.507059e+37
        %v2620 = vand.u32 %v2608, 2147483648
        %v2621 = vor.u32 1.1754944e-38, %v2620
        %v2622 = vsel %vm2619, %v2621, %v2617
        %v2623 = vmul.f32 1.0, %v2622
        %2625 = vset.pattern.permute.xlu0 0
        %2626 = vperm.xlu0 %2625, %v2623
        %v2627 = vpop.permute.xlu0 %2626
        %v2629 = vmul.f32 %v2518, %v2627
        %v2630 = vmul.f32 %v2519, %v2627
        %v2631 = vadd.f32 %v2578, %v2629
        %v2632 = vadd.f32 %v2579, %v2630
        %v2633 = vxor.u32 %v2631, 2147483648
        %v2634 = vxor.u32 %v2632, 2147483648
        %v2635 = vmul.f32 %v2633, 1.442695
        %v2636 = vpow.pop %v2635
        %v2637 = vmul.f32 %v2634, 1.442695
        %v2638 = vpow.pop %v2637
        %v2639 = vadd.f32 %v2636, 1.0
        %v2640 = vadd.f32 %v2638, 1.0
        %v2641 = vrcp.pop %v2639
        %v2642 = vmul.f32 %v2639, %v2641
        %v2643 = vsub.f32 1.0, %v2642
        %v2644 = vmul.f32 %v2641, %v2643
        %v2645 = vadd.f32 %v2641, %v2644
        %vm2646 = vweird.f32 %v2639
        %vm2647 = vweird.f32 %v2641
        %vm2648 = vmor %vm2646, %vm2647
        %v2649 = vsel %vm2648, %v2641, %v2645
        %v2650 = vand.u32 2147483647, %v2639
        %vm2651 = vcmp.eq.f32.partialorder %v2650, 8.507059e+37
        %v2652 = vand.u32 %v2639, 2147483648
        %v2653 = vor.u32 1.1754944e-38, %v2652
        %v2654 = vsel %vm2651, %v2653, %v2649
        %v2655 = vmul.f32 1.0, %v2654
        %v2656 = vrcp.pop %v2640
        %v2657 = vmul.f32 %v2640, %v2656
        %v2658 = vsub.f32 1.0, %v2657
        %v2659 = vmul.f32 %v2656, %v2658
        %v2660 = vadd.f32 %v2656, %v2659
        %vm2661 = vweird.f32 %v2640
        %vm2662 = vweird.f32 %v2656
        %vm2663 = vmor %vm2661, %vm2662
        %v2664 = vsel %vm2663, %v2656, %v2660
        %v2665 = vand.u32 2147483647, %v2640
        %vm2666 = vcmp.eq.f32.partialorder %v2665, 8.507059e+37
        %v2667 = vand.u32 %v2640, 2147483648
        %v2668 = vor.u32 1.1754944e-38, %v2667
        %v2669 = vsel %vm2666, %v2668, %v2664
        %v2670 = vmul.f32 1.0, %v2669
        %v2671 = vmul.f32 %v2655, %v1084
        %v2672 = vmul.f32 %v2670, %v1085
        %v2673 = vld [vmem:[#allocation10] sm:$0xff]
        %v2674 = vld [vmem:[#allocation10 + $0x8] sm:$0xff]
        %2675 = vmatpush.msra.mxu0 0.0
        %2676 = vmatpush.msra.mxu0 0.0
        %2677 = vmatpush.msra.mxu0 0.0
        %2678 = vmatpush.msra.mxu0 0.0
        %2679 = vmatpush.msra.mxu0 0.0
        %2680 = vmatpush.msra.mxu0 0.0
        %2681 = vmatpush.msra.mxu0 0.0
        %2682 = vmatpush.msra.mxu0 0.0
        %2683 = vmatpush.msra.mxu0 0.0
        %2684 = vmatpush.msra.mxu0 0.0
        %2685 = vmatpush.msra.mxu0 0.0
        %2686 = vmatpush.msra.mxu0 0.0
        %2687 = vmatpush.msra.mxu0 0.0
        %2688 = vmatpush.msra.mxu0 0.0
        %2689 = vmatpush.msra.mxu0 %v2672
        %2690 = vmatpush.msra.mxu0 %v2671
        %2691 = vmatmul.f32.gmra.mxu0 %v1112
        %v2692 = vpop.f32.mrf.mxu0
        %v2693 = vadd.f32 0.0, %v2692
        %2694 = vmatmul.f32.gmra.mxu0 %v1115
        %v2695 = vpop.f32.mrf.mxu0
        %v2696 = vadd.f32 0.0, %v2695
        %2697 = vmatmul.f32.gmra.mxu0 %v1118
        %v2698 = vpop.f32.mrf.mxu0
        %v2699 = vadd.f32 0.0, %v2698
        %2700 = vmatmul.f32.gmra.mxu0 %v1121
        %v2701 = vpop.f32.mrf.mxu0
        %v2702 = vadd.f32 0.0, %v2701
        %2703 = vmatmul.f32.gmra.mxu0 %v1124
        %v2704 = vpop.f32.mrf.mxu0
        %v2705 = vadd.f32 0.0, %v2704
        %2706 = vmatmul.f32.gmra.mxu0 %v1127
        %v2707 = vpop.f32.mrf.mxu0
        %v2708 = vadd.f32 0.0, %v2707
        %2709 = vdwg.mxu0
        %v2710 = vld [vmem:[#allocation22] sm:$0xff]
        %v2711 = vld [vmem:[#allocation22 + $0x8] sm:$0xff]
        %v2712 = vld [vmem:[#allocation22 + $0x10] sm:$0xff]
        %v2713 = vld [vmem:[#allocation22 + $0x18] sm:$0xff]
        %v2714 = vld [vmem:[#allocation22 + $0x20] sm:$0xff]
        %v2715 = vld [vmem:[#allocation22 + $0x28] sm:$0xff]
        %v2716 = vld [vmem:[#allocation22 + $0x30] sm:$0xff]
        %v2717 = vld [vmem:[#allocation22 + $0x38] sm:$0xff]
        %s2718 = scalar_lea.vmem [#allocation22], 64
        %v2719 = vld [vmem:[%s2718] sm:$0xff]
        %v2720 = vld [vmem:[%s2718 + $0x8] sm:$0xff]
        %v2721 = vld [vmem:[%s2718 + $0x10] sm:$0xff]
        %v2722 = vld [vmem:[%s2718 + $0x18] sm:$0xff]
        %v2723 = vld [vmem:[%s2718 + $0x20] sm:$0xff]
        %v2724 = vld [vmem:[%s2718 + $0x28] sm:$0xff]
        %v2725 = vld [vmem:[%s2718 + $0x30] sm:$0xff]
        %v2726 = vld [vmem:[%s2718 + $0x38] sm:$0xff]
        %v2728 = vsel %vm1918, %v2699, 0
        %v2731 = vsel %vm1918, %v2702, 0
        %2733 = vmatpush.msra.mxu0 0.0
        %2734 = vmatpush.msra.mxu0 0.0
        %2735 = vmatpush.msra.mxu0 0.0
        %2736 = vmatpush.msra.mxu0 0.0
        %2737 = vmatpush.msra.mxu0 0.0
        %2738 = vmatpush.msra.mxu0 0.0
        %2739 = vmatpush.msra.mxu0 0.0
        %2740 = vmatpush.msra.mxu0 0.0
        %2741 = vmatpush.msra.mxu0 0.0
        %2742 = vmatpush.msra.mxu0 0.0
        %2743 = vmatpush.msra.mxu0 0.0
        %2744 = vmatpush.msra.mxu0 0.0
        %2745 = vmatpush.msra.mxu0 %v2725
        %2746 = vmatpush.msra.mxu0 %v2723
        %2747 = vmatpush.msra.mxu0 %v2721
        %2748 = vmatpush.msra.mxu0 %v2719
        %2749 = vmatmul.f32.gmra.mxu0 %v2728
        %v2750 = vpop.f32.mrf.mxu0
        %v2751 = vadd.f32 0.0, %v2750
        %2752 = vmatmul.f32.gmra.mxu0 %v2731
        %v2753 = vpop.f32.mrf.mxu0
        %v2754 = vadd.f32 0.0, %v2753
        %2755 = vdwg.mxu0
        %2756 = vmatpush.msra.mxu0 0.0
        %2757 = vmatpush.msra.mxu0 0.0
        %2758 = vmatpush.msra.mxu0 0.0
        %2759 = vmatpush.msra.mxu0 0.0
        %2760 = vmatpush.msra.mxu0 0.0
        %2761 = vmatpush.msra.mxu0 0.0
        %2762 = vmatpush.msra.mxu0 0.0
        %2763 = vmatpush.msra.mxu0 0.0
        %2764 = vmatpush.msra.mxu0 0.0
        %2765 = vmatpush.msra.mxu0 0.0
        %2766 = vmatpush.msra.mxu0 0.0
        %2767 = vmatpush.msra.mxu0 0.0
        %2768 = vmatpush.msra.mxu0 %v2726
        %2769 = vmatpush.msra.mxu0 %v2724
        %2770 = vmatpush.msra.mxu0 %v2722
        %2771 = vmatpush.msra.mxu0 %v2720
        %2772 = vmatmul.f32.gmra.mxu0 %v2728
        %v2773 = vpop.f32.mrf.mxu0
        %v2774 = vadd.f32 0.0, %v2773
        %2775 = vmatmul.f32.gmra.mxu0 %v2731
        %v2776 = vpop.f32.mrf.mxu0
        %v2777 = vadd.f32 0.0, %v2776
        %2778 = vdwg.mxu0
        %v2780 = vsel %vm1918, %v2693, 0
        %v2783 = vsel %vm1918, %v2696, 0
        %2785 = vmatpush.msra.mxu0 0.0
        %2786 = vmatpush.msra.mxu0 0.0
        %2787 = vmatpush.msra.mxu0 0.0
        %2788 = vmatpush.msra.mxu0 0.0
        %2789 = vmatpush.msra.mxu0 0.0
        %2790 = vmatpush.msra.mxu0 0.0
        %2791 = vmatpush.msra.mxu0 0.0
        %2792 = vmatpush.msra.mxu0 0.0
        %2793 = vmatpush.msra.mxu0 0.0
        %2794 = vmatpush.msra.mxu0 0.0
        %2795 = vmatpush.msra.mxu0 0.0
        %2796 = vmatpush.msra.mxu0 0.0
        %2797 = vmatpush.msra.mxu0 %v2716
        %2798 = vmatpush.msra.mxu0 %v2714
        %2799 = vmatpush.msra.mxu0 %v2712
        %2800 = vmatpush.msra.mxu0 %v2710
        %2801 = vmatmul.f32.gmra.mxu0 %v2780
        %v2802 = vpop.f32.mrf.mxu0
        %v2803 = vadd.f32 %v2751, %v2802
        %2804 = vmatmul.f32.gmra.mxu0 %v2783
        %v2805 = vpop.f32.mrf.mxu0
        %v2806 = vadd.f32 %v2754, %v2805
        %2807 = vdwg.mxu0
        %2808 = vmatpush.msra.mxu0 0.0
        %2809 = vmatpush.msra.mxu0 0.0
        %2810 = vmatpush.msra.mxu0 0.0
        %2811 = vmatpush.msra.mxu0 0.0
        %2812 = vmatpush.msra.mxu0 0.0
        %2813 = vmatpush.msra.mxu0 0.0
        %2814 = vmatpush.msra.mxu0 0.0
        %2815 = vmatpush.msra.mxu0 0.0
        %2816 = vmatpush.msra.mxu0 0.0
        %2817 = vmatpush.msra.mxu0 0.0
        %2818 = vmatpush.msra.mxu0 0.0
        %2819 = vmatpush.msra.mxu0 0.0
        %2820 = vmatpush.msra.mxu0 %v2717
        %2821 = vmatpush.msra.mxu0 %v2715
        %2822 = vmatpush.msra.mxu0 %v2713
        %2823 = vmatpush.msra.mxu0 %v2711
        %2824 = vmatmul.f32.gmra.mxu0 %v2780
        %v2825 = vpop.f32.mrf.mxu0
        %v2826 = vadd.f32 %v2774, %v2825
        %2827 = vmatmul.f32.gmra.mxu0 %v2783
        %v2828 = vpop.f32.mrf.mxu0
        %v2829 = vadd.f32 %v2777, %v2828
        %2830 = vdwg.mxu0
        %s2831 = scalar_lea.vmem [#allocation22], 128
        %v2832 = vld [vmem:[%s2831] sm:$0xff]
        %v2833 = vld [vmem:[%s2831 + $0x8] sm:$0xff]
        %v2834 = vld [vmem:[%s2831 + $0x10] sm:$0xff]
        %v2835 = vld [vmem:[%s2831 + $0x18] sm:$0xff]
        %v2836 = vld [vmem:[%s2831 + $0x20] sm:$0xff]
        %v2837 = vld [vmem:[%s2831 + $0x28] sm:$0xff]
        %v2838 = vld [vmem:[%s2831 + $0x30] sm:$0xff]
        %v2839 = vld [vmem:[%s2831 + $0x38] sm:$0xff]
        %v2841 = vsel %vm1918, %v2705, 0
        %v2844 = vsel %vm1918, %v2708, 0
        %2846 = vmatpush.msra.mxu0 0.0
        %2847 = vmatpush.msra.mxu0 0.0
        %2848 = vmatpush.msra.mxu0 0.0
        %2849 = vmatpush.msra.mxu0 0.0
        %2850 = vmatpush.msra.mxu0 0.0
        %2851 = vmatpush.msra.mxu0 0.0
        %2852 = vmatpush.msra.mxu0 0.0
        %2853 = vmatpush.msra.mxu0 0.0
        %2854 = vmatpush.msra.mxu0 0.0
        %2855 = vmatpush.msra.mxu0 0.0
        %2856 = vmatpush.msra.mxu0 0.0
        %2857 = vmatpush.msra.mxu0 0.0
        %2858 = vmatpush.msra.mxu0 %v2838
        %2859 = vmatpush.msra.mxu0 %v2836
        %2860 = vmatpush.msra.mxu0 %v2834
        %2861 = vmatpush.msra.mxu0 %v2832
        %2862 = vmatmul.f32.gmra.mxu0 %v2841
        %v2863 = vpop.f32.mrf.mxu0
        %v2864 = vadd.f32 0.0, %v2863
        %2865 = vmatmul.f32.gmra.mxu0 %v2844
        %v2866 = vpop.f32.mrf.mxu0
        %v2867 = vadd.f32 0.0, %v2866
        %2868 = vdwg.mxu0
        %2869 = vmatpush.msra.mxu0 0.0
        %2870 = vmatpush.msra.mxu0 0.0
        %2871 = vmatpush.msra.mxu0 0.0
        %2872 = vmatpush.msra.mxu0 0.0
        %2873 = vmatpush.msra.mxu0 0.0
        %2874 = vmatpush.msra.mxu0 0.0
        %2875 = vmatpush.msra.mxu0 0.0
        %2876 = vmatpush.msra.mxu0 0.0
        %2877 = vmatpush.msra.mxu0 0.0
        %2878 = vmatpush.msra.mxu0 0.0
        %2879 = vmatpush.msra.mxu0 0.0
        %2880 = vmatpush.msra.mxu0 0.0
        %2881 = vmatpush.msra.mxu0 %v2839
        %2882 = vmatpush.msra.mxu0 %v2837
        %2883 = vmatpush.msra.mxu0 %v2835
        %2884 = vmatpush.msra.mxu0 %v2833
        %2885 = vmatmul.f32.gmra.mxu0 %v2841
        %v2886 = vpop.f32.mrf.mxu0
        %v2887 = vadd.f32 0.0, %v2886
        %2888 = vmatmul.f32.gmra.mxu0 %v2844
        %v2889 = vpop.f32.mrf.mxu0
        %v2890 = vadd.f32 0.0, %v2889
        %2891 = vdwg.mxu0
        %v2892 = vadd.f32 %v2803, %v2864
        %v2893 = vadd.f32 %v2826, %v2887
        %v2894 = vadd.f32 %v2806, %v2867
        %v2895 = vadd.f32 %v2829, %v2890
        %v2896 = vadd.f32 %v2673, %v1809
        %v2897 = vadd.f32 %v2674, %v1810
        %v2898 = vmul.f32 %v2892, %v1106
        %v2899 = vmul.f32 %v2893, %v1107
        %v2900 = vmul.f32 %v2894, %v1108
        %v2901 = vmul.f32 %v2895, %v1109
        %2904 = vrot.lane.b32.xlu0 %v2898, 96
        %v2905 = vpop.permute.xlu0 %2904
        %2906 = vrot.lane.b32.xlu0 %v2900, 96
        %v2907 = vpop.permute.xlu0 %2906
        %v2910 = vadd.f32 %v2898, %v2905
        %v2911 = vadd.f32 %v2900, %v2907
        %2912 = vrot.lane.b32.xlu0 %v2898, 64
        %v2913 = vpop.permute.xlu0 %2912
        %2914 = vrot.lane.b32.xlu0 %v2900, 64
        %v2915 = vpop.permute.xlu0 %2914
        %v2918 = vadd.f32 %v2910, %v2913
        %v2919 = vadd.f32 %v2911, %v2915
        %2920 = vrot.lane.b32.xlu0 %v2898, 32
        %v2921 = vpop.permute.xlu0 %2920
        %2922 = vrot.lane.b32.xlu0 %v2900, 32
        %v2923 = vpop.permute.xlu0 %2922
        %v2926 = vadd.f32 %v2918, %v2921
        %v2927 = vadd.f32 %v2919, %v2923
        %v2928 = vadd.f32 %v2926, %v2899
        %v2929 = vadd.f32 %v2927, %v2901
        %2932 = vrot.lane.b32.xlu0 %v2899, 96
        %v2933 = vpop.permute.xlu0 %2932
        %2934 = vrot.lane.b32.xlu0 %v2901, 96
        %v2935 = vpop.permute.xlu0 %2934
        %v2938 = vadd.f32 %v2928, %v2933
        %v2939 = vadd.f32 %v2929, %v2935
        %2940 = vrot.lane.b32.xlu0 %v2899, 64
        %v2941 = vpop.permute.xlu0 %2940
        %2942 = vrot.lane.b32.xlu0 %v2901, 64
        %v2943 = vpop.permute.xlu0 %2942
        %v2946 = vadd.f32 %v2938, %v2941
        %v2947 = vadd.f32 %v2939, %v2943
        %2948 = vrot.lane.b32.xlu0 %v2899, 32
        %v2949 = vpop.permute.xlu0 %2948
        %2950 = vrot.lane.b32.xlu0 %v2901, 32
        %v2951 = vpop.permute.xlu0 %2950
        %v2954 = vadd.f32 %v2946, %v2949
        %v2955 = vadd.f32 %v2947, %v2951
        %v2956 = vadd.f32 %v2896, %v2954
        %v2957 = vadd.f32 %v2897, %v2955
        %v2958 = vld [vmem:[#allocation23] sm:$0xff]
        %v2959 = vld [vmem:[#allocation23 + $0x8] sm:$0xff]
        %v2960 = vld [vmem:[#allocation23 + $0x10] sm:$0xff]
        %v2961 = vld [vmem:[#allocation23 + $0x18] sm:$0xff]
        %v2963 = vsel %vm1918, %v2671, 0
        %v2966 = vsel %vm1918, %v2672, 0
        %2968 = vmatpush.msra.mxu0 0.0
        %2969 = vmatpush.msra.mxu0 0.0
        %2970 = vmatpush.msra.mxu0 0.0
        %2971 = vmatpush.msra.mxu0 0.0
        %2972 = vmatpush.msra.mxu0 0.0
        %2973 = vmatpush.msra.mxu0 0.0
        %2974 = vmatpush.msra.mxu0 0.0
        %2975 = vmatpush.msra.mxu0 0.0
        %2976 = vmatpush.msra.mxu0 0.0
        %2977 = vmatpush.msra.mxu0 0.0
        %2978 = vmatpush.msra.mxu0 0.0
        %2979 = vmatpush.msra.mxu0 0.0
        %2980 = vmatpush.msra.mxu0 %v2961
        %2981 = vmatpush.msra.mxu0 %v2960
        %2982 = vmatpush.msra.mxu0 %v2959
        %2983 = vmatpush.msra.mxu0 %v2958
        %2984 = vmatmul.f32.gmra.mxu0 %v2963
        %v2985 = vpop.f32.mrf.mxu0
        %v2986 = vadd.f32 0.0, %v2985
        %2987 = vmatmul.f32.gmra.mxu0 %v2966
        %v2988 = vpop.f32.mrf.mxu0
        %v2989 = vadd.f32 0.0, %v2988
        %2990 = vdwg.mxu0
        %2993 = vrot.lane.b32.xlu0 %v2986, 64
        %v2994 = vpop.permute.xlu0 %2993
        %2995 = vrot.lane.b32.xlu0 %v2989, 64
        %v2996 = vpop.permute.xlu0 %2995
        %v2999 = vadd.f32 %v1843, %v2994
        %v3000 = vadd.f32 %v1846, %v2996
        %3003 = vrot.lane.b32.xlu0 %v2999, 64
        %v3004 = vpop.permute.xlu0 %3003
        %3005 = vrot.lane.b32.xlu0 %v3000, 64
        %v3006 = vpop.permute.xlu0 %3005
        %3009 = vmatpush.msra.mxu0 0.0
        %3010 = vmatpush.msra.mxu0 0.0
        %3011 = vmatpush.msra.mxu0 0.0
        %3012 = vmatpush.msra.mxu0 0.0
        %3013 = vmatpush.msra.mxu0 0.0
        %3014 = vmatpush.msra.mxu0 0.0
        %3015 = vmatpush.msra.mxu0 0.0
        %3016 = vmatpush.msra.mxu0 0.0
        %3017 = vmatpush.msra.mxu0 0.0
        %3018 = vmatpush.msra.mxu0 0.0
        %3019 = vmatpush.msra.mxu0 0.0
        %3020 = vmatpush.msra.mxu0 0.0
        %3021 = vmatpush.msra.mxu0 0.0
        %3022 = vmatpush.msra.mxu0 0.0
        %3023 = vmatpush.msra.mxu0 %v3006
        %3024 = vmatpush.msra.mxu0 %v3004
        %3025 = vmatmul.f32.gmra.mxu0 %v2332
        %v3026 = vpop.f32.mrf.mxu0
        %v3027 = vadd.f32 0.0, %v3026
        %3028 = vmatmul.f32.gmra.mxu0 %v2335
        %v3029 = vpop.f32.mrf.mxu0
        %v3030 = vadd.f32 0.0, %v3029
        %3031 = vmatmul.f32.gmra.mxu0 %v2338
        %v3032 = vpop.f32.mrf.mxu0
        %v3033 = vadd.f32 0.0, %v3032
        %3034 = vmatmul.f32.gmra.mxu0 %v2341
        %v3035 = vpop.f32.mrf.mxu0
        %v3036 = vadd.f32 0.0, %v3035
        %3037 = vmatmul.f32.gmra.mxu0 %v2344
        %v3038 = vpop.f32.mrf.mxu0
        %v3039 = vadd.f32 0.0, %v3038
        %3040 = vmatmul.f32.gmra.mxu0 %v2347
        %v3041 = vpop.f32.mrf.mxu0
        %v3042 = vadd.f32 0.0, %v3041
        %3043 = vdwg.mxu0
        %v3044 = vld [vmem:[%s22] sm:$0x1]
        %v3045 = vld [vmem:[#allocation25] sm:$0xff]
        %v3046 = vld [vmem:[#allocation25 + $0x8] sm:$0xff]
        %v3047 = vld [vmem:[#allocation25 + $0x10] sm:$0xff]
        %v3048 = vld [vmem:[#allocation25 + $0x18] sm:$0xff]
        %v3050 = vsel %vm1918, %v3027, 0
        %v3053 = vsel %vm1918, %v3030, 0
        %3055 = vmatpush.msra.mxu0 0.0
        %3056 = vmatpush.msra.mxu0 0.0
        %3057 = vmatpush.msra.mxu0 0.0
        %3058 = vmatpush.msra.mxu0 0.0
        %3059 = vmatpush.msra.mxu0 0.0
        %3060 = vmatpush.msra.mxu0 0.0
        %3061 = vmatpush.msra.mxu0 0.0
        %3062 = vmatpush.msra.mxu0 0.0
        %3063 = vmatpush.msra.mxu0 0.0
        %3064 = vmatpush.msra.mxu0 0.0
        %3065 = vmatpush.msra.mxu0 0.0
        %3066 = vmatpush.msra.mxu0 0.0
        %3067 = vmatpush.msra.mxu0 %v3048
        %3068 = vmatpush.msra.mxu0 %v3047
        %3069 = vmatpush.msra.mxu0 %v3046
        %3070 = vmatpush.msra.mxu0 %v3045
        %3071 = vmatmul.f32.gmra.mxu0 %v3050
        %v3072 = vpop.f32.mrf.mxu0
        %v3073 = vadd.f32 0.0, %v3072
        %3074 = vmatmul.f32.gmra.mxu0 %v3053
        %v3075 = vpop.f32.mrf.mxu0
        %v3076 = vadd.f32 0.0, %v3075
        %3077 = vdwg.mxu0
        %v3079 = vperm.slane %v3044, 0
        %v3081 = vadd.f32 %v3079, %v3073
        %v3082 = vadd.f32 %v3079, %v3076
        %s3083 = scalar_lea.vmem [#allocation25], 32
        %v3084 = vld [vmem:[%s3083] sm:$0xff]
        %v3085 = vld [vmem:[%s3083 + $0x8] sm:$0xff]
        %v3086 = vld [vmem:[%s3083 + $0x10] sm:$0xff]
        %v3087 = vld [vmem:[%s3083 + $0x18] sm:$0xff]
        %v3089 = vsel %vm1918, %v3033, 0
        %v3092 = vsel %vm1918, %v3036, 0
        %3094 = vmatpush.msra.mxu0 0.0
        %3095 = vmatpush.msra.mxu0 0.0
        %3096 = vmatpush.msra.mxu0 0.0
        %3097 = vmatpush.msra.mxu0 0.0
        %3098 = vmatpush.msra.mxu0 0.0
        %3099 = vmatpush.msra.mxu0 0.0
        %3100 = vmatpush.msra.mxu0 0.0
        %3101 = vmatpush.msra.mxu0 0.0
        %3102 = vmatpush.msra.mxu0 0.0
        %3103 = vmatpush.msra.mxu0 0.0
        %3104 = vmatpush.msra.mxu0 0.0
        %3105 = vmatpush.msra.mxu0 0.0
        %3106 = vmatpush.msra.mxu0 %v3087
        %3107 = vmatpush.msra.mxu0 %v3086
        %3108 = vmatpush.msra.mxu0 %v3085
        %3109 = vmatpush.msra.mxu0 %v3084
        %3110 = vmatmul.f32.gmra.mxu0 %v3089
        %v3111 = vpop.f32.mrf.mxu0
        %v3112 = vadd.f32 0.0, %v3111
        %3113 = vmatmul.f32.gmra.mxu0 %v3092
        %v3114 = vpop.f32.mrf.mxu0
        %v3115 = vadd.f32 0.0, %v3114
        %3116 = vdwg.mxu0
        %v3117 = vadd.f32 %v3081, %v3112
        %v3118 = vadd.f32 %v3082, %v3115
        %s3119 = scalar_lea.vmem [#allocation25], 64
        %v3120 = vld [vmem:[%s3119] sm:$0xff]
        %v3121 = vld [vmem:[%s3119 + $0x8] sm:$0xff]
        %v3122 = vld [vmem:[%s3119 + $0x10] sm:$0xff]
        %v3123 = vld [vmem:[%s3119 + $0x18] sm:$0xff]
        %v3125 = vsel %vm1918, %v3039, 0
        %v3128 = vsel %vm1918, %v3042, 0
        %3130 = vmatpush.msra.mxu0 0.0
        %3131 = vmatpush.msra.mxu0 0.0
        %3132 = vmatpush.msra.mxu0 0.0
        %3133 = vmatpush.msra.mxu0 0.0
        %3134 = vmatpush.msra.mxu0 0.0
        %3135 = vmatpush.msra.mxu0 0.0
        %3136 = vmatpush.msra.mxu0 0.0
        %3137 = vmatpush.msra.mxu0 0.0
        %3138 = vmatpush.msra.mxu0 0.0
        %3139 = vmatpush.msra.mxu0 0.0
        %3140 = vmatpush.msra.mxu0 0.0
        %3141 = vmatpush.msra.mxu0 0.0
        %3142 = vmatpush.msra.mxu0 %v3123
        %3143 = vmatpush.msra.mxu0 %v3122
        %3144 = vmatpush.msra.mxu0 %v3121
        %3145 = vmatpush.msra.mxu0 %v3120
        %3146 = vmatmul.f32.gmra.mxu0 %v3125
        %v3147 = vpop.f32.mrf.mxu0
        %v3148 = vadd.f32 0.0, %v3147
        %3149 = vmatmul.f32.gmra.mxu0 %v3128
        %v3150 = vpop.f32.mrf.mxu0
        %v3151 = vadd.f32 0.0, %v3150
        %3152 = vdwg.mxu0
        %v3153 = vadd.f32 %v3117, %v3148
        %v3154 = vadd.f32 %v3118, %v3151
        %vm3155 = vcmp.ge.f32.partialorder %v2956, 0.0
        %vm3156 = vcmp.ge.f32.partialorder %v2957, 0.0
        %v3157 = vmul.f32 %v2956, 0.01
        %v3158 = vmul.f32 %v2957, 0.01
        %v3159 = vsel %vm3155, %v2956, %v3157
        %v3160 = vsel %vm3156, %v2957, %v3158
        %vm3161 = vcmp.ge.f32.partialorder %v3153, 0.0
        %vm3162 = vcmp.ge.f32.partialorder %v3154, 0.0
        %v3163 = vmul.f32 %v3153, 0.01
        %v3164 = vmul.f32 %v3154, 0.01
        %v3165 = vsel %vm3161, %v3153, %v3163
        %v3166 = vsel %vm3162, %v3154, %v3164
        %v3167 = vld [vmem:[%s23] sm:$0x3]
        %v3168 = vld [vmem:[%s24] sm:$0x3]
        %v3169 = vsel %vm1918, %v3159, 0.0
        %v3170 = vsel %vm1918, %v3160, 0.0
        %v3171 = vadd.f32 %v3169, %v3170
        %v3172 = vrot.slane %v3171, 4
        %v3173 = vadd.f32 %v3171, %v3172
        %v3174 = vrot.slane %v3173, 2
        %v3175 = vadd.f32 %v3173, %v3174
        %v3176 = vrot.slane %v3175, 1
        %v3177 = vadd.f32 %v3175, %v3176
        %v3178 = vmul.f32 %v3177, %v2537
        %v3179 = vmul.f32 %v3178, %v3167
        %vm3180 = vcmask 254976
        %v3181 = vsel %vm3180, %v3179, 0.0
        %3182 = vadd.xlane.f32.xlu0 %v3181
        %v3183 = vpop.xlane.xlu0 %3182
        %v3184 = vmax.f32 %v3183, 0.0
        %v3185 = vmul.f32 %v3184, %v3168
        %vm3186 = vcmask 1024
        %v3187 = vsel %vm3186, %v3185, 0.0
        %v3188 = vrot.slane %v3187, 4
        %v3189 = vadd.f32 %v3187, %v3188
        %v3190 = vrot.slane %v3189, 2
        %v3191 = vadd.f32 %v3189, %v3190
        %v3192 = vrot.slane %v3191, 1
        %v3193 = vadd.f32 %v3191, %v3192
        %v3194 = vxor.u32 %v3193, 2147483648
        %v3195 = vmul.f32 %v3194, 1.442695
        %v3196 = vpow.pop %v3195
        %v3197 = vadd.f32 %v3196, 1.0
        %v3198 = vrcp.pop %v3197
        %v3199 = vmul.f32 %v3197, %v3198
        %v3200 = vsub.f32 1.0, %v3199
        %v3201 = vmul.f32 %v3198, %v3200
        %v3202 = vadd.f32 %v3198, %v3201
        %vm3203 = vweird.f32 %v3197
        %vm3204 = vweird.f32 %v3198
        %vm3205 = vmor %vm3203, %vm3204
        %v3206 = vsel %vm3205, %v3198, %v3202
        %v3207 = vand.u32 2147483647, %v3197
        %vm3208 = vcmp.eq.f32.partialorder %v3207, 8.507059e+37
        %v3209 = vand.u32 %v3197, 2147483648
        %v3210 = vor.u32 1.1754944e-38, %v3209
        %v3211 = vsel %vm3208, %v3210, %v3206
        %v3212 = vmul.f32 1.0, %v3211
        %3214 = vset.pattern.permute.xlu0 0
        %3215 = vperm.xlu0 %3214, %v3212
        %v3216 = vpop.permute.xlu0 %3215
        %v3218 = vmul.f32 %v3159, %v3216
        %v3219 = vmul.f32 %v3160, %v3216
        %v3220 = vld [vmem:[%s25] sm:$0x3]
        %v3221 = vld [vmem:[%s26] sm:$0x3]
        %v3222 = vsel %vm1918, %v3165, 0.0
        %v3223 = vsel %vm1918, %v3166, 0.0
        %v3224 = vadd.f32 %v3222, %v3223
        %v3225 = vrot.slane %v3224, 4
        %v3226 = vadd.f32 %v3224, %v3225
        %v3227 = vrot.slane %v3226, 2
        %v3228 = vadd.f32 %v3226, %v3227
        %v3229 = vrot.slane %v3228, 1
        %v3230 = vadd.f32 %v3228, %v3229
        %v3231 = vmul.f32 %v3230, %v2537
        %v3232 = vmul.f32 %v3231, %v3220
        %v3233 = vsel %vm3180, %v3232, 0.0
        %3234 = vadd.xlane.f32.xlu0 %v3233
        %v3235 = vpop.xlane.xlu0 %3234
        %v3236 = vmax.f32 %v3235, 0.0
        %v3237 = vmul.f32 %v3236, %v3221
        %v3238 = vsel %vm3186, %v3237, 0.0
        %v3239 = vrot.slane %v3238, 4
        %v3240 = vadd.f32 %v3238, %v3239
        %v3241 = vrot.slane %v3240, 2
        %v3242 = vadd.f32 %v3240, %v3241
        %v3243 = vrot.slane %v3242, 1
        %v3244 = vadd.f32 %v3242, %v3243
        %v3245 = vxor.u32 %v3244, 2147483648
        %v3246 = vmul.f32 %v3245, 1.442695
        %v3247 = vpow.pop %v3246
        %v3248 = vadd.f32 %v3247, 1.0
        %v3249 = vrcp.pop %v3248
        %v3250 = vmul.f32 %v3248, %v3249
        %v3251 = vsub.f32 1.0, %v3250
        %v3252 = vmul.f32 %v3249, %v3251
        %v3253 = vadd.f32 %v3249, %v3252
        %vm3254 = vweird.f32 %v3248
        %vm3255 = vweird.f32 %v3249
        %vm3256 = vmor %vm3254, %vm3255
        %v3257 = vsel %vm3256, %v3249, %v3253
        %v3258 = vand.u32 2147483647, %v3248
        %vm3259 = vcmp.eq.f32.partialorder %v3258, 8.507059e+37
        %v3260 = vand.u32 %v3248, 2147483648
        %v3261 = vor.u32 1.1754944e-38, %v3260
        %v3262 = vsel %vm3259, %v3261, %v3257
        %v3263 = vmul.f32 1.0, %v3262
        %3265 = vset.pattern.permute.xlu0 0
        %3266 = vperm.xlu0 %3265, %v3263
        %v3267 = vpop.permute.xlu0 %3266
        %v3269 = vmul.f32 %v3165, %v3267
        %v3270 = vmul.f32 %v3166, %v3267
        %v3271 = vadd.f32 %v3218, %v3269
        %v3272 = vadd.f32 %v3219, %v3270
        %v3273 = vtanh.pop %v3271
        %v3274 = vtanh.pop %v3272
        %3275 = vrot.lane.b32.xlu0 %v1084, 32
        %v3276 = vpop.permute.xlu0 %3275
        %3277 = vrot.lane.b32.xlu0 %v1085, 32
        %v3278 = vpop.permute.xlu0 %3277
        %v3281 = vmul.f32 %v2655, %v3276
        %v3282 = vmul.f32 %v2670, %v3278
        %v3283 = vsub.f32 1.0, %v2655
        %v3284 = vsub.f32 1.0, %v2670
        %3287 = vrot.lane.b32.xlu0 %v3273, 32
        %v3288 = vpop.permute.xlu0 %3287
        %3289 = vrot.lane.b32.xlu0 %v3274, 32
        %v3290 = vpop.permute.xlu0 %3289
        %v3293 = vmul.f32 %v3283, %v3288
        %v3294 = vmul.f32 %v3284, %v3290
        %v3295 = vadd.f32 %v3281, %v3293
        %v3296 = vadd.f32 %v3282, %v3294
        %3299 = vrot.lane.b32.xlu0 %v3295, 96
        %v3300 = vpop.permute.xlu0 %3299
        %3301 = vrot.lane.b32.xlu0 %v3296, 96
        %v3302 = vpop.permute.xlu0 %3301
        %3305 = vst.msk [vmem:[%s1076] sm:$0xff] %vm1918, %v3300
        %3306 = vst.msk [vmem:[%s1076 + $0x8] sm:$0xff] %vm1918, %v3302
        %s3307 = sand.u32 %s636, 1
        %s3308 = scalar_lea.sflag [#allocation4], %s3307
        %s3309 = sand.u32 %s636, 1
        %s3310 = smul.addr %s3309, 16
        %s3311 = scalar_lea.vmem [#allocation26], %s3310
        // Predicated region
        $region189: #{tpu_custom_call.1} parent=127 // pred_check
          %p3312 = pneg %p646
        $region190: #{tpu_custom_call.1} parent=127 // pred_check_branch
          %3314 = sbr.rel (%p3312) target = $region192
        $region191: #{tpu_custom_call.1} parent=127 // pred_region
          %3316 = vsyncadd %s3308, 0
          %s3317 = smul.addr %s51, 2
          %s3318 = smul.addr %s3317, 8
          %s3319 = scalar_lea.hbm %s27, %s3318
          %s3320 = sshll.u32 %s3311, 4
          %s3321 = int_to_ptr.vmem [resolvable:$true] %s3320
          %s3322 = sshll.u32 %s3319, 4
          %s3323 = int_to_ptr.hbm [resolvable:$true] %s3322
          %3328 = dma.vmem_to_hbm [thread:$0]  %s3321, 256, %s3323, %s3308, 128, 128, 8
        $region192: #{tpu_custom_call.1} parent=127 // pred_fallthru
          _
      $region128: #{tpu_custom_call.1} parent=5 // pred_fallthru
        _
      %p3329 = scmp.le.s32.totalorder 2, %s46
      // Predicated region
      $region193: #{tpu_custom_call.1} parent=5 // pred_check
        %p3330 = pneg %p3329
      $region194: #{tpu_custom_call.1} parent=5 // pred_check_branch
        %3332 = sbr.rel (%p3330) target = $region196
      $region195: #{tpu_custom_call.1} parent=5 // pred_region
        %s3333 = ssub.s32 %s46, 2
        // Predicated region
        $region197: #{tpu_custom_call.1} parent=195 // pred_check
          %p3334 = pneg %p652
        $region198: #{tpu_custom_call.1} parent=195 // pred_check_branch
          %3336 = sbr.rel (%p3334) target = $region200
        $region199: #{tpu_custom_call.1} parent=195 // pred_region
          %s3337 = sand.u32 %s637, 1
          %s3338 = scalar_lea.sflag [#allocation4], %s3337
          %s3339 = sand.u32 %s637, 1
          %s3340 = smul.addr %s3339, 16
          %s3341 = scalar_lea.vmem [#allocation26], %s3340
          %3343 = dma.done %s3338, 256
        $region200: #{tpu_custom_call.1} parent=195 // pred_fallthru
          _
      $region196: #{tpu_custom_call.1} parent=5 // pred_fallthru
        _
    $region6: #{tpu_custom_call.1} parent=1 // loop_footer
      %s50 = sadd.s32 1, %s46
    $region7: #{tpu_custom_call.1} parent=1 // loop_footer_branch
      %45 = sbr.rel target = $region3
    $region8: #{tpu_custom_call.1} parent=1 // loop_exit
      _
    %3344 = vsyncpa [#allocation3], 1
    %s3345 = scalar_lea.sflag [#allocation3], 1
    %3346 = vsyncpa %s3345, 1
    %3347 = vsyncpa [#allocation6], 1
    %3348 = vsyncpa [#allocation9], 1
    %3349 = vsyncpa [#allocation12], 1
    %3350 = vsyncpa [#allocation15], 1
    %3351 = vsyncpa [#allocation18], 1
    %3352 = vsyncpa [#allocation21], 1
    %3353 = vsyncpa [#allocation24], 1
    %3354 = vsyncpa [#allocation4], 1
    %s3355 = scalar_lea.sflag [#allocation4], 1
    %3356 = vsyncpa %s3355, 1

</llo_original>
